<compile_context>
chip_gen: v6e
topology: v6e:2x2x1
jax: 0.10.0
libtpu: 0.0.40
codegen_flags: <defaults>
</compile_context>

<pallas_src>
import numpy as np
import jax
import jax.numpy as jnp
from jax.experimental import pallas as pl
from jax.experimental.pallas import tpu as pltpu

# ----------------------- model configuration (small, T5-like) -----------------------
B = 2            # batch
TQ = 8           # decoder seq len
TK = 16          # encoder seq len
D = 32           # d_model
H = 4            # num heads
DK = D // H      # d_kv per head (8)
DFF = 64         # feed-forward dim
VOCAB = 64
N_LAYERS = 2
PAD_IDX = 0
REL_BUCKETS = 32
REL_MAX_DIST = 128
EPS = 1e-6
NEG_INF = -1e9

BT = B * TQ      # batch-flattened decoder tokens (16)
BTK = B * TK     # batch-flattened encoder tokens (32)
MM_DTYPE = jnp.bfloat16   # MXU operand dtype (accumulate in f32)


# ----------------------------- in-kernel helpers ------------------------------------
def _rms_norm(x, w):
    # T5 LayerNorm: no mean subtraction, no bias. Keep in f32.
    var = jnp.mean(x * x, axis=-1, keepdims=True)
    return x * jax.lax.rsqrt(var + EPS) * w


def _softmax(s):
    m = jnp.max(s, axis=-1, keepdims=True)
    e = jnp.exp(s - m)
    denom = jnp.sum(e, axis=-1, keepdims=True)
    return e * pl.reciprocal(denom, approx=True)


def _split_heads(x, off=0):
    """(N, >= off + H*DK) -> (H, N, DK): static lane slices + leading-axis stack."""
    return jnp.stack([x[:, off + h * DK: off + (h + 1) * DK] for h in range(H)], axis=0)


def _merge_heads(o3):
    """(H, N, DK) -> (N, H*DK): lane-axis concat of heads (feeds the (D,D) Wo GEMM)."""
    return jnp.concatenate([o3[h] for h in range(H)], axis=1)


def _attention(q3, k3, v3, bias):
    """q3:(H,Nq,DK) k3,v3:(H,Nk,DK) bias:(H,Nq,Nk) or (Nq,Nk). T5: no 1/sqrt(dk)."""
    s = jnp.einsum('hqd,hkd->hqk', q3.astype(MM_DTYPE), k3.astype(MM_DTYPE),
                   preferred_element_type=jnp.float32)
    p = _softmax(s + bias)
    return jnp.einsum('hqk,hkd->hqd', p.astype(MM_DTYPE), v3.astype(MM_DTYPE),
                      preferred_element_type=jnp.float32)


# --------------------------- fused decoder-stack kernel ------------------------------
def t5_decoder_stack_kernel(
    h_ref, enc_ref, sb_ref, cb_ref,
    ln1_ref, wqkv_ref, wo_ref,
    ln2_ref, cq_ref, ckv_ref, co_ref,
    ln3_ref, wi_ref, wof_ref,
    final_ln_ref,
    out_ref,
):
    h = h_ref[...]                                  # (BT, D) f32
    # ---- layer-invariant loads hoisted out of the layer loop ----
    enc_bf = enc_ref[...].astype(MM_DTYPE)          # (BTK, D) bf16
    self_bias = sb_ref[...]                         # (H, BT, BT) f32 (block-diag over batch)
    cross_bias = cb_ref[...]                        # (BT, BTK) f32  (block-diag over batch)

    for l in range(N_LAYERS):                       # static, unrolled (N_LAYERS=2)
        # ---------------- self attention ----------------
        hn = _rms_norm(h, ln1_ref[l])               # (BT, D)
        qkv = jnp.dot(hn.astype(MM_DTYPE), wqkv_ref[l],
                      preferred_element_type=jnp.float32)         # (BT, 3D) one wide GEMM
        o3 = _attention(_split_heads(qkv, 0),
                        _split_heads(qkv, D),
                        _split_heads(qkv, 2 * D),
                        self_bias)                                # (H, BT, DK)
        h = h + jnp.dot(_merge_heads(o3).astype(MM_DTYPE), wo_ref[l],
                        preferred_element_type=jnp.float32)       # single (D,D) Wo GEMM

        # ---------------- cross attention ----------------
        hn = _rms_norm(h, ln2_ref[l])
        q = jnp.dot(hn.astype(MM_DTYPE), cq_ref[l],
                    preferred_element_type=jnp.float32)           # (BT, D)
        kv = jnp.dot(enc_bf, ckv_ref[l],
                     preferred_element_type=jnp.float32)          # (BTK, 2D) one wide GEMM
        o3 = _attention(_split_heads(q),
                        _split_heads(kv, 0),
                        _split_heads(kv, D),
                        cross_bias)                               # (H, BT, DK)
        h = h + jnp.dot(_merge_heads(o3).astype(MM_DTYPE), co_ref[l],
                        preferred_element_type=jnp.float32)

        # ---------------- feed-forward (DenseReluDense) ----------------
        hn = _rms_norm(h, ln3_ref[l])
        ff = jnp.maximum(
            jnp.dot(hn.astype(MM_DTYPE), wi_ref[l],
                    preferred_element_type=jnp.float32), 0.0)
        h = h + jnp.dot(ff.astype(MM_DTYPE), wof_ref[l],
                        preferred_element_type=jnp.float32)

    # ---------------- final RMSNorm ----------------
    out_ref[...] = _rms_norm(h, final_ln_ref[...])


def t5_decoder_stack(h, enc, self_bias, cross_bias, packed):
    """Run the whole decoder stack (all layers + final norm) in one pallas_call."""
    h_flat = h.reshape(BT, D)
    enc_flat = enc.reshape(BTK, D)
    vmem = pl.BlockSpec(memory_space=pltpu.MemorySpace.VMEM)
    weights = (packed["ln1"], packed["wqkv"], packed["wo"],
               packed["ln2"], packed["cq"], packed["ckv"], packed["co"],
               packed["ln3"], packed["wi"], packed["wof"], packed["final_ln"])

    out = pl.pallas_call(
        t5_decoder_stack_kernel,
        out_shape=jax.ShapeDtypeStruct((BT, D), jnp.float32),
        in_specs=[vmem] * (4 + len(weights)),
        out_specs=vmem,
    )(h_flat, enc_flat, self_bias, cross_bias, *weights)
    return out.reshape(B, TQ, D)


# ----------------------------- JAX glue: masks / rel-pos bias ------------------------
def _relative_position_bucket(relative_position):
    # T5 decoder: bidirectional=False
    relative_position = -jnp.minimum(relative_position, 0)   # >= 0
    max_exact = REL_BUCKETS // 2
    is_small = relative_position < max_exact
    rp = jnp.maximum(relative_position.astype(jnp.float32), 1.0)
    rel_if_large = max_exact + (
        jnp.log(rp / max_exact) / np.log(REL_MAX_DIST / max_exact) * (REL_BUCKETS - max_exact)
    ).astype(jnp.int32)
    rel_if_large = jnp.minimum(rel_if_large, REL_BUCKETS - 1)
    return jnp.where(is_small, relative_position, rel_if_large)


def _compute_self_bias(dec_mask, rel_bias_table):
    """dec_mask:(B,TQ) bool -> (H, BT, BT) additive bias, block-diagonal over batch.

    Within a batch block: rel-pos bias + causal + pad mask (same as per-batch HF math);
    cross-batch entries get -1e9 so the batch-flattened attention never mixes rows.
    """
    pos = jnp.arange(BT)
    qb, qp = pos // TQ, pos % TQ                       # batch id / in-sequence position
    rel = qp[None, :] - qp[:, None]                    # (BT, BT) mem - ctx within-seq
    buckets = _relative_position_bucket(rel)           # (BT, BT)
    bias = jnp.transpose(rel_bias_table[buckets], (2, 0, 1))   # (H, BT, BT)
    same_batch = qb[:, None] == qb[None, :]
    causal = qp[None, :] <= qp[:, None]
    keep = same_batch & causal & dec_mask.reshape(-1)[None, :]
    add = jnp.where(keep, 0.0, NEG_INF).astype(jnp.float32)    # (BT, BT)
    return bias + add[None, :, :]                              # (H, BT, BT)


def _compute_cross_bias(enc_mask):
    """enc_mask:(B,TK) -> (BT, BTK) additive bias, block-diagonal over batch."""
    qb = jnp.arange(BT) // TQ
    kb = jnp.arange(BTK) // TK
    same_batch = qb[:, None] == kb[None, :]
    keep = same_batch & enc_mask.reshape(-1)[None, :].astype(bool)
    return jnp.where(keep, 0.0, NEG_INF).astype(jnp.float32)


# ----------------------------- parameters (deterministic) ----------------------------
def init_params(key):
    ks = iter(jax.random.split(key, 64))
    scale = 0.02

    def w(shape):
        return (scale * jax.random.normal(next(ks), shape)).astype(jnp.float32)

    params = {
        "embed": w((VOCAB, D)),
        "rel_bias": w((REL_BUCKETS, H)),
        "final_ln": jnp.ones((1, D), jnp.float32),
        "layers": [],
    }
    for _ in range(N_LAYERS):
        params["layers"].append({
            "ln1": jnp.ones((1, D), jnp.float32),
            "wq": w((D, D)), "wk": w((D, D)), "wv": w((D, D)), "wo": w((D, D)),
            "ln2": jnp.ones((1, D), jnp.float32),
            "cq": w((D, D)), "ck": w((D, D)), "cv": w((D, D)), "co": w((D, D)),
            "ln3": jnp.ones((1, D), jnp.float32),
            "wi": w((D, DFF)), "wof": w((DFF, D)),
        })
    return params


def pack_params(params):
    """One-time (parameter-load-time) packing: stack per-layer weights along a leading
    N_LAYERS axis, fuse Q|K|V (and cross K|V) along the lane axis, and pre-cast all
    matmul operands to bf16.  Norm weights / embedding / rel-bias table stay f32."""
    layers = params["layers"]

    def stack(fn):
        return jnp.stack([fn(lw) for lw in layers], axis=0)

    return {
        "embed": params["embed"],
        "rel_bias": params["rel_bias"],
        "final_ln": params["final_ln"],
        "ln1": stack(lambda lw: lw["ln1"]),
        "wqkv": stack(lambda lw: jnp.concatenate(
            [lw["wq"], lw["wk"], lw["wv"]], axis=1).astype(MM_DTYPE)),      # (D, 3D)
        "wo": stack(lambda lw: lw["wo"].astype(MM_DTYPE)),                  # (D, D)
        "ln2": stack(lambda lw: lw["ln2"]),
        "cq": stack(lambda lw: lw["cq"].astype(MM_DTYPE)),                  # (D, D)
        "ckv": stack(lambda lw: jnp.concatenate(
            [lw["ck"], lw["cv"]], axis=1).astype(MM_DTYPE)),                # (D, 2D)
        "co": stack(lambda lw: lw["co"].astype(MM_DTYPE)),                  # (D, D)
        "ln3": stack(lambda lw: lw["ln3"]),
        "wi": stack(lambda lw: lw["wi"].astype(MM_DTYPE)),                  # (D, DFF)
        "wof": stack(lambda lw: lw["wof"].astype(MM_DTYPE)),                # (DFF, D)
    }


# ----------------------------- module forward ----------------------------------------
def t5_context_knowledge_decoder_forward(packed, input_ids, encoder_state, incr_state=None):
    """Mirrors T5ContextKnowledgeDecoder.forward (eval mode, no incremental decoding)."""
    encoder_output, encoder_mask, _ = encoder_state

    # mask = input != padding_idx ; mask[:, 0] = True
    dec_mask = (input_ids != PAD_IDX)
    dec_mask = dec_mask.at[:, 0].set(True)

    # Token embedding (gather is glue, not a Pallas kernel).
    h = packed["embed"][input_ids].astype(jnp.float32)            # (B, TQ, D)

    self_bias = _compute_self_bias(dec_mask, packed["rel_bias"])  # (H, BT, BT)
    cross_bias = _compute_cross_bias(encoder_mask)                # (BT, BTK)

    out = t5_decoder_stack(h, encoder_output.astype(jnp.float32),
                           self_bias, cross_bias, packed)
    # TODO(synk): incremental decoding state (incr_state) / model-parallel placement are
    # no-ops here; dropout omitted (eval mode).
    return out, incr_state


# ----------------------------- main ---------------------------------------------------
if __name__ == "__main__":
    key = jax.random.PRNGKey(0)
    k_par, k_ids, k_enc = jax.random.split(key, 3)

    params = init_params(k_par)
    packed = pack_params(params)        # done ONCE, outside the forward path

    # Decoder token ids, with some trailing padding in the second row.
    input_ids = jax.random.randint(k_ids, (B, TQ), 1, VOCAB, dtype=jnp.int32)
    input_ids = input_ids.at[1, TQ - 3:].set(PAD_IDX)

    # Encoder state: (encoder_output, encoder_mask, _)
    encoder_output = jax.random.normal(k_enc, (B, TK, D), dtype=jnp.float32)
    encoder_mask = jnp.ones((B, TK), dtype=jnp.int32).at[1, TK - 4:].set(0)
    encoder_state = (encoder_output, encoder_mask, None)

    out, new_incr_state = t5_context_knowledge_decoder_forward(
        packed, input_ids, encoder_state, incr_state=None
    )
    out = jax.block_until_ready(out)
    assert out.shape == (B, TQ, D) and out.dtype == jnp.float32
    assert bool(jnp.all(jnp.isfinite(out)))
    print("KERNEL_OK")
</pallas_src>

<mosaic_0001>
module attributes {stable_mosaic.version = 11 : i64} {
  func.func @t5_decoder_stack_kernel(%arg0: memref<16x32xf32, #tpu.memory_space<vmem>>, %arg1: memref<32x32xf32, #tpu.memory_space<vmem>>, %arg2: memref<4x16x16xf32, #tpu.memory_space<vmem>>, %arg3: memref<16x32xf32, #tpu.memory_space<vmem>>, %arg4: memref<2x1x32xf32, #tpu.memory_space<vmem>>, %arg5: memref<2x32x96xbf16, #tpu.memory_space<vmem>>, %arg6: memref<2x32x32xbf16, #tpu.memory_space<vmem>>, %arg7: memref<2x1x32xf32, #tpu.memory_space<vmem>>, %arg8: memref<2x32x32xbf16, #tpu.memory_space<vmem>>, %arg9: memref<2x32x64xbf16, #tpu.memory_space<vmem>>, %arg10: memref<2x32x32xbf16, #tpu.memory_space<vmem>>, %arg11: memref<2x1x32xf32, #tpu.memory_space<vmem>>, %arg12: memref<2x32x64xbf16, #tpu.memory_space<vmem>>, %arg13: memref<2x64x32xbf16, #tpu.memory_space<vmem>>, %arg14: memref<1x32xf32, #tpu.memory_space<vmem>>, %arg15: memref<16x32xf32, #tpu.memory_space<vmem>>) attributes {dimension_semantics = [], scalar_prefetch = 0 : i64, scratch_operands = 0 : i64, tpu.core_type = #tpu.core_type<tc>} {
    %c0 = arith.constant 0 : index
    %c0_0 = arith.constant 0 : index
    %0 = vector.load %arg0[%c0, %c0_0] : memref<16x32xf32, #tpu.memory_space<vmem>>, vector<16x32xf32>
    %c0_1 = arith.constant 0 : index
    %c0_2 = arith.constant 0 : index
    %1 = vector.load %arg1[%c0_1, %c0_2] : memref<32x32xf32, #tpu.memory_space<vmem>>, vector<32x32xf32>
    %2 = arith.truncf %1 : vector<32x32xf32> to vector<32x32xbf16>
    %c0_3 = arith.constant 0 : index
    %c0_4 = arith.constant 0 : index
    %c0_5 = arith.constant 0 : index
    %3 = vector.load %arg2[%c0_3, %c0_4, %c0_5] : memref<4x16x16xf32, #tpu.memory_space<vmem>>, vector<4x16x16xf32>
    %c0_6 = arith.constant 0 : index
    %c0_7 = arith.constant 0 : index
    %4 = vector.load %arg3[%c0_6, %c0_7] : memref<16x32xf32, #tpu.memory_space<vmem>>, vector<16x32xf32>
    %c0_8 = arith.constant 0 : index
    %c0_9 = arith.constant 0 : index
    %c0_10 = arith.constant 0 : index
    %5 = vector.load %arg4[%c0_8, %c0_9, %c0_10] : memref<2x1x32xf32, #tpu.memory_space<vmem>>, vector<1x1x32xf32>
    %6 = vector.shape_cast %5 : vector<1x1x32xf32> to vector<1x32xf32>
    %7 = arith.mulf %0, %0 : vector<16x32xf32>
    %cst = arith.constant dense<0.000000e+00> : vector<16xf32>
    %8 = vector.multi_reduction <add>, %7, %cst [1] : vector<16x32xf32> to vector<16xf32>
    %9 = vector.shape_cast %8 : vector<16xf32> to vector<16x1xf32>
    %cst_11 = arith.constant 3.200000e+01 : f32
    %10 = vector.broadcast %cst_11 : f32 to vector<16x1xf32>
    %11 = arith.divf %9, %10 : vector<16x1xf32>
    %cst_12 = arith.constant 9.99999997E-7 : f32
    %12 = vector.broadcast %cst_12 : f32 to vector<16x1xf32>
    %13 = arith.addf %11, %12 : vector<16x1xf32>
    %14 = math.rsqrt %13 : vector<16x1xf32>
    %15 = vector.broadcast %14 : vector<16x1xf32> to vector<16x32xf32>
    %16 = arith.mulf %0, %15 : vector<16x32xf32>
    %17 = vector.broadcast %6 : vector<1x32xf32> to vector<16x32xf32>
    %18 = arith.mulf %16, %17 : vector<16x32xf32>
    %19 = arith.truncf %18 : vector<16x32xf32> to vector<16x32xbf16>
    %c0_13 = arith.constant 0 : index
    %c0_14 = arith.constant 0 : index
    %c0_15 = arith.constant 0 : index
    %20 = vector.load %arg5[%c0_13, %c0_14, %c0_15] : memref<2x32x96xbf16, #tpu.memory_space<vmem>>, vector<1x32x96xbf16>
    %21 = vector.shape_cast %20 : vector<1x32x96xbf16> to vector<32x96xbf16>
    %cst_16 = arith.constant dense<0.000000e+00> : vector<16x96xf32>
    %22 = tpu.matmul %19, %21, %cst_16 {dimension_numbers = #tpu.dot_dimension_numbers<[1], [0], [0], [1], [0, 0, 1, 1], [], []>} : vector<16x32xbf16>, vector<32x96xbf16>, vector<16x96xf32> -> vector<16x96xf32>
    %23 = vector.extract_strided_slice %22 {offsets = [0, 0], sizes = [16, 8], strides = [1, 1]} : vector<16x96xf32> to vector<16x8xf32>
    %24 = vector.extract_strided_slice %22 {offsets = [0, 8], sizes = [16, 8], strides = [1, 1]} : vector<16x96xf32> to vector<16x8xf32>
    %25 = vector.extract_strided_slice %22 {offsets = [0, 16], sizes = [16, 8], strides = [1, 1]} : vector<16x96xf32> to vector<16x8xf32>
    %26 = vector.extract_strided_slice %22 {offsets = [0, 24], sizes = [16, 8], strides = [1, 1]} : vector<16x96xf32> to vector<16x8xf32>
    %27 = vector.shape_cast %23 : vector<16x8xf32> to vector<1x16x8xf32>
    %28 = vector.shape_cast %24 : vector<16x8xf32> to vector<1x16x8xf32>
    %29 = vector.shape_cast %25 : vector<16x8xf32> to vector<1x16x8xf32>
    %30 = vector.shape_cast %26 : vector<16x8xf32> to vector<1x16x8xf32>
    %31 = tpu.concatenate %27, %28, %29, %30 in 0 : vector<1x16x8xf32>, vector<1x16x8xf32>, vector<1x16x8xf32>, vector<1x16x8xf32> -> vector<4x16x8xf32>
    %32 = vector.extract_strided_slice %22 {offsets = [0, 32], sizes = [16, 8], strides = [1, 1]} : vector<16x96xf32> to vector<16x8xf32>
    %33 = vector.extract_strided_slice %22 {offsets = [0, 40], sizes = [16, 8], strides = [1, 1]} : vector<16x96xf32> to vector<16x8xf32>
    %34 = vector.extract_strided_slice %22 {offsets = [0, 48], sizes = [16, 8], strides = [1, 1]} : vector<16x96xf32> to vector<16x8xf32>
    %35 = vector.extract_strided_slice %22 {offsets = [0, 56], sizes = [16, 8], strides = [1, 1]} : vector<16x96xf32> to vector<16x8xf32>
    %36 = vector.shape_cast %32 : vector<16x8xf32> to vector<1x16x8xf32>
    %37 = vector.shape_cast %33 : vector<16x8xf32> to vector<1x16x8xf32>
    %38 = vector.shape_cast %34 : vector<16x8xf32> to vector<1x16x8xf32>
    %39 = vector.shape_cast %35 : vector<16x8xf32> to vector<1x16x8xf32>
    %40 = tpu.concatenate %36, %37, %38, %39 in 0 : vector<1x16x8xf32>, vector<1x16x8xf32>, vector<1x16x8xf32>, vector<1x16x8xf32> -> vector<4x16x8xf32>
    %41 = vector.extract_strided_slice %22 {offsets = [0, 64], sizes = [16, 8], strides = [1, 1]} : vector<16x96xf32> to vector<16x8xf32>
    %42 = vector.extract_strided_slice %22 {offsets = [0, 72], sizes = [16, 8], strides = [1, 1]} : vector<16x96xf32> to vector<16x8xf32>
    %43 = vector.extract_strided_slice %22 {offsets = [0, 80], sizes = [16, 8], strides = [1, 1]} : vector<16x96xf32> to vector<16x8xf32>
    %44 = vector.extract_strided_slice %22 {offsets = [0, 88], sizes = [16, 8], strides = [1, 1]} : vector<16x96xf32> to vector<16x8xf32>
    %45 = vector.shape_cast %41 : vector<16x8xf32> to vector<1x16x8xf32>
    %46 = vector.shape_cast %42 : vector<16x8xf32> to vector<1x16x8xf32>
    %47 = vector.shape_cast %43 : vector<16x8xf32> to vector<1x16x8xf32>
    %48 = vector.shape_cast %44 : vector<16x8xf32> to vector<1x16x8xf32>
    %49 = tpu.concatenate %45, %46, %47, %48 in 0 : vector<1x16x8xf32>, vector<1x16x8xf32>, vector<1x16x8xf32>, vector<1x16x8xf32> -> vector<4x16x8xf32>
    %50 = arith.truncf %31 : vector<4x16x8xf32> to vector<4x16x8xbf16>
    %51 = arith.truncf %40 : vector<4x16x8xf32> to vector<4x16x8xbf16>
    "tpu.trace_start"() <{level = 10 : i32, message = "hqd,hkd->hqk"}> : () -> ()
    %cst_17 = arith.constant dense<0.000000e+00> : vector<4x16x16xf32>
    %52 = tpu.matmul %50, %51, %cst_17 {dimension_numbers = #tpu.dot_dimension_numbers<[2], [2], [1], [1], [0, 0, 0, 1, 1, 1], [0], [0]>} : vector<4x16x8xbf16>, vector<4x16x8xbf16>, vector<4x16x16xf32> -> vector<4x16x16xf32>
    "tpu.trace_stop"() : () -> ()
    %53 = arith.addf %52, %3 : vector<4x16x16xf32>
    %cst_18 = arith.constant dense<0xFF800000> : vector<4x16xf32>
    %54 = vector.multi_reduction <maximumf>, %53, %cst_18 [2] : vector<4x16x16xf32> to vector<4x16xf32>
    %55 = vector.shape_cast %54 : vector<4x16xf32> to vector<4x16x1xf32>
    %56 = vector.broadcast %55 : vector<4x16x1xf32> to vector<4x16x16xf32>
    %57 = arith.subf %53, %56 : vector<4x16x16xf32>
    %58 = math.exp %57 : vector<4x16x16xf32>
    %cst_19 = arith.constant dense<0.000000e+00> : vector<4x16xf32>
    %59 = vector.multi_reduction <add>, %58, %cst_19 [2] : vector<4x16x16xf32> to vector<4x16xf32>
    %60 = vector.shape_cast %59 : vector<4x16xf32> to vector<4x16x1xf32>
    %61 = tpu.reciprocal %60 {approx = true} : vector<4x16x1xf32> -> vector<4x16x1xf32>
    %62 = vector.broadcast %61 : vector<4x16x1xf32> to vector<4x16x16xf32>
    %63 = arith.mulf %58, %62 : vector<4x16x16xf32>
    %64 = arith.truncf %63 : vector<4x16x16xf32> to vector<4x16x16xbf16>
    %65 = arith.truncf %49 : vector<4x16x8xf32> to vector<4x16x8xbf16>
    "tpu.trace_start"() <{level = 10 : i32, message = "hqk,hkd->hqd"}> : () -> ()
    %cst_20 = arith.constant dense<0.000000e+00> : vector<4x16x8xf32>
    %66 = tpu.matmul %64, %65, %cst_20 {dimension_numbers = #tpu.dot_dimension_numbers<[2], [1], [1], [2], [0, 0, 0, 1, 1, 2], [0], [0]>} : vector<4x16x16xbf16>, vector<4x16x8xbf16>, vector<4x16x8xf32> -> vector<4x16x8xf32>
    "tpu.trace_stop"() : () -> ()
    %67 = vector.extract_strided_slice %66 {offsets = [0, 0, 0], sizes = [1, 16, 8], strides = [1, 1, 1]} : vector<4x16x8xf32> to vector<1x16x8xf32>
    %68 = vector.shape_cast %67 : vector<1x16x8xf32> to vector<16x8xf32>
    %69 = vector.extract_strided_slice %66 {offsets = [1, 0, 0], sizes = [1, 16, 8], strides = [1, 1, 1]} : vector<4x16x8xf32> to vector<1x16x8xf32>
    %70 = vector.shape_cast %69 : vector<1x16x8xf32> to vector<16x8xf32>
    %71 = vector.extract_strided_slice %66 {offsets = [2, 0, 0], sizes = [1, 16, 8], strides = [1, 1, 1]} : vector<4x16x8xf32> to vector<1x16x8xf32>
    %72 = vector.shape_cast %71 : vector<1x16x8xf32> to vector<16x8xf32>
    %73 = vector.extract_strided_slice %66 {offsets = [3, 0, 0], sizes = [1, 16, 8], strides = [1, 1, 1]} : vector<4x16x8xf32> to vector<1x16x8xf32>
    %74 = vector.shape_cast %73 : vector<1x16x8xf32> to vector<16x8xf32>
    %75 = tpu.concatenate %68, %70, %72, %74 in 1 : vector<16x8xf32>, vector<16x8xf32>, vector<16x8xf32>, vector<16x8xf32> -> vector<16x32xf32>
    %76 = arith.truncf %75 : vector<16x32xf32> to vector<16x32xbf16>
    %c0_21 = arith.constant 0 : index
    %c0_22 = arith.constant 0 : index
    %c0_23 = arith.constant 0 : index
    %77 = vector.load %arg6[%c0_21, %c0_22, %c0_23] : memref<2x32x32xbf16, #tpu.memory_space<vmem>>, vector<1x32x32xbf16>
    %78 = vector.shape_cast %77 : vector<1x32x32xbf16> to vector<32x32xbf16>
    %cst_24 = arith.constant dense<0.000000e+00> : vector<16x32xf32>
    %79 = tpu.matmul %76, %78, %cst_24 {dimension_numbers = #tpu.dot_dimension_numbers<[1], [0], [0], [1], [0, 0, 1, 1], [], []>} : vector<16x32xbf16>, vector<32x32xbf16>, vector<16x32xf32> -> vector<16x32xf32>
    %80 = arith.addf %0, %79 : vector<16x32xf32>
    %c0_25 = arith.constant 0 : index
    %c0_26 = arith.constant 0 : index
    %c0_27 = arith.constant 0 : index
    %81 = vector.load %arg7[%c0_25, %c0_26, %c0_27] : memref<2x1x32xf32, #tpu.memory_space<vmem>>, vector<1x1x32xf32>
    %82 = vector.shape_cast %81 : vector<1x1x32xf32> to vector<1x32xf32>
    %83 = arith.mulf %80, %80 : vector<16x32xf32>
    %cst_28 = arith.constant dense<0.000000e+00> : vector<16xf32>
    %84 = vector.multi_reduction <add>, %83, %cst_28 [1] : vector<16x32xf32> to vector<16xf32>
    %85 = vector.shape_cast %84 : vector<16xf32> to vector<16x1xf32>
    %cst_29 = arith.constant 3.200000e+01 : f32
    %86 = vector.broadcast %cst_29 : f32 to vector<16x1xf32>
    %87 = arith.divf %85, %86 : vector<16x1xf32>
    %cst_30 = arith.constant 9.99999997E-7 : f32
    %88 = vector.broadcast %cst_30 : f32 to vector<16x1xf32>
    %89 = arith.addf %87, %88 : vector<16x1xf32>
    %90 = math.rsqrt %89 : vector<16x1xf32>
    %91 = vector.broadcast %90 : vector<16x1xf32> to vector<16x32xf32>
    %92 = arith.mulf %80, %91 : vector<16x32xf32>
    %93 = vector.broadcast %82 : vector<1x32xf32> to vector<16x32xf32>
    %94 = arith.mulf %92, %93 : vector<16x32xf32>
    %95 = arith.truncf %94 : vector<16x32xf32> to vector<16x32xbf16>
    %c0_31 = arith.constant 0 : index
    %c0_32 = arith.constant 0 : index
    %c0_33 = arith.constant 0 : index
    %96 = vector.load %arg8[%c0_31, %c0_32, %c0_33] : memref<2x32x32xbf16, #tpu.memory_space<vmem>>, vector<1x32x32xbf16>
    %97 = vector.shape_cast %96 : vector<1x32x32xbf16> to vector<32x32xbf16>
    %cst_34 = arith.constant dense<0.000000e+00> : vector<16x32xf32>
    %98 = tpu.matmul %95, %97, %cst_34 {dimension_numbers = #tpu.dot_dimension_numbers<[1], [0], [0], [1], [0, 0, 1, 1], [], []>} : vector<16x32xbf16>, vector<32x32xbf16>, vector<16x32xf32> -> vector<16x32xf32>
    %c0_35 = arith.constant 0 : index
    %c0_36 = arith.constant 0 : index
    %c0_37 = arith.constant 0 : index
    %99 = vector.load %arg9[%c0_35, %c0_36, %c0_37] : memref<2x32x64xbf16, #tpu.memory_space<vmem>>, vector<1x32x64xbf16>
    %100 = vector.shape_cast %99 : vector<1x32x64xbf16> to vector<32x64xbf16>
    %cst_38 = arith.constant dense<0.000000e+00> : vector<32x64xf32>
    %101 = tpu.matmul %2, %100, %cst_38 {dimension_numbers = #tpu.dot_dimension_numbers<[1], [0], [0], [1], [0, 0, 1, 1], [], []>} : vector<32x32xbf16>, vector<32x64xbf16>, vector<32x64xf32> -> vector<32x64xf32>
    %102 = vector.extract_strided_slice %98 {offsets = [0, 0], sizes = [16, 8], strides = [1, 1]} : vector<16x32xf32> to vector<16x8xf32>
    %103 = vector.extract_strided_slice %98 {offsets = [0, 8], sizes = [16, 8], strides = [1, 1]} : vector<16x32xf32> to vector<16x8xf32>
    %104 = vector.extract_strided_slice %98 {offsets = [0, 16], sizes = [16, 8], strides = [1, 1]} : vector<16x32xf32> to vector<16x8xf32>
    %105 = vector.extract_strided_slice %98 {offsets = [0, 24], sizes = [16, 8], strides = [1, 1]} : vector<16x32xf32> to vector<16x8xf32>
    %106 = vector.shape_cast %102 : vector<16x8xf32> to vector<1x16x8xf32>
    %107 = vector.shape_cast %103 : vector<16x8xf32> to vector<1x16x8xf32>
    %108 = vector.shape_cast %104 : vector<16x8xf32> to vector<1x16x8xf32>
    %109 = vector.shape_cast %105 : vector<16x8xf32> to vector<1x16x8xf32>
    %110 = tpu.concatenate %106, %107, %108, %109 in 0 : vector<1x16x8xf32>, vector<1x16x8xf32>, vector<1x16x8xf32>, vector<1x16x8xf32> -> vector<4x16x8xf32>
    %111 = vector.extract_strided_slice %101 {offsets = [0, 0], sizes = [32, 8], strides = [1, 1]} : vector<32x64xf32> to vector<32x8xf32>
    %112 = vector.extract_strided_slice %101 {offsets = [0, 8], sizes = [32, 8], strides = [1, 1]} : vector<32x64xf32> to vector<32x8xf32>
    %113 = vector.extract_strided_slice %101 {offsets = [0, 16], sizes = [32, 8], strides = [1, 1]} : vector<32x64xf32> to vector<32x8xf32>
    %114 = vector.extract_strided_slice %101 {offsets = [0, 24], sizes = [32, 8], strides = [1, 1]} : vector<32x64xf32> to vector<32x8xf32>
    %115 = vector.shape_cast %111 : vector<32x8xf32> to vector<1x32x8xf32>
    %116 = vector.shape_cast %112 : vector<32x8xf32> to vector<1x32x8xf32>
    %117 = vector.shape_cast %113 : vector<32x8xf32> to vector<1x32x8xf32>
    %118 = vector.shape_cast %114 : vector<32x8xf32> to vector<1x32x8xf32>
    %119 = tpu.concatenate %115, %116, %117, %118 in 0 : vector<1x32x8xf32>, vector<1x32x8xf32>, vector<1x32x8xf32>, vector<1x32x8xf32> -> vector<4x32x8xf32>
    %120 = vector.extract_strided_slice %101 {offsets = [0, 32], sizes = [32, 8], strides = [1, 1]} : vector<32x64xf32> to vector<32x8xf32>
    %121 = vector.extract_strided_slice %101 {offsets = [0, 40], sizes = [32, 8], strides = [1, 1]} : vector<32x64xf32> to vector<32x8xf32>
    %122 = vector.extract_strided_slice %101 {offsets = [0, 48], sizes = [32, 8], strides = [1, 1]} : vector<32x64xf32> to vector<32x8xf32>
    %123 = vector.extract_strided_slice %101 {offsets = [0, 56], sizes = [32, 8], strides = [1, 1]} : vector<32x64xf32> to vector<32x8xf32>
    %124 = vector.shape_cast %120 : vector<32x8xf32> to vector<1x32x8xf32>
    %125 = vector.shape_cast %121 : vector<32x8xf32> to vector<1x32x8xf32>
    %126 = vector.shape_cast %122 : vector<32x8xf32> to vector<1x32x8xf32>
    %127 = vector.shape_cast %123 : vector<32x8xf32> to vector<1x32x8xf32>
    %128 = tpu.concatenate %124, %125, %126, %127 in 0 : vector<1x32x8xf32>, vector<1x32x8xf32>, vector<1x32x8xf32>, vector<1x32x8xf32> -> vector<4x32x8xf32>
    %129 = arith.truncf %110 : vector<4x16x8xf32> to vector<4x16x8xbf16>
    %130 = arith.truncf %119 : vector<4x32x8xf32> to vector<4x32x8xbf16>
    "tpu.trace_start"() <{level = 10 : i32, message = "hqd,hkd->hqk"}> : () -> ()
    %cst_39 = arith.constant dense<0.000000e+00> : vector<4x16x32xf32>
    %131 = tpu.matmul %129, %130, %cst_39 {dimension_numbers = #tpu.dot_dimension_numbers<[2], [2], [1], [1], [0, 0, 0, 1, 1, 1], [0], [0]>} : vector<4x16x8xbf16>, vector<4x32x8xbf16>, vector<4x16x32xf32> -> vector<4x16x32xf32>
    "tpu.trace_stop"() : () -> ()
    %132 = vector.shape_cast %4 : vector<16x32xf32> to vector<1x16x32xf32>
    %133 = vector.broadcast %132 : vector<1x16x32xf32> to vector<4x16x32xf32>
    %134 = arith.addf %131, %133 : vector<4x16x32xf32>
    %cst_40 = arith.constant dense<0xFF800000> : vector<4x16xf32>
    %135 = vector.multi_reduction <maximumf>, %134, %cst_40 [2] : vector<4x16x32xf32> to vector<4x16xf32>
    %136 = vector.shape_cast %135 : vector<4x16xf32> to vector<4x16x1xf32>
    %137 = vector.broadcast %136 : vector<4x16x1xf32> to vector<4x16x32xf32>
    %138 = arith.subf %134, %137 : vector<4x16x32xf32>
    %139 = math.exp %138 : vector<4x16x32xf32>
    %cst_41 = arith.constant dense<0.000000e+00> : vector<4x16xf32>
    %140 = vector.multi_reduction <add>, %139, %cst_41 [2] : vector<4x16x32xf32> to vector<4x16xf32>
    %141 = vector.shape_cast %140 : vector<4x16xf32> to vector<4x16x1xf32>
    %142 = tpu.reciprocal %141 {approx = true} : vector<4x16x1xf32> -> vector<4x16x1xf32>
    %143 = vector.broadcast %142 : vector<4x16x1xf32> to vector<4x16x32xf32>
    %144 = arith.mulf %139, %143 : vector<4x16x32xf32>
    %145 = arith.truncf %144 : vector<4x16x32xf32> to vector<4x16x32xbf16>
    %146 = arith.truncf %128 : vector<4x32x8xf32> to vector<4x32x8xbf16>
    "tpu.trace_start"() <{level = 10 : i32, message = "hqk,hkd->hqd"}> : () -> ()
    %cst_42 = arith.constant dense<0.000000e+00> : vector<4x16x8xf32>
    %147 = tpu.matmul %145, %146, %cst_42 {dimension_numbers = #tpu.dot_dimension_numbers<[2], [1], [1], [2], [0, 0, 0, 1, 1, 2], [0], [0]>} : vector<4x16x32xbf16>, vector<4x32x8xbf16>, vector<4x16x8xf32> -> vector<4x16x8xf32>
    "tpu.trace_stop"() : () -> ()
    %148 = vector.extract_strided_slice %147 {offsets = [0, 0, 0], sizes = [1, 16, 8], strides = [1, 1, 1]} : vector<4x16x8xf32> to vector<1x16x8xf32>
    %149 = vector.shape_cast %148 : vector<1x16x8xf32> to vector<16x8xf32>
    %150 = vector.extract_strided_slice %147 {offsets = [1, 0, 0], sizes = [1, 16, 8], strides = [1, 1, 1]} : vector<4x16x8xf32> to vector<1x16x8xf32>
    %151 = vector.shape_cast %150 : vector<1x16x8xf32> to vector<16x8xf32>
    %152 = vector.extract_strided_slice %147 {offsets = [2, 0, 0], sizes = [1, 16, 8], strides = [1, 1, 1]} : vector<4x16x8xf32> to vector<1x16x8xf32>
    %153 = vector.shape_cast %152 : vector<1x16x8xf32> to vector<16x8xf32>
    %154 = vector.extract_strided_slice %147 {offsets = [3, 0, 0], sizes = [1, 16, 8], strides = [1, 1, 1]} : vector<4x16x8xf32> to vector<1x16x8xf32>
    %155 = vector.shape_cast %154 : vector<1x16x8xf32> to vector<16x8xf32>
    %156 = tpu.concatenate %149, %151, %153, %155 in 1 : vector<16x8xf32>, vector<16x8xf32>, vector<16x8xf32>, vector<16x8xf32> -> vector<16x32xf32>
    %157 = arith.truncf %156 : vector<16x32xf32> to vector<16x32xbf16>
    %c0_43 = arith.constant 0 : index
    %c0_44 = arith.constant 0 : index
    %c0_45 = arith.constant 0 : index
    %158 = vector.load %arg10[%c0_43, %c0_44, %c0_45] : memref<2x32x32xbf16, #tpu.memory_space<vmem>>, vector<1x32x32xbf16>
    %159 = vector.shape_cast %158 : vector<1x32x32xbf16> to vector<32x32xbf16>
    %cst_46 = arith.constant dense<0.000000e+00> : vector<16x32xf32>
    %160 = tpu.matmul %157, %159, %cst_46 {dimension_numbers = #tpu.dot_dimension_numbers<[1], [0], [0], [1], [0, 0, 1, 1], [], []>} : vector<16x32xbf16>, vector<32x32xbf16>, vector<16x32xf32> -> vector<16x32xf32>
    %161 = arith.addf %80, %160 : vector<16x32xf32>
    %c0_47 = arith.constant 0 : index
    %c0_48 = arith.constant 0 : index
    %c0_49 = arith.constant 0 : index
    %162 = vector.load %arg11[%c0_47, %c0_48, %c0_49] : memref<2x1x32xf32, #tpu.memory_space<vmem>>, vector<1x1x32xf32>
    %163 = vector.shape_cast %162 : vector<1x1x32xf32> to vector<1x32xf32>
    %164 = arith.mulf %161, %161 : vector<16x32xf32>
    %cst_50 = arith.constant dense<0.000000e+00> : vector<16xf32>
    %165 = vector.multi_reduction <add>, %164, %cst_50 [1] : vector<16x32xf32> to vector<16xf32>
    %166 = vector.shape_cast %165 : vector<16xf32> to vector<16x1xf32>
    %cst_51 = arith.constant 3.200000e+01 : f32
    %167 = vector.broadcast %cst_51 : f32 to vector<16x1xf32>
    %168 = arith.divf %166, %167 : vector<16x1xf32>
    %cst_52 = arith.constant 9.99999997E-7 : f32
    %169 = vector.broadcast %cst_52 : f32 to vector<16x1xf32>
    %170 = arith.addf %168, %169 : vector<16x1xf32>
    %171 = math.rsqrt %170 : vector<16x1xf32>
    %172 = vector.broadcast %171 : vector<16x1xf32> to vector<16x32xf32>
    %173 = arith.mulf %161, %172 : vector<16x32xf32>
    %174 = vector.broadcast %163 : vector<1x32xf32> to vector<16x32xf32>
    %175 = arith.mulf %173, %174 : vector<16x32xf32>
    %176 = arith.truncf %175 : vector<16x32xf32> to vector<16x32xbf16>
    %c0_53 = arith.constant 0 : index
    %c0_54 = arith.constant 0 : index
    %c0_55 = arith.constant 0 : index
    %177 = vector.load %arg12[%c0_53, %c0_54, %c0_55] : memref<2x32x64xbf16, #tpu.memory_space<vmem>>, vector<1x32x64xbf16>
    %178 = vector.shape_cast %177 : vector<1x32x64xbf16> to vector<32x64xbf16>
    %cst_56 = arith.constant dense<0.000000e+00> : vector<16x64xf32>
    %179 = tpu.matmul %176, %178, %cst_56 {dimension_numbers = #tpu.dot_dimension_numbers<[1], [0], [0], [1], [0, 0, 1, 1], [], []>} : vector<16x32xbf16>, vector<32x64xbf16>, vector<16x64xf32> -> vector<16x64xf32>
    %cst_57 = arith.constant 0.000000e+00 : f32
    %180 = vector.broadcast %cst_57 : f32 to vector<16x64xf32>
    %181 = arith.maximumf %179, %180 : vector<16x64xf32>
    %182 = arith.truncf %181 : vector<16x64xf32> to vector<16x64xbf16>
    %c0_58 = arith.constant 0 : index
    %c0_59 = arith.constant 0 : index
    %c0_60 = arith.constant 0 : index
    %183 = vector.load %arg13[%c0_58, %c0_59, %c0_60] : memref<2x64x32xbf16, #tpu.memory_space<vmem>>, vector<1x64x32xbf16>
    %184 = vector.shape_cast %183 : vector<1x64x32xbf16> to vector<64x32xbf16>
    %cst_61 = arith.constant dense<0.000000e+00> : vector<16x32xf32>
    %185 = tpu.matmul %182, %184, %cst_61 {dimension_numbers = #tpu.dot_dimension_numbers<[1], [0], [0], [1], [0, 0, 1, 1], [], []>} : vector<16x64xbf16>, vector<64x32xbf16>, vector<16x32xf32> -> vector<16x32xf32>
    %186 = arith.addf %161, %185 : vector<16x32xf32>
    %c1 = arith.constant 1 : index
    %c0_62 = arith.constant 0 : index
    %c0_63 = arith.constant 0 : index
    %187 = vector.load %arg4[%c1, %c0_62, %c0_63] : memref<2x1x32xf32, #tpu.memory_space<vmem>>, vector<1x1x32xf32>
    %188 = vector.shape_cast %187 : vector<1x1x32xf32> to vector<1x32xf32>
    %189 = arith.mulf %186, %186 : vector<16x32xf32>
    %cst_64 = arith.constant dense<0.000000e+00> : vector<16xf32>
    %190 = vector.multi_reduction <add>, %189, %cst_64 [1] : vector<16x32xf32> to vector<16xf32>
    %191 = vector.shape_cast %190 : vector<16xf32> to vector<16x1xf32>
    %cst_65 = arith.constant 3.200000e+01 : f32
    %192 = vector.broadcast %cst_65 : f32 to vector<16x1xf32>
    %193 = arith.divf %191, %192 : vector<16x1xf32>
    %cst_66 = arith.constant 9.99999997E-7 : f32
    %194 = vector.broadcast %cst_66 : f32 to vector<16x1xf32>
    %195 = arith.addf %193, %194 : vector<16x1xf32>
    %196 = math.rsqrt %195 : vector<16x1xf32>
    %197 = vector.broadcast %196 : vector<16x1xf32> to vector<16x32xf32>
    %198 = arith.mulf %186, %197 : vector<16x32xf32>
    %199 = vector.broadcast %188 : vector<1x32xf32> to vector<16x32xf32>
    %200 = arith.mulf %198, %199 : vector<16x32xf32>
    %201 = arith.truncf %200 : vector<16x32xf32> to vector<16x32xbf16>
    %c1_67 = arith.constant 1 : index
    %c0_68 = arith.constant 0 : index
    %c0_69 = arith.constant 0 : index
    %202 = vector.load %arg5[%c1_67, %c0_68, %c0_69] : memref<2x32x96xbf16, #tpu.memory_space<vmem>>, vector<1x32x96xbf16>
    %203 = vector.shape_cast %202 : vector<1x32x96xbf16> to vector<32x96xbf16>
    %cst_70 = arith.constant dense<0.000000e+00> : vector<16x96xf32>
    %204 = tpu.matmul %201, %203, %cst_70 {dimension_numbers = #tpu.dot_dimension_numbers<[1], [0], [0], [1], [0, 0, 1, 1], [], []>} : vector<16x32xbf16>, vector<32x96xbf16>, vector<16x96xf32> -> vector<16x96xf32>
    %205 = vector.extract_strided_slice %204 {offsets = [0, 0], sizes = [16, 8], strides = [1, 1]} : vector<16x96xf32> to vector<16x8xf32>
    %206 = vector.extract_strided_slice %204 {offsets = [0, 8], sizes = [16, 8], strides = [1, 1]} : vector<16x96xf32> to vector<16x8xf32>
    %207 = vector.extract_strided_slice %204 {offsets = [0, 16], sizes = [16, 8], strides = [1, 1]} : vector<16x96xf32> to vector<16x8xf32>
    %208 = vector.extract_strided_slice %204 {offsets = [0, 24], sizes = [16, 8], strides = [1, 1]} : vector<16x96xf32> to vector<16x8xf32>
    %209 = vector.shape_cast %205 : vector<16x8xf32> to vector<1x16x8xf32>
    %210 = vector.shape_cast %206 : vector<16x8xf32> to vector<1x16x8xf32>
    %211 = vector.shape_cast %207 : vector<16x8xf32> to vector<1x16x8xf32>
    %212 = vector.shape_cast %208 : vector<16x8xf32> to vector<1x16x8xf32>
    %213 = tpu.concatenate %209, %210, %211, %212 in 0 : vector<1x16x8xf32>, vector<1x16x8xf32>, vector<1x16x8xf32>, vector<1x16x8xf32> -> vector<4x16x8xf32>
    %214 = vector.extract_strided_slice %204 {offsets = [0, 32], sizes = [16, 8], strides = [1, 1]} : vector<16x96xf32> to vector<16x8xf32>
    %215 = vector.extract_strided_slice %204 {offsets = [0, 40], sizes = [16, 8], strides = [1, 1]} : vector<16x96xf32> to vector<16x8xf32>
    %216 = vector.extract_strided_slice %204 {offsets = [0, 48], sizes = [16, 8], strides = [1, 1]} : vector<16x96xf32> to vector<16x8xf32>
    %217 = vector.extract_strided_slice %204 {offsets = [0, 56], sizes = [16, 8], strides = [1, 1]} : vector<16x96xf32> to vector<16x8xf32>
    %218 = vector.shape_cast %214 : vector<16x8xf32> to vector<1x16x8xf32>
    %219 = vector.shape_cast %215 : vector<16x8xf32> to vector<1x16x8xf32>
    %220 = vector.shape_cast %216 : vector<16x8xf32> to vector<1x16x8xf32>
    %221 = vector.shape_cast %217 : vector<16x8xf32> to vector<1x16x8xf32>
    %222 = tpu.concatenate %218, %219, %220, %221 in 0 : vector<1x16x8xf32>, vector<1x16x8xf32>, vector<1x16x8xf32>, vector<1x16x8xf32> -> vector<4x16x8xf32>
    %223 = vector.extract_strided_slice %204 {offsets = [0, 64], sizes = [16, 8], strides = [1, 1]} : vector<16x96xf32> to vector<16x8xf32>
    %224 = vector.extract_strided_slice %204 {offsets = [0, 72], sizes = [16, 8], strides = [1, 1]} : vector<16x96xf32> to vector<16x8xf32>
    %225 = vector.extract_strided_slice %204 {offsets = [0, 80], sizes = [16, 8], strides = [1, 1]} : vector<16x96xf32> to vector<16x8xf32>
    %226 = vector.extract_strided_slice %204 {offsets = [0, 88], sizes = [16, 8], strides = [1, 1]} : vector<16x96xf32> to vector<16x8xf32>
    %227 = vector.shape_cast %223 : vector<16x8xf32> to vector<1x16x8xf32>
    %228 = vector.shape_cast %224 : vector<16x8xf32> to vector<1x16x8xf32>
    %229 = vector.shape_cast %225 : vector<16x8xf32> to vector<1x16x8xf32>
    %230 = vector.shape_cast %226 : vector<16x8xf32> to vector<1x16x8xf32>
    %231 = tpu.concatenate %227, %228, %229, %230 in 0 : vector<1x16x8xf32>, vector<1x16x8xf32>, vector<1x16x8xf32>, vector<1x16x8xf32> -> vector<4x16x8xf32>
    %232 = arith.truncf %213 : vector<4x16x8xf32> to vector<4x16x8xbf16>
    %233 = arith.truncf %222 : vector<4x16x8xf32> to vector<4x16x8xbf16>
    "tpu.trace_start"() <{level = 10 : i32, message = "hqd,hkd->hqk"}> : () -> ()
    %cst_71 = arith.constant dense<0.000000e+00> : vector<4x16x16xf32>
    %234 = tpu.matmul %232, %233, %cst_71 {dimension_numbers = #tpu.dot_dimension_numbers<[2], [2], [1], [1], [0, 0, 0, 1, 1, 1], [0], [0]>} : vector<4x16x8xbf16>, vector<4x16x8xbf16>, vector<4x16x16xf32> -> vector<4x16x16xf32>
    "tpu.trace_stop"() : () -> ()
    %235 = arith.addf %234, %3 : vector<4x16x16xf32>
    %cst_72 = arith.constant dense<0xFF800000> : vector<4x16xf32>
    %236 = vector.multi_reduction <maximumf>, %235, %cst_72 [2] : vector<4x16x16xf32> to vector<4x16xf32>
    %237 = vector.shape_cast %236 : vector<4x16xf32> to vector<4x16x1xf32>
    %238 = vector.broadcast %237 : vector<4x16x1xf32> to vector<4x16x16xf32>
    %239 = arith.subf %235, %238 : vector<4x16x16xf32>
    %240 = math.exp %239 : vector<4x16x16xf32>
    %cst_73 = arith.constant dense<0.000000e+00> : vector<4x16xf32>
    %241 = vector.multi_reduction <add>, %240, %cst_73 [2] : vector<4x16x16xf32> to vector<4x16xf32>
    %242 = vector.shape_cast %241 : vector<4x16xf32> to vector<4x16x1xf32>
    %243 = tpu.reciprocal %242 {approx = true} : vector<4x16x1xf32> -> vector<4x16x1xf32>
    %244 = vector.broadcast %243 : vector<4x16x1xf32> to vector<4x16x16xf32>
    %245 = arith.mulf %240, %244 : vector<4x16x16xf32>
    %246 = arith.truncf %245 : vector<4x16x16xf32> to vector<4x16x16xbf16>
    %247 = arith.truncf %231 : vector<4x16x8xf32> to vector<4x16x8xbf16>
    "tpu.trace_start"() <{level = 10 : i32, message = "hqk,hkd->hqd"}> : () -> ()
    %cst_74 = arith.constant dense<0.000000e+00> : vector<4x16x8xf32>
    %248 = tpu.matmul %246, %247, %cst_74 {dimension_numbers = #tpu.dot_dimension_numbers<[2], [1], [1], [2], [0, 0, 0, 1, 1, 2], [0], [0]>} : vector<4x16x16xbf16>, vector<4x16x8xbf16>, vector<4x16x8xf32> -> vector<4x16x8xf32>
    "tpu.trace_stop"() : () -> ()
    %249 = vector.extract_strided_slice %248 {offsets = [0, 0, 0], sizes = [1, 16, 8], strides = [1, 1, 1]} : vector<4x16x8xf32> to vector<1x16x8xf32>
    %250 = vector.shape_cast %249 : vector<1x16x8xf32> to vector<16x8xf32>
    %251 = vector.extract_strided_slice %248 {offsets = [1, 0, 0], sizes = [1, 16, 8], strides = [1, 1, 1]} : vector<4x16x8xf32> to vector<1x16x8xf32>
    %252 = vector.shape_cast %251 : vector<1x16x8xf32> to vector<16x8xf32>
    %253 = vector.extract_strided_slice %248 {offsets = [2, 0, 0], sizes = [1, 16, 8], strides = [1, 1, 1]} : vector<4x16x8xf32> to vector<1x16x8xf32>
    %254 = vector.shape_cast %253 : vector<1x16x8xf32> to vector<16x8xf32>
    %255 = vector.extract_strided_slice %248 {offsets = [3, 0, 0], sizes = [1, 16, 8], strides = [1, 1, 1]} : vector<4x16x8xf32> to vector<1x16x8xf32>
    %256 = vector.shape_cast %255 : vector<1x16x8xf32> to vector<16x8xf32>
    %257 = tpu.concatenate %250, %252, %254, %256 in 1 : vector<16x8xf32>, vector<16x8xf32>, vector<16x8xf32>, vector<16x8xf32> -> vector<16x32xf32>
    %258 = arith.truncf %257 : vector<16x32xf32> to vector<16x32xbf16>
    %c1_75 = arith.constant 1 : index
    %c0_76 = arith.constant 0 : index
    %c0_77 = arith.constant 0 : index
    %259 = vector.load %arg6[%c1_75, %c0_76, %c0_77] : memref<2x32x32xbf16, #tpu.memory_space<vmem>>, vector<1x32x32xbf16>
    %260 = vector.shape_cast %259 : vector<1x32x32xbf16> to vector<32x32xbf16>
    %cst_78 = arith.constant dense<0.000000e+00> : vector<16x32xf32>
    %261 = tpu.matmul %258, %260, %cst_78 {dimension_numbers = #tpu.dot_dimension_numbers<[1], [0], [0], [1], [0, 0, 1, 1], [], []>} : vector<16x32xbf16>, vector<32x32xbf16>, vector<16x32xf32> -> vector<16x32xf32>
    %262 = arith.addf %186, %261 : vector<16x32xf32>
    %c1_79 = arith.constant 1 : index
    %c0_80 = arith.constant 0 : index
    %c0_81 = arith.constant 0 : index
    %263 = vector.load %arg7[%c1_79, %c0_80, %c0_81] : memref<2x1x32xf32, #tpu.memory_space<vmem>>, vector<1x1x32xf32>
    %264 = vector.shape_cast %263 : vector<1x1x32xf32> to vector<1x32xf32>
    %265 = arith.mulf %262, %262 : vector<16x32xf32>
    %cst_82 = arith.constant dense<0.000000e+00> : vector<16xf32>
    %266 = vector.multi_reduction <add>, %265, %cst_82 [1] : vector<16x32xf32> to vector<16xf32>
    %267 = vector.shape_cast %266 : vector<16xf32> to vector<16x1xf32>
    %cst_83 = arith.constant 3.200000e+01 : f32
    %268 = vector.broadcast %cst_83 : f32 to vector<16x1xf32>
    %269 = arith.divf %267, %268 : vector<16x1xf32>
    %cst_84 = arith.constant 9.99999997E-7 : f32
    %270 = vector.broadcast %cst_84 : f32 to vector<16x1xf32>
    %271 = arith.addf %269, %270 : vector<16x1xf32>
    %272 = math.rsqrt %271 : vector<16x1xf32>
    %273 = vector.broadcast %272 : vector<16x1xf32> to vector<16x32xf32>
    %274 = arith.mulf %262, %273 : vector<16x32xf32>
    %275 = vector.broadcast %264 : vector<1x32xf32> to vector<16x32xf32>
    %276 = arith.mulf %274, %275 : vector<16x32xf32>
    %277 = arith.truncf %276 : vector<16x32xf32> to vector<16x32xbf16>
    %c1_85 = arith.constant 1 : index
    %c0_86 = arith.constant 0 : index
    %c0_87 = arith.constant 0 : index
    %278 = vector.load %arg8[%c1_85, %c0_86, %c0_87] : memref<2x32x32xbf16, #tpu.memory_space<vmem>>, vector<1x32x32xbf16>
    %279 = vector.shape_cast %278 : vector<1x32x32xbf16> to vector<32x32xbf16>
    %cst_88 = arith.constant dense<0.000000e+00> : vector<16x32xf32>
    %280 = tpu.matmul %277, %279, %cst_88 {dimension_numbers = #tpu.dot_dimension_numbers<[1], [0], [0], [1], [0, 0, 1, 1], [], []>} : vector<16x32xbf16>, vector<32x32xbf16>, vector<16x32xf32> -> vector<16x32xf32>
    %c1_89 = arith.constant 1 : index
    %c0_90 = arith.constant 0 : index
    %c0_91 = arith.constant 0 : index
    %281 = vector.load %arg9[%c1_89, %c0_90, %c0_91] : memref<2x32x64xbf16, #tpu.memory_space<vmem>>, vector<1x32x64xbf16>
    %282 = vector.shape_cast %281 : vector<1x32x64xbf16> to vector<32x64xbf16>
    %cst_92 = arith.constant dense<0.000000e+00> : vector<32x64xf32>
    %283 = tpu.matmul %2, %282, %cst_92 {dimension_numbers = #tpu.dot_dimension_numbers<[1], [0], [0], [1], [0, 0, 1, 1], [], []>} : vector<32x32xbf16>, vector<32x64xbf16>, vector<32x64xf32> -> vector<32x64xf32>
    %284 = vector.extract_strided_slice %280 {offsets = [0, 0], sizes = [16, 8], strides = [1, 1]} : vector<16x32xf32> to vector<16x8xf32>
    %285 = vector.extract_strided_slice %280 {offsets = [0, 8], sizes = [16, 8], strides = [1, 1]} : vector<16x32xf32> to vector<16x8xf32>
    %286 = vector.extract_strided_slice %280 {offsets = [0, 16], sizes = [16, 8], strides = [1, 1]} : vector<16x32xf32> to vector<16x8xf32>
    %287 = vector.extract_strided_slice %280 {offsets = [0, 24], sizes = [16, 8], strides = [1, 1]} : vector<16x32xf32> to vector<16x8xf32>
    %288 = vector.shape_cast %284 : vector<16x8xf32> to vector<1x16x8xf32>
    %289 = vector.shape_cast %285 : vector<16x8xf32> to vector<1x16x8xf32>
    %290 = vector.shape_cast %286 : vector<16x8xf32> to vector<1x16x8xf32>
    %291 = vector.shape_cast %287 : vector<16x8xf32> to vector<1x16x8xf32>
    %292 = tpu.concatenate %288, %289, %290, %291 in 0 : vector<1x16x8xf32>, vector<1x16x8xf32>, vector<1x16x8xf32>, vector<1x16x8xf32> -> vector<4x16x8xf32>
    %293 = vector.extract_strided_slice %283 {offsets = [0, 0], sizes = [32, 8], strides = [1, 1]} : vector<32x64xf32> to vector<32x8xf32>
    %294 = vector.extract_strided_slice %283 {offsets = [0, 8], sizes = [32, 8], strides = [1, 1]} : vector<32x64xf32> to vector<32x8xf32>
    %295 = vector.extract_strided_slice %283 {offsets = [0, 16], sizes = [32, 8], strides = [1, 1]} : vector<32x64xf32> to vector<32x8xf32>
    %296 = vector.extract_strided_slice %283 {offsets = [0, 24], sizes = [32, 8], strides = [1, 1]} : vector<32x64xf32> to vector<32x8xf32>
    %297 = vector.shape_cast %293 : vector<32x8xf32> to vector<1x32x8xf32>
    %298 = vector.shape_cast %294 : vector<32x8xf32> to vector<1x32x8xf32>
    %299 = vector.shape_cast %295 : vector<32x8xf32> to vector<1x32x8xf32>
    %300 = vector.shape_cast %296 : vector<32x8xf32> to vector<1x32x8xf32>
    %301 = tpu.concatenate %297, %298, %299, %300 in 0 : vector<1x32x8xf32>, vector<1x32x8xf32>, vector<1x32x8xf32>, vector<1x32x8xf32> -> vector<4x32x8xf32>
    %302 = vector.extract_strided_slice %283 {offsets = [0, 32], sizes = [32, 8], strides = [1, 1]} : vector<32x64xf32> to vector<32x8xf32>
    %303 = vector.extract_strided_slice %283 {offsets = [0, 40], sizes = [32, 8], strides = [1, 1]} : vector<32x64xf32> to vector<32x8xf32>
    %304 = vector.extract_strided_slice %283 {offsets = [0, 48], sizes = [32, 8], strides = [1, 1]} : vector<32x64xf32> to vector<32x8xf32>
    %305 = vector.extract_strided_slice %283 {offsets = [0, 56], sizes = [32, 8], strides = [1, 1]} : vector<32x64xf32> to vector<32x8xf32>
    %306 = vector.shape_cast %302 : vector<32x8xf32> to vector<1x32x8xf32>
    %307 = vector.shape_cast %303 : vector<32x8xf32> to vector<1x32x8xf32>
    %308 = vector.shape_cast %304 : vector<32x8xf32> to vector<1x32x8xf32>
    %309 = vector.shape_cast %305 : vector<32x8xf32> to vector<1x32x8xf32>
    %310 = tpu.concatenate %306, %307, %308, %309 in 0 : vector<1x32x8xf32>, vector<1x32x8xf32>, vector<1x32x8xf32>, vector<1x32x8xf32> -> vector<4x32x8xf32>
    %311 = arith.truncf %292 : vector<4x16x8xf32> to vector<4x16x8xbf16>
    %312 = arith.truncf %301 : vector<4x32x8xf32> to vector<4x32x8xbf16>
    "tpu.trace_start"() <{level = 10 : i32, message = "hqd,hkd->hqk"}> : () -> ()
    %cst_93 = arith.constant dense<0.000000e+00> : vector<4x16x32xf32>
    %313 = tpu.matmul %311, %312, %cst_93 {dimension_numbers = #tpu.dot_dimension_numbers<[2], [2], [1], [1], [0, 0, 0, 1, 1, 1], [0], [0]>} : vector<4x16x8xbf16>, vector<4x32x8xbf16>, vector<4x16x32xf32> -> vector<4x16x32xf32>
    "tpu.trace_stop"() : () -> ()
    %314 = vector.shape_cast %4 : vector<16x32xf32> to vector<1x16x32xf32>
    %315 = vector.broadcast %314 : vector<1x16x32xf32> to vector<4x16x32xf32>
    %316 = arith.addf %313, %315 : vector<4x16x32xf32>
    %cst_94 = arith.constant dense<0xFF800000> : vector<4x16xf32>
    %317 = vector.multi_reduction <maximumf>, %316, %cst_94 [2] : vector<4x16x32xf32> to vector<4x16xf32>
    %318 = vector.shape_cast %317 : vector<4x16xf32> to vector<4x16x1xf32>
    %319 = vector.broadcast %318 : vector<4x16x1xf32> to vector<4x16x32xf32>
    %320 = arith.subf %316, %319 : vector<4x16x32xf32>
    %321 = math.exp %320 : vector<4x16x32xf32>
    %cst_95 = arith.constant dense<0.000000e+00> : vector<4x16xf32>
    %322 = vector.multi_reduction <add>, %321, %cst_95 [2] : vector<4x16x32xf32> to vector<4x16xf32>
    %323 = vector.shape_cast %322 : vector<4x16xf32> to vector<4x16x1xf32>
    %324 = tpu.reciprocal %323 {approx = true} : vector<4x16x1xf32> -> vector<4x16x1xf32>
    %325 = vector.broadcast %324 : vector<4x16x1xf32> to vector<4x16x32xf32>
    %326 = arith.mulf %321, %325 : vector<4x16x32xf32>
    %327 = arith.truncf %326 : vector<4x16x32xf32> to vector<4x16x32xbf16>
    %328 = arith.truncf %310 : vector<4x32x8xf32> to vector<4x32x8xbf16>
    "tpu.trace_start"() <{level = 10 : i32, message = "hqk,hkd->hqd"}> : () -> ()
    %cst_96 = arith.constant dense<0.000000e+00> : vector<4x16x8xf32>
    %329 = tpu.matmul %327, %328, %cst_96 {dimension_numbers = #tpu.dot_dimension_numbers<[2], [1], [1], [2], [0, 0, 0, 1, 1, 2], [0], [0]>} : vector<4x16x32xbf16>, vector<4x32x8xbf16>, vector<4x16x8xf32> -> vector<4x16x8xf32>
    "tpu.trace_stop"() : () -> ()
    %330 = vector.extract_strided_slice %329 {offsets = [0, 0, 0], sizes = [1, 16, 8], strides = [1, 1, 1]} : vector<4x16x8xf32> to vector<1x16x8xf32>
    %331 = vector.shape_cast %330 : vector<1x16x8xf32> to vector<16x8xf32>
    %332 = vector.extract_strided_slice %329 {offsets = [1, 0, 0], sizes = [1, 16, 8], strides = [1, 1, 1]} : vector<4x16x8xf32> to vector<1x16x8xf32>
    %333 = vector.shape_cast %332 : vector<1x16x8xf32> to vector<16x8xf32>
    %334 = vector.extract_strided_slice %329 {offsets = [2, 0, 0], sizes = [1, 16, 8], strides = [1, 1, 1]} : vector<4x16x8xf32> to vector<1x16x8xf32>
    %335 = vector.shape_cast %334 : vector<1x16x8xf32> to vector<16x8xf32>
    %336 = vector.extract_strided_slice %329 {offsets = [3, 0, 0], sizes = [1, 16, 8], strides = [1, 1, 1]} : vector<4x16x8xf32> to vector<1x16x8xf32>
    %337 = vector.shape_cast %336 : vector<1x16x8xf32> to vector<16x8xf32>
    %338 = tpu.concatenate %331, %333, %335, %337 in 1 : vector<16x8xf32>, vector<16x8xf32>, vector<16x8xf32>, vector<16x8xf32> -> vector<16x32xf32>
    %339 = arith.truncf %338 : vector<16x32xf32> to vector<16x32xbf16>
    %c1_97 = arith.constant 1 : index
    %c0_98 = arith.constant 0 : index
    %c0_99 = arith.constant 0 : index
    %340 = vector.load %arg10[%c1_97, %c0_98, %c0_99] : memref<2x32x32xbf16, #tpu.memory_space<vmem>>, vector<1x32x32xbf16>
    %341 = vector.shape_cast %340 : vector<1x32x32xbf16> to vector<32x32xbf16>
    %cst_100 = arith.constant dense<0.000000e+00> : vector<16x32xf32>
    %342 = tpu.matmul %339, %341, %cst_100 {dimension_numbers = #tpu.dot_dimension_numbers<[1], [0], [0], [1], [0, 0, 1, 1], [], []>} : vector<16x32xbf16>, vector<32x32xbf16>, vector<16x32xf32> -> vector<16x32xf32>
    %343 = arith.addf %262, %342 : vector<16x32xf32>
    %c1_101 = arith.constant 1 : index
    %c0_102 = arith.constant 0 : index
    %c0_103 = arith.constant 0 : index
    %344 = vector.load %arg11[%c1_101, %c0_102, %c0_103] : memref<2x1x32xf32, #tpu.memory_space<vmem>>, vector<1x1x32xf32>
    %345 = vector.shape_cast %344 : vector<1x1x32xf32> to vector<1x32xf32>
    %346 = arith.mulf %343, %343 : vector<16x32xf32>
    %cst_104 = arith.constant dense<0.000000e+00> : vector<16xf32>
    %347 = vector.multi_reduction <add>, %346, %cst_104 [1] : vector<16x32xf32> to vector<16xf32>
    %348 = vector.shape_cast %347 : vector<16xf32> to vector<16x1xf32>
    %cst_105 = arith.constant 3.200000e+01 : f32
    %349 = vector.broadcast %cst_105 : f32 to vector<16x1xf32>
    %350 = arith.divf %348, %349 : vector<16x1xf32>
    %cst_106 = arith.constant 9.99999997E-7 : f32
    %351 = vector.broadcast %cst_106 : f32 to vector<16x1xf32>
    %352 = arith.addf %350, %351 : vector<16x1xf32>
    %353 = math.rsqrt %352 : vector<16x1xf32>
    %354 = vector.broadcast %353 : vector<16x1xf32> to vector<16x32xf32>
    %355 = arith.mulf %343, %354 : vector<16x32xf32>
    %356 = vector.broadcast %345 : vector<1x32xf32> to vector<16x32xf32>
    %357 = arith.mulf %355, %356 : vector<16x32xf32>
    %358 = arith.truncf %357 : vector<16x32xf32> to vector<16x32xbf16>
    %c1_107 = arith.constant 1 : index
    %c0_108 = arith.constant 0 : index
    %c0_109 = arith.constant 0 : index
    %359 = vector.load %arg12[%c1_107, %c0_108, %c0_109] : memref<2x32x64xbf16, #tpu.memory_space<vmem>>, vector<1x32x64xbf16>
    %360 = vector.shape_cast %359 : vector<1x32x64xbf16> to vector<32x64xbf16>
    %cst_110 = arith.constant dense<0.000000e+00> : vector<16x64xf32>
    %361 = tpu.matmul %358, %360, %cst_110 {dimension_numbers = #tpu.dot_dimension_numbers<[1], [0], [0], [1], [0, 0, 1, 1], [], []>} : vector<16x32xbf16>, vector<32x64xbf16>, vector<16x64xf32> -> vector<16x64xf32>
    %cst_111 = arith.constant 0.000000e+00 : f32
    %362 = vector.broadcast %cst_111 : f32 to vector<16x64xf32>
    %363 = arith.maximumf %361, %362 : vector<16x64xf32>
    %364 = arith.truncf %363 : vector<16x64xf32> to vector<16x64xbf16>
    %c1_112 = arith.constant 1 : index
    %c0_113 = arith.constant 0 : index
    %c0_114 = arith.constant 0 : index
    %365 = vector.load %arg13[%c1_112, %c0_113, %c0_114] : memref<2x64x32xbf16, #tpu.memory_space<vmem>>, vector<1x64x32xbf16>
    %366 = vector.shape_cast %365 : vector<1x64x32xbf16> to vector<64x32xbf16>
    %cst_115 = arith.constant dense<0.000000e+00> : vector<16x32xf32>
    %367 = tpu.matmul %364, %366, %cst_115 {dimension_numbers = #tpu.dot_dimension_numbers<[1], [0], [0], [1], [0, 0, 1, 1], [], []>} : vector<16x64xbf16>, vector<64x32xbf16>, vector<16x32xf32> -> vector<16x32xf32>
    %368 = arith.addf %343, %367 : vector<16x32xf32>
    %c0_116 = arith.constant 0 : index
    %c0_117 = arith.constant 0 : index
    %369 = vector.load %arg14[%c0_116, %c0_117] : memref<1x32xf32, #tpu.memory_space<vmem>>, vector<1x32xf32>
    %370 = arith.mulf %368, %368 : vector<16x32xf32>
    %cst_118 = arith.constant dense<0.000000e+00> : vector<16xf32>
    %371 = vector.multi_reduction <add>, %370, %cst_118 [1] : vector<16x32xf32> to vector<16xf32>
    %372 = vector.shape_cast %371 : vector<16xf32> to vector<16x1xf32>
    %cst_119 = arith.constant 3.200000e+01 : f32
    %373 = vector.broadcast %cst_119 : f32 to vector<16x1xf32>
    %374 = arith.divf %372, %373 : vector<16x1xf32>
    %cst_120 = arith.constant 9.99999997E-7 : f32
    %375 = vector.broadcast %cst_120 : f32 to vector<16x1xf32>
    %376 = arith.addf %374, %375 : vector<16x1xf32>
    %377 = math.rsqrt %376 : vector<16x1xf32>
    %378 = vector.broadcast %377 : vector<16x1xf32> to vector<16x32xf32>
    %379 = arith.mulf %368, %378 : vector<16x32xf32>
    %380 = vector.broadcast %369 : vector<1x32xf32> to vector<16x32xf32>
    %381 = arith.mulf %379, %380 : vector<16x32xf32>
    %c0_121 = arith.constant 0 : index
    %c0_122 = arith.constant 0 : index
    %382 = vector.load %arg15[%c0_121, %c0_122] : memref<16x32xf32, #tpu.memory_space<vmem>>, vector<16x32xf32>
    tpu.vector_store %arg15[%c0_121, %c0_122], %381 {strides = array<i32>} : memref<16x32xf32, #tpu.memory_space<vmem>>, vector<16x32xf32>,
    return
  }
}

</mosaic_0001>

<llo_original>
// kernel: tpu_custom_call.1
$region0: #{tpu_custom_call.1}
  #allocation0 [shape = 'u32[]', space=smem, size = 0x4, offset = 0x4, fixed_abs, tag = 'smem constant byte address 0x4 - core index']
  #allocation1 [shape = 'u32[144,128]{1,0:T(1,128)}', space=vmem, size = 0x12000, scoped, tag = 'internal scratch']
  %s0 = inlined_call_operand.hbm [shape: f32[16,32], index: 0, kind: input, shape index: {}]
  %s1 = inlined_call_operand.vmem [shape: f32[32,32], index: 1, kind: input, shape index: {}]
  %s2 = inlined_call_operand.vmem [shape: f32[4,16,16], index: 2, kind: input, shape index: {}]
  %s3 = inlined_call_operand.hbm [shape: f32[16,32], index: 3, kind: input, shape index: {}]
  %s4 = inlined_call_operand.vmem [shape: f32[2,1,32], index: 4, kind: input, shape index: {}]
  %s5 = inlined_call_operand.hbm [shape: bf16[2,32,96], index: 5, kind: input, shape index: {}]
  %s6 = inlined_call_operand.hbm [shape: bf16[2,32,32], index: 6, kind: input, shape index: {}]
  %s7 = inlined_call_operand.vmem [shape: f32[2,1,32], index: 7, kind: input, shape index: {}]
  %s8 = inlined_call_operand.hbm [shape: bf16[2,32,32], index: 8, kind: input, shape index: {}]
  %s9 = inlined_call_operand.hbm [shape: bf16[2,32,64], index: 9, kind: input, shape index: {}]
  %s10 = inlined_call_operand.hbm [shape: bf16[2,32,32], index: 10, kind: input, shape index: {}]
  %s11 = inlined_call_operand.vmem [shape: f32[2,1,32], index: 11, kind: input, shape index: {}]
  %s12 = inlined_call_operand.hbm [shape: bf16[2,32,64], index: 12, kind: input, shape index: {}]
  %s13 = inlined_call_operand.vmem [shape: bf16[2,64,32], index: 13, kind: input, shape index: {}]
  %s14 = inlined_call_operand.vmem [shape: f32[1,32], index: 14, kind: input, shape index: {}]
  %s15 = inlined_call_operand.hbm [shape: f32[16,32], index: 15, kind: output, shape index: {}]
  %s16 = sld [smem:[#allocation0]]
  $region102: #{tpu_custom_call.1} parent=0
    _
  %s18 = ssub.s32 1, %s16
  %s19 = scalar_select 0, %s18, %s16
  $region1: #{tpu_custom_call.1} parent=0
    #allocation2 [shape = 'u8[8192]{0}', space=vmem, size = 0x2000, scoped, tag = 'input window, operand 0, single buffered']
    #allocation3 [shape = 's32[1]{0}', space=sflag, size = 0x4, scoped, tag = 'scoped memory for tpu_custom_call.1']
    #allocation4 [shape = 's32[1]{0}', space=sflag, size = 0x4, scoped, tag = 'scoped memory for tpu_custom_call.1']
    #allocation5 [shape = 'u8[8192]{0}', space=vmem, size = 0x2000, scoped, tag = 'input window, operand 3, single buffered']
    #allocation6 [shape = 's32[1]{0}', space=sflag, size = 0x4, scoped, tag = 'scoped memory for tpu_custom_call.1']
    #allocation7 [shape = 'u8[16384]{0}', space=vmem, size = 0x4000, scoped, tag = 'input window, operand 5, single buffered']
    #allocation8 [shape = 'u8[16384]{0}', space=vmem, size = 0x4000, scoped, tag = 'input window, operand 6, single buffered']
    #allocation9 [shape = 's32[1]{0}', space=sflag, size = 0x4, scoped, tag = 'scoped memory for tpu_custom_call.1']
    #allocation10 [shape = 'u8[16384]{0}', space=vmem, size = 0x4000, scoped, tag = 'input window, operand 8, single buffered']
    #allocation11 [shape = 'u8[16384]{0}', space=vmem, size = 0x4000, scoped, tag = 'input window, operand 9, single buffered']
    #allocation12 [shape = 's32[1]{0}', space=sflag, size = 0x4, scoped, tag = 'scoped memory for tpu_custom_call.1']
    #allocation13 [shape = 'u8[16384]{0}', space=vmem, size = 0x4000, scoped, tag = 'input window, operand 10, single buffered']
    #allocation14 [shape = 'u8[16384]{0}', space=vmem, size = 0x4000, scoped, tag = 'input window, operand 12, single buffered']
    #allocation15 [shape = 's32[1]{0}', space=sflag, size = 0x4, scoped, tag = 'scoped memory for tpu_custom_call.1']
    #allocation16 [shape = 'u8[8192]{0}', space=vmem, size = 0x2000, scoped, tag = 'output window, operand 0, single buffered']
    %20 = vsyncpa [#allocation3], 0
    %21 = vsyncpa [#allocation6], 0
    %22 = vsyncpa [#allocation9], 0
    %23 = vsyncpa [#allocation12], 0
    %24 = vsyncpa [#allocation15], 0
    %25 = vsyncpa [#allocation4], 0
    // Predicated region
    $region2: #{tpu_custom_call.1} parent=1 // pred_check
      _
    $region3: #{tpu_custom_call.1} parent=1 // pred_check_branch
      %27 = sbr.rel (0) target = $region5
    $region4: #{tpu_custom_call.1} parent=1 // pred_region
      %s29 = ssub.s32 256, 256
      %30 = vsyncadd [#allocation3], %s29
      %s31 = sshll.u32 [#allocation2], 4
      %s32 = int_to_ptr.vmem [resolvable:$true] %s31
      %37 = dma.hbm_to_vmem [thread:$0]  %s0, 256, %s32, [#allocation3], 128, 128, 8
    $region5: #{tpu_custom_call.1} parent=1 // pred_fallthru
      _
    // Predicated region
    $region6: #{tpu_custom_call.1} parent=1 // pred_check
      _
    $region7: #{tpu_custom_call.1} parent=1 // pred_check_branch
      %39 = sbr.rel (0) target = $region9
    $region8: #{tpu_custom_call.1} parent=1 // pred_region
      _
    $region9: #{tpu_custom_call.1} parent=1 // pred_fallthru
      _
    // Predicated region
    $region10: #{tpu_custom_call.1} parent=1 // pred_check
      _
    $region11: #{tpu_custom_call.1} parent=1 // pred_check_branch
      %41 = sbr.rel (0) target = $region13
    $region12: #{tpu_custom_call.1} parent=1 // pred_region
      _
    $region13: #{tpu_custom_call.1} parent=1 // pred_fallthru
      _
    // Predicated region
    $region14: #{tpu_custom_call.1} parent=1 // pred_check
      _
    $region15: #{tpu_custom_call.1} parent=1 // pred_check_branch
      %43 = sbr.rel (0) target = $region17
    $region16: #{tpu_custom_call.1} parent=1 // pred_region
      %s45 = ssub.s32 256, 256
      %46 = vsyncadd [#allocation6], %s45
      %s47 = sshll.u32 [#allocation5], 4
      %s48 = int_to_ptr.vmem [resolvable:$true] %s47
      %53 = dma.hbm_to_vmem [thread:$0]  %s3, 256, %s48, [#allocation6], 128, 128, 8
    $region17: #{tpu_custom_call.1} parent=1 // pred_fallthru
      _
    // Predicated region
    $region18: #{tpu_custom_call.1} parent=1 // pred_check
      _
    $region19: #{tpu_custom_call.1} parent=1 // pred_check_branch
      %55 = sbr.rel (0) target = $region21
    $region20: #{tpu_custom_call.1} parent=1 // pred_region
      _
    $region21: #{tpu_custom_call.1} parent=1 // pred_fallthru
      _
    // Predicated region
    $region22: #{tpu_custom_call.1} parent=1 // pred_check
      _
    $region23: #{tpu_custom_call.1} parent=1 // pred_check_branch
      %57 = sbr.rel (0) target = $region25
    $region24: #{tpu_custom_call.1} parent=1 // pred_region
      %s59 = ssub.s32 512, 512
      %60 = vsyncadd [#allocation6], %s59
      %s61 = sshll.u32 [#allocation7], 4
      %s62 = int_to_ptr.vmem [resolvable:$true] %s61
      %67 = dma.hbm_to_vmem [thread:$0]  %s5, 512, %s62, [#allocation6], 64, 64, 4
    $region25: #{tpu_custom_call.1} parent=1 // pred_fallthru
      _
    // Predicated region
    $region26: #{tpu_custom_call.1} parent=1 // pred_check
      _
    $region27: #{tpu_custom_call.1} parent=1 // pred_check_branch
      %69 = sbr.rel (0) target = $region29
    $region28: #{tpu_custom_call.1} parent=1 // pred_region
      %s71 = ssub.s32 512, 512
      %72 = vsyncadd [#allocation9], %s71
      %s73 = sshll.u32 [#allocation8], 4
      %s74 = int_to_ptr.vmem [resolvable:$true] %s73
      %79 = dma.hbm_to_vmem [thread:$0]  %s6, 512, %s74, [#allocation9], 64, 64, 4
    $region29: #{tpu_custom_call.1} parent=1 // pred_fallthru
      _
    // Predicated region
    $region30: #{tpu_custom_call.1} parent=1 // pred_check
      _
    $region31: #{tpu_custom_call.1} parent=1 // pred_check_branch
      %81 = sbr.rel (0) target = $region33
    $region32: #{tpu_custom_call.1} parent=1 // pred_region
      _
    $region33: #{tpu_custom_call.1} parent=1 // pred_fallthru
      _
    // Predicated region
    $region34: #{tpu_custom_call.1} parent=1 // pred_check
      _
    $region35: #{tpu_custom_call.1} parent=1 // pred_check_branch
      %83 = sbr.rel (0) target = $region37
    $region36: #{tpu_custom_call.1} parent=1 // pred_region
      %s85 = ssub.s32 512, 512
      %86 = vsyncadd [#allocation9], %s85
      %s87 = sshll.u32 [#allocation10], 4
      %s88 = int_to_ptr.vmem [resolvable:$true] %s87
      %93 = dma.hbm_to_vmem [thread:$0]  %s8, 512, %s88, [#allocation9], 64, 64, 4
    $region37: #{tpu_custom_call.1} parent=1 // pred_fallthru
      _
    // Predicated region
    $region38: #{tpu_custom_call.1} parent=1 // pred_check
      _
    $region39: #{tpu_custom_call.1} parent=1 // pred_check_branch
      %95 = sbr.rel (0) target = $region41
    $region40: #{tpu_custom_call.1} parent=1 // pred_region
      %s97 = ssub.s32 512, 512
      %98 = vsyncadd [#allocation12], %s97
      %s99 = sshll.u32 [#allocation11], 4
      %s100 = int_to_ptr.vmem [resolvable:$true] %s99
      %105 = dma.hbm_to_vmem [thread:$0]  %s9, 512, %s100, [#allocation12], 64, 64, 4
    $region41: #{tpu_custom_call.1} parent=1 // pred_fallthru
      _
    // Predicated region
    $region42: #{tpu_custom_call.1} parent=1 // pred_check
      _
    $region43: #{tpu_custom_call.1} parent=1 // pred_check_branch
      %107 = sbr.rel (0) target = $region45
    $region44: #{tpu_custom_call.1} parent=1 // pred_region
      %s109 = ssub.s32 512, 512
      %110 = vsyncadd [#allocation12], %s109
      %s111 = sshll.u32 [#allocation13], 4
      %s112 = int_to_ptr.vmem [resolvable:$true] %s111
      %117 = dma.hbm_to_vmem [thread:$0]  %s10, 512, %s112, [#allocation12], 64, 64, 4
    $region45: #{tpu_custom_call.1} parent=1 // pred_fallthru
      _
    // Predicated region
    $region46: #{tpu_custom_call.1} parent=1 // pred_check
      _
    $region47: #{tpu_custom_call.1} parent=1 // pred_check_branch
      %119 = sbr.rel (0) target = $region49
    $region48: #{tpu_custom_call.1} parent=1 // pred_region
      _
    $region49: #{tpu_custom_call.1} parent=1 // pred_fallthru
      _
    // Predicated region
    $region50: #{tpu_custom_call.1} parent=1 // pred_check
      _
    $region51: #{tpu_custom_call.1} parent=1 // pred_check_branch
      %121 = sbr.rel (0) target = $region53
    $region52: #{tpu_custom_call.1} parent=1 // pred_region
      %s123 = ssub.s32 512, 512
      %124 = vsyncadd [#allocation15], %s123
      %s125 = sshll.u32 [#allocation14], 4
      %s126 = int_to_ptr.vmem [resolvable:$true] %s125
      %131 = dma.hbm_to_vmem [thread:$0]  %s12, 512, %s126, [#allocation15], 64, 64, 4
    $region53: #{tpu_custom_call.1} parent=1 // pred_fallthru
      _
    // Predicated region
    $region54: #{tpu_custom_call.1} parent=1 // pred_check
      _
    $region55: #{tpu_custom_call.1} parent=1 // pred_check_branch
      %133 = sbr.rel (0) target = $region57
    $region56: #{tpu_custom_call.1} parent=1 // pred_region
      _
    $region57: #{tpu_custom_call.1} parent=1 // pred_fallthru
      _
    // Predicated region
    $region58: #{tpu_custom_call.1} parent=1 // pred_check
      _
    $region59: #{tpu_custom_call.1} parent=1 // pred_check_branch
      %135 = sbr.rel (0) target = $region61
    $region60: #{tpu_custom_call.1} parent=1 // pred_region
      _
    $region61: #{tpu_custom_call.1} parent=1 // pred_fallthru
      _
    // Predicated region
    $region62: #{tpu_custom_call.1} parent=1 // pred_check
      _
    $region63: #{tpu_custom_call.1} parent=1 // pred_check_branch
      %137 = sbr.rel (0) target = $region65
    $region64: #{tpu_custom_call.1} parent=1 // pred_region
      %138 = dma.done [#allocation3], 256
    $region65: #{tpu_custom_call.1} parent=1 // pred_fallthru
      _
    // Predicated region
    $region66: #{tpu_custom_call.1} parent=1 // pred_check
      _
    $region67: #{tpu_custom_call.1} parent=1 // pred_check_branch
      %140 = sbr.rel (0) target = $region69
    $region68: #{tpu_custom_call.1} parent=1 // pred_region
      %141 = dma.done [#allocation6], 256
    $region69: #{tpu_custom_call.1} parent=1 // pred_fallthru
      _
    // Predicated region
    $region70: #{tpu_custom_call.1} parent=1 // pred_check
      _
    $region71: #{tpu_custom_call.1} parent=1 // pred_check_branch
      %143 = sbr.rel (0) target = $region73
    $region72: #{tpu_custom_call.1} parent=1 // pred_region
      %144 = dma.done [#allocation6], 512
    $region73: #{tpu_custom_call.1} parent=1 // pred_fallthru
      _
    // Predicated region
    $region74: #{tpu_custom_call.1} parent=1 // pred_check
      _
    $region75: #{tpu_custom_call.1} parent=1 // pred_check_branch
      %146 = sbr.rel (0) target = $region77
    $region76: #{tpu_custom_call.1} parent=1 // pred_region
      %147 = dma.done [#allocation9], 512
    $region77: #{tpu_custom_call.1} parent=1 // pred_fallthru
      _
    // Predicated region
    $region78: #{tpu_custom_call.1} parent=1 // pred_check
      _
    $region79: #{tpu_custom_call.1} parent=1 // pred_check_branch
      %149 = sbr.rel (0) target = $region81
    $region80: #{tpu_custom_call.1} parent=1 // pred_region
      %150 = dma.done [#allocation9], 512
    $region81: #{tpu_custom_call.1} parent=1 // pred_fallthru
      _
    // Predicated region
    $region82: #{tpu_custom_call.1} parent=1 // pred_check
      _
    $region83: #{tpu_custom_call.1} parent=1 // pred_check_branch
      %152 = sbr.rel (0) target = $region85
    $region84: #{tpu_custom_call.1} parent=1 // pred_region
      %153 = dma.done [#allocation12], 512
    $region85: #{tpu_custom_call.1} parent=1 // pred_fallthru
      _
    // Predicated region
    $region86: #{tpu_custom_call.1} parent=1 // pred_check
      _
    $region87: #{tpu_custom_call.1} parent=1 // pred_check_branch
      %155 = sbr.rel (0) target = $region89
    $region88: #{tpu_custom_call.1} parent=1 // pred_region
      %156 = dma.done [#allocation12], 512
    $region89: #{tpu_custom_call.1} parent=1 // pred_fallthru
      _
    // Predicated region
    $region90: #{tpu_custom_call.1} parent=1 // pred_check
      _
    $region91: #{tpu_custom_call.1} parent=1 // pred_check_branch
      %158 = sbr.rel (0) target = $region93
    $region92: #{tpu_custom_call.1} parent=1 // pred_region
      %159 = dma.done [#allocation15], 512
    $region93: #{tpu_custom_call.1} parent=1 // pred_fallthru
      _
    %v161 = vld [vmem:[#allocation2] sm:$0xff]
    %v162 = vld [vmem:[#allocation2 + $0x8] sm:$0xff]
    %v163 = vld [vmem:[%s1] sm:$0xff]
    %v164 = vld [vmem:[%s1 + $0x8] sm:$0xff]
    %v165 = vld [vmem:[%s1 + $0x10] sm:$0xff]
    %v166 = vld [vmem:[%s1 + $0x18] sm:$0xff]
    %v167 = vpack.c.bf16 %v164, %v163
    %v168 = vpack.c.bf16 %v166, %v165
    %v169 = vld [vmem:[%s2] sm:$0xff]
    %v170 = vld [vmem:[%s2 + $0x8] sm:$0xff]
    %v171 = vld [vmem:[%s2 + $0x10] sm:$0xff]
    %v172 = vld [vmem:[%s2 + $0x18] sm:$0xff]
    %v173 = vld [vmem:[%s2 + $0x20] sm:$0xff]
    %v174 = vld [vmem:[%s2 + $0x28] sm:$0xff]
    %v175 = vld [vmem:[%s2 + $0x30] sm:$0xff]
    %v176 = vld [vmem:[%s2 + $0x38] sm:$0xff]
    %v177 = vld [vmem:[#allocation5] sm:$0xff]
    %v178 = vld [vmem:[#allocation5 + $0x8] sm:$0xff]
    %v179 = vld [vmem:[%s4] sm:$0x1]
    %v180 = vmul.f32 %v161, %v161
    %v181 = vmul.f32 %v162, %v162
    %vm182 = vcmask 261120
    %v183 = vsel %vm182, %v180, 0.0
    %184 = vadd.xlane.f32.xlu0 %v183
    %v185 = vpop.xlane.xlu0 %184
    %v186 = vsel %vm182, %v181, 0.0
    %187 = vadd.xlane.f32.xlu0 %v186
    %v188 = vpop.xlane.xlu0 %187
    %v189 = vrcp.pop 32.0
    %v190 = vmul.f32 %v185, %v189
    %v191 = vmul.f32 %v188, %v189
    %v192 = vadd.f32 %v190, 1e-06
    %v193 = vadd.f32 %v191, 1e-06
    %v194 = vrsqrt.pop %v192
    %v195 = vrsqrt.pop %v193
    %v196 = vmul.f32 %v161, %v194
    %v197 = vmul.f32 %v162, %v195
    %v199 = vlaneseq
    %v200 = vshrl.u32 %v199, 7
    %v201 = vsub.s32 0, %v200
    %v202 = vrot.slane %v179, %v201
    %v204 = vmul.f32 %v196, %v202
    %v205 = vmul.f32 %v197, %v202
    %v206 = vpack.c.bf16 %v205, %v204
    %v207 = vld [vmem:[#allocation7] sm:$0xf]
    %v208 = vld [vmem:[#allocation7 + $0x4] sm:$0xf]
    %v209 = vld [vmem:[#allocation7 + $0x8] sm:$0xf]
    %v210 = vld [vmem:[#allocation7 + $0xc] sm:$0xf]
    %v215 = vunpack.c.l.b16 %v207
    %v216 = vunpack.c.l.b16 %v208
    %v217 = vunpack.c.l.b16 %v209
    %v218 = vunpack.c.l.b16 %v210
    %v219 = vpack.c.b16 %v216, %v215
    %v220 = vpack.c.b16 %v218, %v217
    %v224 = vsel %vm182, %v206, 0
    %226 = vmatprep.subr.bf16.mxu0 0
    %227 = vmatpush1.bf16.msra.mxu0 0
    %228 = vmatprep.subr.bf16.mxu0 0
    %229 = vmatpush1.bf16.msra.mxu0 0
    %230 = vmatprep.subr.bf16.mxu0 0
    %231 = vmatpush1.bf16.msra.mxu0 0
    %232 = vmatprep.subr.bf16.mxu0 0
    %233 = vmatpush1.bf16.msra.mxu0 0
    %234 = vmatprep.subr.bf16.mxu0 0
    %235 = vmatpush1.bf16.msra.mxu0 0
    %236 = vmatprep.subr.bf16.mxu0 0
    %237 = vmatpush1.bf16.msra.mxu0 0
    %238 = vmatprep.subr.bf16.mxu0 0
    %239 = vmatpush1.bf16.msra.mxu0 %v220
    %240 = vmatprep.subr.bf16.mxu0 0
    %241 = vmatpush1.bf16.msra.mxu0 %v219
    %242 = vmatprep.subr.bf16.mxu0 0
    %243 = vmatpush2.bf16.msra.mxu0 0
    %244 = vmatprep.subr.bf16.mxu0 0
    %245 = vmatpush2.bf16.msra.mxu0 0
    %246 = vmatprep.subr.bf16.mxu0 0
    %247 = vmatpush2.bf16.msra.mxu0 0
    %248 = vmatprep.subr.bf16.mxu0 0
    %249 = vmatpush2.bf16.msra.mxu0 0
    %250 = vmatprep.subr.bf16.mxu0 0
    %251 = vmatpush2.bf16.msra.mxu0 0
    %252 = vmatprep.subr.bf16.mxu0 0
    %253 = vmatpush2.bf16.msra.mxu0 0
    %254 = vmatprep.subr.bf16.mxu0 0
    %255 = vmatpush2.bf16.msra.mxu0 0
    %256 = vmatprep.subr.bf16.mxu0 0
    %257 = vmatpush2.bf16.msra.mxu0 0
    %258 = vmatprep.mubr.bf16.mxu0 0
    %259 = vmatmul.mubr.bf16.gmra.mxu0 %v224
    %v260 = vpop.f32.mrf.mxu0
    %v261 = vadd.f32 0.0, %v260
    %v262 = vpop.f32.mrf.mxu0
    %v263 = vpop.f32.mrf.mxu0
    %v264 = vadd.f32 0.0, %v263
    %v265 = vpop.f32.mrf.mxu0
    %266 = vdwg.mxu0
    %269 = vrot.lane.b32.xlu0 %v261, 120
    %v270 = vpop.permute.xlu0 %269
    %271 = vrot.lane.b32.xlu0 %v264, 120
    %v272 = vpop.permute.xlu0 %271
    %275 = vrot.lane.b32.xlu0 %v261, 112
    %v276 = vpop.permute.xlu0 %275
    %277 = vrot.lane.b32.xlu0 %v264, 112
    %v278 = vpop.permute.xlu0 %277
    %281 = vrot.lane.b32.xlu0 %v261, 104
    %v282 = vpop.permute.xlu0 %281
    %283 = vrot.lane.b32.xlu0 %v264, 104
    %v284 = vpop.permute.xlu0 %283
    %v287 = vpack.c.bf16 %v264, %v261
    %v288 = vpack.c.bf16 %v272, %v270
    %v289 = vpack.c.bf16 %v278, %v276
    %v290 = vpack.c.bf16 %v284, %v282
    %292 = vrot.lane.b32.xlu0 %v287, 96
    %v293 = vpop.permute.xlu0 %292
    %vm294 = vcmask 64512
    %v296 = vsel %vm294, %v287, 0
    %v299 = vsel %vm294, %v293, 0
    %301 = vmatprep.subr.bf16.mxu0 0
    %302 = vmatpush1.bf16.xpose.msra.mxu0 0
    %303 = vmatprep.subr.bf16.mxu0 0
    %304 = vmatpush1.bf16.xpose.msra.mxu0 0
    %305 = vmatprep.subr.bf16.mxu0 0
    %306 = vmatpush1.bf16.xpose.msra.mxu0 0
    %307 = vmatprep.subr.bf16.mxu0 0
    %308 = vmatpush1.bf16.xpose.msra.mxu0 0
    %309 = vmatprep.subr.bf16.mxu0 0
    %310 = vmatpush1.bf16.xpose.msra.mxu0 0
    %311 = vmatprep.subr.bf16.mxu0 0
    %312 = vmatpush1.bf16.xpose.msra.mxu0 0
    %313 = vmatprep.subr.bf16.mxu0 0
    %314 = vmatpush1.bf16.xpose.msra.mxu0 0
    %315 = vmatprep.subr.bf16.mxu0 0
    %316 = vmatpush1.bf16.xpose.msra.mxu0 %v299
    %317 = vmatprep.subr.bf16.mxu0 0
    %318 = vmatpush2.bf16.xpose.msra.mxu0 0
    %319 = vmatprep.subr.bf16.mxu0 0
    %320 = vmatpush2.bf16.xpose.msra.mxu0 0
    %321 = vmatprep.subr.bf16.mxu0 0
    %322 = vmatpush2.bf16.xpose.msra.mxu0 0
    %323 = vmatprep.subr.bf16.mxu0 0
    %324 = vmatpush2.bf16.xpose.msra.mxu0 0
    %325 = vmatprep.subr.bf16.mxu0 0
    %326 = vmatpush2.bf16.xpose.msra.mxu0 0
    %327 = vmatprep.subr.bf16.mxu0 0
    %328 = vmatpush2.bf16.xpose.msra.mxu0 0
    %329 = vmatprep.subr.bf16.mxu0 0
    %330 = vmatpush2.bf16.xpose.msra.mxu0 0
    %331 = vmatprep.subr.bf16.mxu0 0
    %332 = vmatpush2.bf16.xpose.msra.mxu0 0
    %333 = vmatprep.mubr.bf16.mxu0 0
    %334 = vmatmul.mubr.bf16.gmra.mxu0 %v296
    %v335 = vpop.f32.mrf.mxu0
    %v336 = vadd.f32 %v169, %v335
    %v337 = vpop.f32.mrf.mxu0
    %v338 = vpop.f32.mrf.mxu0
    %v339 = vadd.f32 %v170, %v338
    %v340 = vpop.f32.mrf.mxu0
    %341 = vdwg.mxu0
    %343 = vrot.lane.b32.xlu0 %v288, 96
    %v344 = vpop.permute.xlu0 %343
    %v346 = vsel %vm294, %v288, 0
    %v349 = vsel %vm294, %v344, 0
    %351 = vmatprep.subr.bf16.mxu0 0
    %352 = vmatpush1.bf16.xpose.msra.mxu0 0
    %353 = vmatprep.subr.bf16.mxu0 0
    %354 = vmatpush1.bf16.xpose.msra.mxu0 0
    %355 = vmatprep.subr.bf16.mxu0 0
    %356 = vmatpush1.bf16.xpose.msra.mxu0 0
    %357 = vmatprep.subr.bf16.mxu0 0
    %358 = vmatpush1.bf16.xpose.msra.mxu0 0
    %359 = vmatprep.subr.bf16.mxu0 0
    %360 = vmatpush1.bf16.xpose.msra.mxu0 0
    %361 = vmatprep.subr.bf16.mxu0 0
    %362 = vmatpush1.bf16.xpose.msra.mxu0 0
    %363 = vmatprep.subr.bf16.mxu0 0
    %364 = vmatpush1.bf16.xpose.msra.mxu0 0
    %365 = vmatprep.subr.bf16.mxu0 0
    %366 = vmatpush1.bf16.xpose.msra.mxu0 %v349
    %367 = vmatprep.subr.bf16.mxu0 0
    %368 = vmatpush2.bf16.xpose.msra.mxu0 0
    %369 = vmatprep.subr.bf16.mxu0 0
    %370 = vmatpush2.bf16.xpose.msra.mxu0 0
    %371 = vmatprep.subr.bf16.mxu0 0
    %372 = vmatpush2.bf16.xpose.msra.mxu0 0
    %373 = vmatprep.subr.bf16.mxu0 0
    %374 = vmatpush2.bf16.xpose.msra.mxu0 0
    %375 = vmatprep.subr.bf16.mxu0 0
    %376 = vmatpush2.bf16.xpose.msra.mxu0 0
    %377 = vmatprep.subr.bf16.mxu0 0
    %378 = vmatpush2.bf16.xpose.msra.mxu0 0
    %379 = vmatprep.subr.bf16.mxu0 0
    %380 = vmatpush2.bf16.xpose.msra.mxu0 0
    %381 = vmatprep.subr.bf16.mxu0 0
    %382 = vmatpush2.bf16.xpose.msra.mxu0 0
    %383 = vmatprep.mubr.bf16.mxu0 0
    %384 = vmatmul.mubr.bf16.gmra.mxu0 %v346
    %v385 = vpop.f32.mrf.mxu0
    %v386 = vadd.f32 %v171, %v385
    %v387 = vpop.f32.mrf.mxu0
    %v388 = vpop.f32.mrf.mxu0
    %v389 = vadd.f32 %v172, %v388
    %v390 = vpop.f32.mrf.mxu0
    %391 = vdwg.mxu0
    %393 = vrot.lane.b32.xlu0 %v289, 96
    %v394 = vpop.permute.xlu0 %393
    %v396 = vsel %vm294, %v289, 0
    %v399 = vsel %vm294, %v394, 0
    %401 = vmatprep.subr.bf16.mxu0 0
    %402 = vmatpush1.bf16.xpose.msra.mxu0 0
    %403 = vmatprep.subr.bf16.mxu0 0
    %404 = vmatpush1.bf16.xpose.msra.mxu0 0
    %405 = vmatprep.subr.bf16.mxu0 0
    %406 = vmatpush1.bf16.xpose.msra.mxu0 0
    %407 = vmatprep.subr.bf16.mxu0 0
    %408 = vmatpush1.bf16.xpose.msra.mxu0 0
    %409 = vmatprep.subr.bf16.mxu0 0
    %410 = vmatpush1.bf16.xpose.msra.mxu0 0
    %411 = vmatprep.subr.bf16.mxu0 0
    %412 = vmatpush1.bf16.xpose.msra.mxu0 0
    %413 = vmatprep.subr.bf16.mxu0 0
    %414 = vmatpush1.bf16.xpose.msra.mxu0 0
    %415 = vmatprep.subr.bf16.mxu0 0
    %416 = vmatpush1.bf16.xpose.msra.mxu0 %v399
    %417 = vmatprep.subr.bf16.mxu0 0
    %418 = vmatpush2.bf16.xpose.msra.mxu0 0
    %419 = vmatprep.subr.bf16.mxu0 0
    %420 = vmatpush2.bf16.xpose.msra.mxu0 0
    %421 = vmatprep.subr.bf16.mxu0 0
    %422 = vmatpush2.bf16.xpose.msra.mxu0 0
    %423 = vmatprep.subr.bf16.mxu0 0
    %424 = vmatpush2.bf16.xpose.msra.mxu0 0
    %425 = vmatprep.subr.bf16.mxu0 0
    %426 = vmatpush2.bf16.xpose.msra.mxu0 0
    %427 = vmatprep.subr.bf16.mxu0 0
    %428 = vmatpush2.bf16.xpose.msra.mxu0 0
    %429 = vmatprep.subr.bf16.mxu0 0
    %430 = vmatpush2.bf16.xpose.msra.mxu0 0
    %431 = vmatprep.subr.bf16.mxu0 0
    %432 = vmatpush2.bf16.xpose.msra.mxu0 0
    %433 = vmatprep.mubr.bf16.mxu0 0
    %434 = vmatmul.mubr.bf16.gmra.mxu0 %v396
    %v435 = vpop.f32.mrf.mxu0
    %v436 = vadd.f32 %v173, %v435
    %v437 = vpop.f32.mrf.mxu0
    %v438 = vpop.f32.mrf.mxu0
    %v439 = vadd.f32 %v174, %v438
    %v440 = vpop.f32.mrf.mxu0
    %441 = vdwg.mxu0
    %443 = vrot.lane.b32.xlu0 %v290, 96
    %v444 = vpop.permute.xlu0 %443
    %v446 = vsel %vm294, %v290, 0
    %v449 = vsel %vm294, %v444, 0
    %451 = vmatprep.subr.bf16.mxu0 0
    %452 = vmatpush1.bf16.xpose.msra.mxu0 0
    %453 = vmatprep.subr.bf16.mxu0 0
    %454 = vmatpush1.bf16.xpose.msra.mxu0 0
    %455 = vmatprep.subr.bf16.mxu0 0
    %456 = vmatpush1.bf16.xpose.msra.mxu0 0
    %457 = vmatprep.subr.bf16.mxu0 0
    %458 = vmatpush1.bf16.xpose.msra.mxu0 0
    %459 = vmatprep.subr.bf16.mxu0 0
    %460 = vmatpush1.bf16.xpose.msra.mxu0 0
    %461 = vmatprep.subr.bf16.mxu0 0
    %462 = vmatpush1.bf16.xpose.msra.mxu0 0
    %463 = vmatprep.subr.bf16.mxu0 0
    %464 = vmatpush1.bf16.xpose.msra.mxu0 0
    %465 = vmatprep.subr.bf16.mxu0 0
    %466 = vmatpush1.bf16.xpose.msra.mxu0 %v449
    %467 = vmatprep.subr.bf16.mxu0 0
    %468 = vmatpush2.bf16.xpose.msra.mxu0 0
    %469 = vmatprep.subr.bf16.mxu0 0
    %470 = vmatpush2.bf16.xpose.msra.mxu0 0
    %471 = vmatprep.subr.bf16.mxu0 0
    %472 = vmatpush2.bf16.xpose.msra.mxu0 0
    %473 = vmatprep.subr.bf16.mxu0 0
    %474 = vmatpush2.bf16.xpose.msra.mxu0 0
    %475 = vmatprep.subr.bf16.mxu0 0
    %476 = vmatpush2.bf16.xpose.msra.mxu0 0
    %477 = vmatprep.subr.bf16.mxu0 0
    %478 = vmatpush2.bf16.xpose.msra.mxu0 0
    %479 = vmatprep.subr.bf16.mxu0 0
    %480 = vmatpush2.bf16.xpose.msra.mxu0 0
    %481 = vmatprep.subr.bf16.mxu0 0
    %482 = vmatpush2.bf16.xpose.msra.mxu0 0
    %483 = vmatprep.mubr.bf16.mxu0 0
    %484 = vmatmul.mubr.bf16.gmra.mxu0 %v446
    %v485 = vpop.f32.mrf.mxu0
    %v486 = vadd.f32 %v175, %v485
    %v487 = vpop.f32.mrf.mxu0
    %v488 = vpop.f32.mrf.mxu0
    %v489 = vadd.f32 %v176, %v488
    %v490 = vpop.f32.mrf.mxu0
    %491 = vdwg.mxu0
    %vm492 = vcmask 130048
    %v493 = vsel %vm492, %v336, -inf
    %494 = vmax.xlane.f32.xlu0 %v493
    %v495 = vpop.xlane.xlu0 %494
    %v496 = vsel %vm492, %v339, -inf
    %497 = vmax.xlane.f32.xlu0 %v496
    %v498 = vpop.xlane.xlu0 %497
    %v499 = vsel %vm492, %v386, -inf
    %500 = vmax.xlane.f32.xlu0 %v499
    %v501 = vpop.xlane.xlu0 %500
    %v502 = vsel %vm492, %v389, -inf
    %503 = vmax.xlane.f32.xlu0 %v502
    %v504 = vpop.xlane.xlu0 %503
    %v505 = vsel %vm492, %v436, -inf
    %506 = vmax.xlane.f32.xlu0 %v505
    %v507 = vpop.xlane.xlu0 %506
    %v508 = vsel %vm492, %v439, -inf
    %509 = vmax.xlane.f32.xlu0 %v508
    %v510 = vpop.xlane.xlu0 %509
    %v511 = vsel %vm492, %v486, -inf
    %512 = vmax.xlane.f32.xlu0 %v511
    %v513 = vpop.xlane.xlu0 %512
    %v514 = vsel %vm492, %v489, -inf
    %515 = vmax.xlane.f32.xlu0 %v514
    %v516 = vpop.xlane.xlu0 %515
    %v517 = vsub.f32 %v336, %v495
    %v518 = vsub.f32 %v339, %v498
    %v519 = vsub.f32 %v386, %v501
    %v520 = vsub.f32 %v389, %v504
    %v521 = vsub.f32 %v436, %v507
    %v522 = vsub.f32 %v439, %v510
    %v523 = vsub.f32 %v486, %v513
    %v524 = vsub.f32 %v489, %v516
    %v525 = vmul.f32 %v517, 1.442695
    %v526 = vpow.pop %v525
    %v527 = vmul.f32 %v518, 1.442695
    %v528 = vpow.pop %v527
    %v529 = vmul.f32 %v519, 1.442695
    %v530 = vpow.pop %v529
    %v531 = vmul.f32 %v520, 1.442695
    %v532 = vpow.pop %v531
    %v533 = vmul.f32 %v521, 1.442695
    %v534 = vpow.pop %v533
    %v535 = vmul.f32 %v522, 1.442695
    %v536 = vpow.pop %v535
    %v537 = vmul.f32 %v523, 1.442695
    %v538 = vpow.pop %v537
    %v539 = vmul.f32 %v524, 1.442695
    %v540 = vpow.pop %v539
    %v541 = vsel %vm492, %v526, 0.0
    %542 = vadd.xlane.f32.xlu0 %v541
    %v543 = vpop.xlane.xlu0 %542
    %v544 = vsel %vm492, %v528, 0.0
    %545 = vadd.xlane.f32.xlu0 %v544
    %v546 = vpop.xlane.xlu0 %545
    %v547 = vsel %vm492, %v530, 0.0
    %548 = vadd.xlane.f32.xlu0 %v547
    %v549 = vpop.xlane.xlu0 %548
    %v550 = vsel %vm492, %v532, 0.0
    %551 = vadd.xlane.f32.xlu0 %v550
    %v552 = vpop.xlane.xlu0 %551
    %v553 = vsel %vm492, %v534, 0.0
    %554 = vadd.xlane.f32.xlu0 %v553
    %v555 = vpop.xlane.xlu0 %554
    %v556 = vsel %vm492, %v536, 0.0
    %557 = vadd.xlane.f32.xlu0 %v556
    %v558 = vpop.xlane.xlu0 %557
    %v559 = vsel %vm492, %v538, 0.0
    %560 = vadd.xlane.f32.xlu0 %v559
    %v561 = vpop.xlane.xlu0 %560
    %v562 = vsel %vm492, %v540, 0.0
    %563 = vadd.xlane.f32.xlu0 %v562
    %v564 = vpop.xlane.xlu0 %563
    %v565 = vrcp.pop %v543
    %v566 = vrcp.pop %v546
    %v567 = vrcp.pop %v549
    %v568 = vrcp.pop %v552
    %v569 = vrcp.pop %v555
    %v570 = vrcp.pop %v558
    %v571 = vrcp.pop %v561
    %v572 = vrcp.pop %v564
    %v573 = vmul.f32 %v526, %v565
    %v574 = vmul.f32 %v528, %v566
    %v575 = vmul.f32 %v530, %v567
    %v576 = vmul.f32 %v532, %v568
    %v577 = vmul.f32 %v534, %v569
    %v578 = vmul.f32 %v536, %v570
    %v579 = vmul.f32 %v538, %v571
    %v580 = vmul.f32 %v540, %v572
    %v581 = vpack.c.bf16 %v574, %v573
    %v582 = vpack.c.bf16 %v576, %v575
    %v583 = vpack.c.bf16 %v578, %v577
    %v584 = vpack.c.bf16 %v580, %v579
    %585 = vrot.lane.b32.xlu0 %v287, 64
    %v586 = vpop.permute.xlu0 %585
    %v589 = vsel %vm492, %v581, 0
    %591 = vmatprep.subr.bf16.mxu0 0
    %592 = vmatpush1.bf16.msra.mxu0 0
    %593 = vmatprep.subr.bf16.mxu0 0
    %594 = vmatpush1.bf16.msra.mxu0 0
    %595 = vmatprep.subr.bf16.mxu0 0
    %596 = vmatpush1.bf16.msra.mxu0 0
    %597 = vmatprep.subr.bf16.mxu0 0
    %598 = vmatpush1.bf16.msra.mxu0 0
    %599 = vmatprep.subr.bf16.mxu0 0
    %600 = vmatpush1.bf16.msra.mxu0 0
    %601 = vmatprep.subr.bf16.mxu0 0
    %602 = vmatpush1.bf16.msra.mxu0 0
    %603 = vmatprep.subr.bf16.mxu0 0
    %604 = vmatpush1.bf16.msra.mxu0 0
    %605 = vmatprep.subr.bf16.mxu0 0
    %606 = vmatpush1.bf16.msra.mxu0 %v586
    %607 = vmatprep.subr.bf16.mxu0 0
    %608 = vmatpush2.bf16.msra.mxu0 0
    %609 = vmatprep.subr.bf16.mxu0 0
    %610 = vmatpush2.bf16.msra.mxu0 0
    %611 = vmatprep.subr.bf16.mxu0 0
    %612 = vmatpush2.bf16.msra.mxu0 0
    %613 = vmatprep.subr.bf16.mxu0 0
    %614 = vmatpush2.bf16.msra.mxu0 0
    %615 = vmatprep.subr.bf16.mxu0 0
    %616 = vmatpush2.bf16.msra.mxu0 0
    %617 = vmatprep.subr.bf16.mxu0 0
    %618 = vmatpush2.bf16.msra.mxu0 0
    %619 = vmatprep.subr.bf16.mxu0 0
    %620 = vmatpush2.bf16.msra.mxu0 0
    %621 = vmatprep.subr.bf16.mxu0 0
    %622 = vmatpush2.bf16.msra.mxu0 0
    %623 = vmatprep.mubr.bf16.mxu0 0
    %624 = vmatmul.mubr.bf16.gmra.mxu0 %v589
    %v625 = vpop.f32.mrf.mxu0
    %v626 = vadd.f32 0.0, %v625
    %v627 = vpop.f32.mrf.mxu0
    %v628 = vpop.f32.mrf.mxu0
    %v629 = vadd.f32 0.0, %v628
    %v630 = vpop.f32.mrf.mxu0
    %631 = vdwg.mxu0
    %632 = vrot.lane.b32.xlu0 %v288, 64
    %v633 = vpop.permute.xlu0 %632
    %v636 = vsel %vm492, %v582, 0
    %638 = vmatprep.subr.bf16.mxu0 0
    %639 = vmatpush1.bf16.msra.mxu0 0
    %640 = vmatprep.subr.bf16.mxu0 0
    %641 = vmatpush1.bf16.msra.mxu0 0
    %642 = vmatprep.subr.bf16.mxu0 0
    %643 = vmatpush1.bf16.msra.mxu0 0
    %644 = vmatprep.subr.bf16.mxu0 0
    %645 = vmatpush1.bf16.msra.mxu0 0
    %646 = vmatprep.subr.bf16.mxu0 0
    %647 = vmatpush1.bf16.msra.mxu0 0
    %648 = vmatprep.subr.bf16.mxu0 0
    %649 = vmatpush1.bf16.msra.mxu0 0
    %650 = vmatprep.subr.bf16.mxu0 0
    %651 = vmatpush1.bf16.msra.mxu0 0
    %652 = vmatprep.subr.bf16.mxu0 0
    %653 = vmatpush1.bf16.msra.mxu0 %v633
    %654 = vmatprep.subr.bf16.mxu0 0
    %655 = vmatpush2.bf16.msra.mxu0 0
    %656 = vmatprep.subr.bf16.mxu0 0
    %657 = vmatpush2.bf16.msra.mxu0 0
    %658 = vmatprep.subr.bf16.mxu0 0
    %659 = vmatpush2.bf16.msra.mxu0 0
    %660 = vmatprep.subr.bf16.mxu0 0
    %661 = vmatpush2.bf16.msra.mxu0 0
    %662 = vmatprep.subr.bf16.mxu0 0
    %663 = vmatpush2.bf16.msra.mxu0 0
    %664 = vmatprep.subr.bf16.mxu0 0
    %665 = vmatpush2.bf16.msra.mxu0 0
    %666 = vmatprep.subr.bf16.mxu0 0
    %667 = vmatpush2.bf16.msra.mxu0 0
    %668 = vmatprep.subr.bf16.mxu0 0
    %669 = vmatpush2.bf16.msra.mxu0 0
    %670 = vmatprep.mubr.bf16.mxu0 0
    %671 = vmatmul.mubr.bf16.gmra.mxu0 %v636
    %v672 = vpop.f32.mrf.mxu0
    %v673 = vadd.f32 0.0, %v672
    %v674 = vpop.f32.mrf.mxu0
    %v675 = vpop.f32.mrf.mxu0
    %v676 = vadd.f32 0.0, %v675
    %v677 = vpop.f32.mrf.mxu0
    %678 = vdwg.mxu0
    %679 = vrot.lane.b32.xlu0 %v289, 64
    %v680 = vpop.permute.xlu0 %679
    %v683 = vsel %vm492, %v583, 0
    %685 = vmatprep.subr.bf16.mxu0 0
    %686 = vmatpush1.bf16.msra.mxu0 0
    %687 = vmatprep.subr.bf16.mxu0 0
    %688 = vmatpush1.bf16.msra.mxu0 0
    %689 = vmatprep.subr.bf16.mxu0 0
    %690 = vmatpush1.bf16.msra.mxu0 0
    %691 = vmatprep.subr.bf16.mxu0 0
    %692 = vmatpush1.bf16.msra.mxu0 0
    %693 = vmatprep.subr.bf16.mxu0 0
    %694 = vmatpush1.bf16.msra.mxu0 0
    %695 = vmatprep.subr.bf16.mxu0 0
    %696 = vmatpush1.bf16.msra.mxu0 0
    %697 = vmatprep.subr.bf16.mxu0 0
    %698 = vmatpush1.bf16.msra.mxu0 0
    %699 = vmatprep.subr.bf16.mxu0 0
    %700 = vmatpush1.bf16.msra.mxu0 %v680
    %701 = vmatprep.subr.bf16.mxu0 0
    %702 = vmatpush2.bf16.msra.mxu0 0
    %703 = vmatprep.subr.bf16.mxu0 0
    %704 = vmatpush2.bf16.msra.mxu0 0
    %705 = vmatprep.subr.bf16.mxu0 0
    %706 = vmatpush2.bf16.msra.mxu0 0
    %707 = vmatprep.subr.bf16.mxu0 0
    %708 = vmatpush2.bf16.msra.mxu0 0
    %709 = vmatprep.subr.bf16.mxu0 0
    %710 = vmatpush2.bf16.msra.mxu0 0
    %711 = vmatprep.subr.bf16.mxu0 0
    %712 = vmatpush2.bf16.msra.mxu0 0
    %713 = vmatprep.subr.bf16.mxu0 0
    %714 = vmatpush2.bf16.msra.mxu0 0
    %715 = vmatprep.subr.bf16.mxu0 0
    %716 = vmatpush2.bf16.msra.mxu0 0
    %717 = vmatprep.mubr.bf16.mxu0 0
    %718 = vmatmul.mubr.bf16.gmra.mxu0 %v683
    %v719 = vpop.f32.mrf.mxu0
    %v720 = vadd.f32 0.0, %v719
    %v721 = vpop.f32.mrf.mxu0
    %v722 = vpop.f32.mrf.mxu0
    %v723 = vadd.f32 0.0, %v722
    %v724 = vpop.f32.mrf.mxu0
    %725 = vdwg.mxu0
    %726 = vrot.lane.b32.xlu0 %v290, 64
    %v727 = vpop.permute.xlu0 %726
    %v730 = vsel %vm492, %v584, 0
    %732 = vmatprep.subr.bf16.mxu0 0
    %733 = vmatpush1.bf16.msra.mxu0 0
    %734 = vmatprep.subr.bf16.mxu0 0
    %735 = vmatpush1.bf16.msra.mxu0 0
    %736 = vmatprep.subr.bf16.mxu0 0
    %737 = vmatpush1.bf16.msra.mxu0 0
    %738 = vmatprep.subr.bf16.mxu0 0
    %739 = vmatpush1.bf16.msra.mxu0 0
    %740 = vmatprep.subr.bf16.mxu0 0
    %741 = vmatpush1.bf16.msra.mxu0 0
    %742 = vmatprep.subr.bf16.mxu0 0
    %743 = vmatpush1.bf16.msra.mxu0 0
    %744 = vmatprep.subr.bf16.mxu0 0
    %745 = vmatpush1.bf16.msra.mxu0 0
    %746 = vmatprep.subr.bf16.mxu0 0
    %747 = vmatpush1.bf16.msra.mxu0 %v727
    %748 = vmatprep.subr.bf16.mxu0 0
    %749 = vmatpush2.bf16.msra.mxu0 0
    %750 = vmatprep.subr.bf16.mxu0 0
    %751 = vmatpush2.bf16.msra.mxu0 0
    %752 = vmatprep.subr.bf16.mxu0 0
    %753 = vmatpush2.bf16.msra.mxu0 0
    %754 = vmatprep.subr.bf16.mxu0 0
    %755 = vmatpush2.bf16.msra.mxu0 0
    %756 = vmatprep.subr.bf16.mxu0 0
    %757 = vmatpush2.bf16.msra.mxu0 0
    %758 = vmatprep.subr.bf16.mxu0 0
    %759 = vmatpush2.bf16.msra.mxu0 0
    %760 = vmatprep.subr.bf16.mxu0 0
    %761 = vmatpush2.bf16.msra.mxu0 0
    %762 = vmatprep.subr.bf16.mxu0 0
    %763 = vmatpush2.bf16.msra.mxu0 0
    %764 = vmatprep.mubr.bf16.mxu0 0
    %765 = vmatmul.mubr.bf16.gmra.mxu0 %v730
    %v766 = vpop.f32.mrf.mxu0
    %v767 = vadd.f32 0.0, %v766
    %v768 = vpop.f32.mrf.mxu0
    %v769 = vpop.f32.mrf.mxu0
    %v770 = vadd.f32 0.0, %v769
    %v771 = vpop.f32.mrf.mxu0
    %772 = vdwg.mxu0
    %775 = vrot.lane.b32.xlu0 %v673, 8
    %v776 = vpop.permute.xlu0 %775
    %777 = vrot.lane.b32.xlu0 %v676, 8
    %v778 = vpop.permute.xlu0 %777
    %783 = vrot.lane.b32.xlu0 %v720, 16
    %v784 = vpop.permute.xlu0 %783
    %785 = vrot.lane.b32.xlu0 %v723, 16
    %v786 = vpop.permute.xlu0 %785
    %791 = vrot.lane.b32.xlu0 %v767, 24
    %v792 = vpop.permute.xlu0 %791
    %793 = vrot.lane.b32.xlu0 %v770, 24
    %v794 = vpop.permute.xlu0 %793
    %v797 = vsel %vm294, %v626, %v776
    %v798 = vsel %vm294, %v629, %v778
    %v799 = vsel %vm492, %v797, %v784
    %v800 = vsel %vm492, %v798, %v786
    %vm801 = vcmask 195584
    %v802 = vsel %vm801, %v799, %v792
    %v803 = vsel %vm801, %v800, %v794
    %v804 = vpack.c.bf16 %v803, %v802
    %v805 = vld [vmem:[#allocation8] sm:$0xf]
    %v806 = vld [vmem:[#allocation8 + $0x4] sm:$0xf]
    %v807 = vld [vmem:[#allocation8 + $0x8] sm:$0xf]
    %v808 = vld [vmem:[#allocation8 + $0xc] sm:$0xf]
    %v813 = vunpack.c.l.b16 %v805
    %v814 = vunpack.c.l.b16 %v806
    %v815 = vunpack.c.l.b16 %v807
    %v816 = vunpack.c.l.b16 %v808
    %v817 = vpack.c.b16 %v814, %v813
    %v818 = vpack.c.b16 %v816, %v815
    %v822 = vsel %vm182, %v804, 0
    %824 = vmatprep.subr.bf16.mxu0 0
    %825 = vmatpush1.bf16.msra.mxu0 0
    %826 = vmatprep.subr.bf16.mxu0 0
    %827 = vmatpush1.bf16.msra.mxu0 0
    %828 = vmatprep.subr.bf16.mxu0 0
    %829 = vmatpush1.bf16.msra.mxu0 0
    %830 = vmatprep.subr.bf16.mxu0 0
    %831 = vmatpush1.bf16.msra.mxu0 0
    %832 = vmatprep.subr.bf16.mxu0 0
    %833 = vmatpush1.bf16.msra.mxu0 0
    %834 = vmatprep.subr.bf16.mxu0 0
    %835 = vmatpush1.bf16.msra.mxu0 0
    %836 = vmatprep.subr.bf16.mxu0 0
    %837 = vmatpush1.bf16.msra.mxu0 %v818
    %838 = vmatprep.subr.bf16.mxu0 0
    %839 = vmatpush1.bf16.msra.mxu0 %v817
    %840 = vmatprep.subr.bf16.mxu0 0
    %841 = vmatpush2.bf16.msra.mxu0 0
    %842 = vmatprep.subr.bf16.mxu0 0
    %843 = vmatpush2.bf16.msra.mxu0 0
    %844 = vmatprep.subr.bf16.mxu0 0
    %845 = vmatpush2.bf16.msra.mxu0 0
    %846 = vmatprep.subr.bf16.mxu0 0
    %847 = vmatpush2.bf16.msra.mxu0 0
    %848 = vmatprep.subr.bf16.mxu0 0
    %849 = vmatpush2.bf16.msra.mxu0 0
    %850 = vmatprep.subr.bf16.mxu0 0
    %851 = vmatpush2.bf16.msra.mxu0 0
    %852 = vmatprep.subr.bf16.mxu0 0
    %853 = vmatpush2.bf16.msra.mxu0 0
    %854 = vmatprep.subr.bf16.mxu0 0
    %855 = vmatpush2.bf16.msra.mxu0 0
    %856 = vmatprep.mubr.bf16.mxu0 0
    %857 = vmatmul.mubr.bf16.gmra.mxu0 %v822
    %v858 = vpop.f32.mrf.mxu0
    %v859 = vadd.f32 0.0, %v858
    %v860 = vpop.f32.mrf.mxu0
    %v861 = vpop.f32.mrf.mxu0
    %v862 = vadd.f32 0.0, %v861
    %v863 = vpop.f32.mrf.mxu0
    %864 = vdwg.mxu0
    %v865 = vadd.f32 %v161, %v859
    %v866 = vadd.f32 %v162, %v862
    %v867 = vld [vmem:[%s7] sm:$0x1]
    %v868 = vmul.f32 %v865, %v865
    %v869 = vmul.f32 %v866, %v866
    %v870 = vsel %vm182, %v868, 0.0
    %871 = vadd.xlane.f32.xlu0 %v870
    %v872 = vpop.xlane.xlu0 %871
    %v873 = vsel %vm182, %v869, 0.0
    %874 = vadd.xlane.f32.xlu0 %v873
    %v875 = vpop.xlane.xlu0 %874
    %v876 = vmul.f32 %v872, %v189
    %v877 = vmul.f32 %v875, %v189
    %v878 = vadd.f32 %v876, 1e-06
    %v879 = vadd.f32 %v877, 1e-06
    %v880 = vrsqrt.pop %v878
    %v881 = vrsqrt.pop %v879
    %v882 = vmul.f32 %v865, %v880
    %v883 = vmul.f32 %v866, %v881
    %v885 = vlaneseq
    %v886 = vshrl.u32 %v885, 7
    %v887 = vsub.s32 0, %v886
    %v888 = vrot.slane %v867, %v887
    %v890 = vmul.f32 %v882, %v888
    %v891 = vmul.f32 %v883, %v888
    %v892 = vpack.c.bf16 %v891, %v890
    %v893 = vld [vmem:[#allocation10] sm:$0xf]
    %v894 = vld [vmem:[#allocation10 + $0x4] sm:$0xf]
    %v895 = vld [vmem:[#allocation10 + $0x8] sm:$0xf]
    %v896 = vld [vmem:[#allocation10 + $0xc] sm:$0xf]
    %v901 = vunpack.c.l.b16 %v893
    %v902 = vunpack.c.l.b16 %v894
    %v903 = vunpack.c.l.b16 %v895
    %v904 = vunpack.c.l.b16 %v896
    %v905 = vpack.c.b16 %v902, %v901
    %v906 = vpack.c.b16 %v904, %v903
    %v910 = vsel %vm182, %v892, 0
    %912 = vmatprep.subr.bf16.mxu0 0
    %913 = vmatpush1.bf16.msra.mxu0 0
    %914 = vmatprep.subr.bf16.mxu0 0
    %915 = vmatpush1.bf16.msra.mxu0 0
    %916 = vmatprep.subr.bf16.mxu0 0
    %917 = vmatpush1.bf16.msra.mxu0 0
    %918 = vmatprep.subr.bf16.mxu0 0
    %919 = vmatpush1.bf16.msra.mxu0 0
    %920 = vmatprep.subr.bf16.mxu0 0
    %921 = vmatpush1.bf16.msra.mxu0 0
    %922 = vmatprep.subr.bf16.mxu0 0
    %923 = vmatpush1.bf16.msra.mxu0 0
    %924 = vmatprep.subr.bf16.mxu0 0
    %925 = vmatpush1.bf16.msra.mxu0 %v906
    %926 = vmatprep.subr.bf16.mxu0 0
    %927 = vmatpush1.bf16.msra.mxu0 %v905
    %928 = vmatprep.subr.bf16.mxu0 0
    %929 = vmatpush2.bf16.msra.mxu0 0
    %930 = vmatprep.subr.bf16.mxu0 0
    %931 = vmatpush2.bf16.msra.mxu0 0
    %932 = vmatprep.subr.bf16.mxu0 0
    %933 = vmatpush2.bf16.msra.mxu0 0
    %934 = vmatprep.subr.bf16.mxu0 0
    %935 = vmatpush2.bf16.msra.mxu0 0
    %936 = vmatprep.subr.bf16.mxu0 0
    %937 = vmatpush2.bf16.msra.mxu0 0
    %938 = vmatprep.subr.bf16.mxu0 0
    %939 = vmatpush2.bf16.msra.mxu0 0
    %940 = vmatprep.subr.bf16.mxu0 0
    %941 = vmatpush2.bf16.msra.mxu0 0
    %942 = vmatprep.subr.bf16.mxu0 0
    %943 = vmatpush2.bf16.msra.mxu0 0
    %944 = vmatprep.mubr.bf16.mxu0 0
    %945 = vmatmul.mubr.bf16.gmra.mxu0 %v910
    %v946 = vpop.f32.mrf.mxu0
    %v947 = vadd.f32 0.0, %v946
    %v948 = vpop.f32.mrf.mxu0
    %v949 = vpop.f32.mrf.mxu0
    %v950 = vadd.f32 0.0, %v949
    %v951 = vpop.f32.mrf.mxu0
    %952 = vdwg.mxu0
    %v953 = vld [vmem:[#allocation11] sm:$0xf]
    %v954 = vld [vmem:[#allocation11 + $0x4] sm:$0xf]
    %v955 = vld [vmem:[#allocation11 + $0x8] sm:$0xf]
    %v956 = vld [vmem:[#allocation11 + $0xc] sm:$0xf]
    %v961 = vunpack.c.l.b16 %v953
    %v962 = vunpack.c.l.b16 %v954
    %v963 = vunpack.c.l.b16 %v955
    %v964 = vunpack.c.l.b16 %v956
    %v965 = vpack.c.b16 %v962, %v961
    %v966 = vpack.c.b16 %v964, %v963
    %v970 = vsel %vm182, %v167, 0
    %v973 = vsel %vm182, %v168, 0
    %975 = vmatprep.subr.bf16.mxu0 0
    %976 = vmatpush1.bf16.msra.mxu0 0
    %977 = vmatprep.subr.bf16.mxu0 0
    %978 = vmatpush1.bf16.msra.mxu0 0
    %979 = vmatprep.subr.bf16.mxu0 0
    %980 = vmatpush1.bf16.msra.mxu0 0
    %981 = vmatprep.subr.bf16.mxu0 0
    %982 = vmatpush1.bf16.msra.mxu0 0
    %983 = vmatprep.subr.bf16.mxu0 0
    %984 = vmatpush1.bf16.msra.mxu0 0
    %985 = vmatprep.subr.bf16.mxu0 0
    %986 = vmatpush1.bf16.msra.mxu0 0
    %987 = vmatprep.subr.bf16.mxu0 0
    %988 = vmatpush1.bf16.msra.mxu0 %v966
    %989 = vmatprep.subr.bf16.mxu0 0
    %990 = vmatpush1.bf16.msra.mxu0 %v965
    %991 = vmatprep.subr.bf16.mxu0 0
    %992 = vmatpush2.bf16.msra.mxu0 0
    %993 = vmatprep.subr.bf16.mxu0 0
    %994 = vmatpush2.bf16.msra.mxu0 0
    %995 = vmatprep.subr.bf16.mxu0 0
    %996 = vmatpush2.bf16.msra.mxu0 0
    %997 = vmatprep.subr.bf16.mxu0 0
    %998 = vmatpush2.bf16.msra.mxu0 0
    %999 = vmatprep.subr.bf16.mxu0 0
    %1000 = vmatpush2.bf16.msra.mxu0 0
    %1001 = vmatprep.subr.bf16.mxu0 0
    %1002 = vmatpush2.bf16.msra.mxu0 0
    %1003 = vmatprep.subr.bf16.mxu0 0
    %1004 = vmatpush2.bf16.msra.mxu0 0
    %1005 = vmatprep.subr.bf16.mxu0 0
    %1006 = vmatpush2.bf16.msra.mxu0 0
    %1007 = vmatprep.mubr.bf16.mxu0 0
    %1008 = vmatmul.mubr.bf16.gmra.mxu0 %v970
    %v1009 = vpop.f32.mrf.mxu0
    %v1010 = vadd.f32 0.0, %v1009
    %v1011 = vpop.f32.mrf.mxu0
    %v1012 = vpop.f32.mrf.mxu0
    %v1013 = vadd.f32 0.0, %v1012
    %v1014 = vpop.f32.mrf.mxu0
    %1015 = vmatprep.mubr.bf16.mxu0 0
    %1016 = vmatmul.mubr.bf16.gmra.mxu0 %v973
    %v1017 = vpop.f32.mrf.mxu0
    %v1018 = vadd.f32 0.0, %v1017
    %v1019 = vpop.f32.mrf.mxu0
    %v1020 = vpop.f32.mrf.mxu0
    %v1021 = vadd.f32 0.0, %v1020
    %v1022 = vpop.f32.mrf.mxu0
    %1023 = vdwg.mxu0
    %1026 = vrot.lane.b32.xlu0 %v947, 120
    %v1027 = vpop.permute.xlu0 %1026
    %1028 = vrot.lane.b32.xlu0 %v950, 120
    %v1029 = vpop.permute.xlu0 %1028
    %1032 = vrot.lane.b32.xlu0 %v947, 112
    %v1033 = vpop.permute.xlu0 %1032
    %1034 = vrot.lane.b32.xlu0 %v950, 112
    %v1035 = vpop.permute.xlu0 %1034
    %1038 = vrot.lane.b32.xlu0 %v947, 104
    %v1039 = vpop.permute.xlu0 %1038
    %1040 = vrot.lane.b32.xlu0 %v950, 104
    %v1041 = vpop.permute.xlu0 %1040
    %1048 = vrot.lane.b32.xlu0 %v1010, 120
    %v1049 = vpop.permute.xlu0 %1048
    %1050 = vrot.lane.b32.xlu0 %v1013, 120
    %v1051 = vpop.permute.xlu0 %1050
    %1052 = vrot.lane.b32.xlu0 %v1018, 120
    %v1053 = vpop.permute.xlu0 %1052
    %1054 = vrot.lane.b32.xlu0 %v1021, 120
    %v1055 = vpop.permute.xlu0 %1054
    %1060 = vrot.lane.b32.xlu0 %v1010, 112
    %v1061 = vpop.permute.xlu0 %1060
    %1062 = vrot.lane.b32.xlu0 %v1013, 112
    %v1063 = vpop.permute.xlu0 %1062
    %1064 = vrot.lane.b32.xlu0 %v1018, 112
    %v1065 = vpop.permute.xlu0 %1064
    %1066 = vrot.lane.b32.xlu0 %v1021, 112
    %v1067 = vpop.permute.xlu0 %1066
    %1072 = vrot.lane.b32.xlu0 %v1010, 104
    %v1073 = vpop.permute.xlu0 %1072
    %1074 = vrot.lane.b32.xlu0 %v1013, 104
    %v1075 = vpop.permute.xlu0 %1074
    %1076 = vrot.lane.b32.xlu0 %v1018, 104
    %v1077 = vpop.permute.xlu0 %1076
    %1078 = vrot.lane.b32.xlu0 %v1021, 104
    %v1079 = vpop.permute.xlu0 %1078
    %v1084 = vpack.c.bf16 %v950, %v947
    %v1085 = vpack.c.bf16 %v1029, %v1027
    %v1086 = vpack.c.bf16 %v1035, %v1033
    %v1087 = vpack.c.bf16 %v1041, %v1039
    %v1088 = vpack.c.bf16 %v1013, %v1010
    %v1089 = vpack.c.bf16 %v1021, %v1018
    %v1090 = vpack.c.bf16 %v1051, %v1049
    %v1091 = vpack.c.bf16 %v1055, %v1053
    %v1092 = vpack.c.bf16 %v1063, %v1061
    %v1093 = vpack.c.bf16 %v1067, %v1065
    %v1094 = vpack.c.bf16 %v1075, %v1073
    %v1095 = vpack.c.bf16 %v1079, %v1077
    %v1097 = vsel %vm294, %v1084, 0
    %v1100 = vsel %vm294, %v1088, 0
    %v1103 = vsel %vm294, %v1089, 0
    %1105 = vmatprep.subr.bf16.mxu0 0
    %1106 = vmatpush1.bf16.xpose.msra.mxu0 0
    %1107 = vmatprep.subr.bf16.mxu0 0
    %1108 = vmatpush1.bf16.xpose.msra.mxu0 0
    %1109 = vmatprep.subr.bf16.mxu0 0
    %1110 = vmatpush1.bf16.xpose.msra.mxu0 0
    %1111 = vmatprep.subr.bf16.mxu0 0
    %1112 = vmatpush1.bf16.xpose.msra.mxu0 0
    %1113 = vmatprep.subr.bf16.mxu0 0
    %1114 = vmatpush1.bf16.xpose.msra.mxu0 0
    %1115 = vmatprep.subr.bf16.mxu0 0
    %1116 = vmatpush1.bf16.xpose.msra.mxu0 0
    %1117 = vmatprep.subr.bf16.mxu0 0
    %1118 = vmatpush1.bf16.xpose.msra.mxu0 %v1103
    %1119 = vmatprep.subr.bf16.mxu0 0
    %1120 = vmatpush1.bf16.xpose.msra.mxu0 %v1100
    %1121 = vmatprep.subr.bf16.mxu0 0
    %1122 = vmatpush2.bf16.xpose.msra.mxu0 0
    %1123 = vmatprep.subr.bf16.mxu0 0
    %1124 = vmatpush2.bf16.xpose.msra.mxu0 0
    %1125 = vmatprep.subr.bf16.mxu0 0
    %1126 = vmatpush2.bf16.xpose.msra.mxu0 0
    %1127 = vmatprep.subr.bf16.mxu0 0
    %1128 = vmatpush2.bf16.xpose.msra.mxu0 0
    %1129 = vmatprep.subr.bf16.mxu0 0
    %1130 = vmatpush2.bf16.xpose.msra.mxu0 0
    %1131 = vmatprep.subr.bf16.mxu0 0
    %1132 = vmatpush2.bf16.xpose.msra.mxu0 0
    %1133 = vmatprep.subr.bf16.mxu0 0
    %1134 = vmatpush2.bf16.xpose.msra.mxu0 0
    %1135 = vmatprep.subr.bf16.mxu0 0
    %1136 = vmatpush2.bf16.xpose.msra.mxu0 0
    %1137 = vmatprep.mubr.bf16.mxu0 0
    %1138 = vmatmul.mubr.bf16.gmra.mxu0 %v1097
    %v1139 = vpop.f32.mrf.mxu0
    %v1140 = vadd.f32 %v177, %v1139
    %v1141 = vpop.f32.mrf.mxu0
    %v1142 = vpop.f32.mrf.mxu0
    %v1143 = vadd.f32 %v178, %v1142
    %v1144 = vpop.f32.mrf.mxu0
    %1145 = vdwg.mxu0
    %v1147 = vsel %vm294, %v1085, 0
    %v1150 = vsel %vm294, %v1090, 0
    %v1153 = vsel %vm294, %v1091, 0
    %1155 = vmatprep.subr.bf16.mxu0 0
    %1156 = vmatpush1.bf16.xpose.msra.mxu0 0
    %1157 = vmatprep.subr.bf16.mxu0 0
    %1158 = vmatpush1.bf16.xpose.msra.mxu0 0
    %1159 = vmatprep.subr.bf16.mxu0 0
    %1160 = vmatpush1.bf16.xpose.msra.mxu0 0
    %1161 = vmatprep.subr.bf16.mxu0 0
    %1162 = vmatpush1.bf16.xpose.msra.mxu0 0
    %1163 = vmatprep.subr.bf16.mxu0 0
    %1164 = vmatpush1.bf16.xpose.msra.mxu0 0
    %1165 = vmatprep.subr.bf16.mxu0 0
    %1166 = vmatpush1.bf16.xpose.msra.mxu0 0
    %1167 = vmatprep.subr.bf16.mxu0 0
    %1168 = vmatpush1.bf16.xpose.msra.mxu0 %v1153
    %1169 = vmatprep.subr.bf16.mxu0 0
    %1170 = vmatpush1.bf16.xpose.msra.mxu0 %v1150
    %1171 = vmatprep.subr.bf16.mxu0 0
    %1172 = vmatpush2.bf16.xpose.msra.mxu0 0
    %1173 = vmatprep.subr.bf16.mxu0 0
    %1174 = vmatpush2.bf16.xpose.msra.mxu0 0
    %1175 = vmatprep.subr.bf16.mxu0 0
    %1176 = vmatpush2.bf16.xpose.msra.mxu0 0
    %1177 = vmatprep.subr.bf16.mxu0 0
    %1178 = vmatpush2.bf16.xpose.msra.mxu0 0
    %1179 = vmatprep.subr.bf16.mxu0 0
    %1180 = vmatpush2.bf16.xpose.msra.mxu0 0
    %1181 = vmatprep.subr.bf16.mxu0 0
    %1182 = vmatpush2.bf16.xpose.msra.mxu0 0
    %1183 = vmatprep.subr.bf16.mxu0 0
    %1184 = vmatpush2.bf16.xpose.msra.mxu0 0
    %1185 = vmatprep.subr.bf16.mxu0 0
    %1186 = vmatpush2.bf16.xpose.msra.mxu0 0
    %1187 = vmatprep.mubr.bf16.mxu0 0
    %1188 = vmatmul.mubr.bf16.gmra.mxu0 %v1147
    %v1189 = vpop.f32.mrf.mxu0
    %v1190 = vadd.f32 %v177, %v1189
    %v1191 = vpop.f32.mrf.mxu0
    %v1192 = vpop.f32.mrf.mxu0
    %v1193 = vadd.f32 %v178, %v1192
    %v1194 = vpop.f32.mrf.mxu0
    %1195 = vdwg.mxu0
    %v1197 = vsel %vm294, %v1086, 0
    %v1200 = vsel %vm294, %v1092, 0
    %v1203 = vsel %vm294, %v1093, 0
    %1205 = vmatprep.subr.bf16.mxu0 0
    %1206 = vmatpush1.bf16.xpose.msra.mxu0 0
    %1207 = vmatprep.subr.bf16.mxu0 0
    %1208 = vmatpush1.bf16.xpose.msra.mxu0 0
    %1209 = vmatprep.subr.bf16.mxu0 0
    %1210 = vmatpush1.bf16.xpose.msra.mxu0 0
    %1211 = vmatprep.subr.bf16.mxu0 0
    %1212 = vmatpush1.bf16.xpose.msra.mxu0 0
    %1213 = vmatprep.subr.bf16.mxu0 0
    %1214 = vmatpush1.bf16.xpose.msra.mxu0 0
    %1215 = vmatprep.subr.bf16.mxu0 0
    %1216 = vmatpush1.bf16.xpose.msra.mxu0 0
    %1217 = vmatprep.subr.bf16.mxu0 0
    %1218 = vmatpush1.bf16.xpose.msra.mxu0 %v1203
    %1219 = vmatprep.subr.bf16.mxu0 0
    %1220 = vmatpush1.bf16.xpose.msra.mxu0 %v1200
    %1221 = vmatprep.subr.bf16.mxu0 0
    %1222 = vmatpush2.bf16.xpose.msra.mxu0 0
    %1223 = vmatprep.subr.bf16.mxu0 0
    %1224 = vmatpush2.bf16.xpose.msra.mxu0 0
    %1225 = vmatprep.subr.bf16.mxu0 0
    %1226 = vmatpush2.bf16.xpose.msra.mxu0 0
    %1227 = vmatprep.subr.bf16.mxu0 0
    %1228 = vmatpush2.bf16.xpose.msra.mxu0 0
    %1229 = vmatprep.subr.bf16.mxu0 0
    %1230 = vmatpush2.bf16.xpose.msra.mxu0 0
    %1231 = vmatprep.subr.bf16.mxu0 0
    %1232 = vmatpush2.bf16.xpose.msra.mxu0 0
    %1233 = vmatprep.subr.bf16.mxu0 0
    %1234 = vmatpush2.bf16.xpose.msra.mxu0 0
    %1235 = vmatprep.subr.bf16.mxu0 0
    %1236 = vmatpush2.bf16.xpose.msra.mxu0 0
    %1237 = vmatprep.mubr.bf16.mxu0 0
    %1238 = vmatmul.mubr.bf16.gmra.mxu0 %v1197
    %v1239 = vpop.f32.mrf.mxu0
    %v1240 = vadd.f32 %v177, %v1239
    %v1241 = vpop.f32.mrf.mxu0
    %v1242 = vpop.f32.mrf.mxu0
    %v1243 = vadd.f32 %v178, %v1242
    %v1244 = vpop.f32.mrf.mxu0
    %1245 = vdwg.mxu0
    %v1247 = vsel %vm294, %v1087, 0
    %v1250 = vsel %vm294, %v1094, 0
    %v1253 = vsel %vm294, %v1095, 0
    %1255 = vmatprep.subr.bf16.mxu0 0
    %1256 = vmatpush1.bf16.xpose.msra.mxu0 0
    %1257 = vmatprep.subr.bf16.mxu0 0
    %1258 = vmatpush1.bf16.xpose.msra.mxu0 0
    %1259 = vmatprep.subr.bf16.mxu0 0
    %1260 = vmatpush1.bf16.xpose.msra.mxu0 0
    %1261 = vmatprep.subr.bf16.mxu0 0
    %1262 = vmatpush1.bf16.xpose.msra.mxu0 0
    %1263 = vmatprep.subr.bf16.mxu0 0
    %1264 = vmatpush1.bf16.xpose.msra.mxu0 0
    %1265 = vmatprep.subr.bf16.mxu0 0
    %1266 = vmatpush1.bf16.xpose.msra.mxu0 0
    %1267 = vmatprep.subr.bf16.mxu0 0
    %1268 = vmatpush1.bf16.xpose.msra.mxu0 %v1253
    %1269 = vmatprep.subr.bf16.mxu0 0
    %1270 = vmatpush1.bf16.xpose.msra.mxu0 %v1250
    %1271 = vmatprep.subr.bf16.mxu0 0
    %1272 = vmatpush2.bf16.xpose.msra.mxu0 0
    %1273 = vmatprep.subr.bf16.mxu0 0
    %1274 = vmatpush2.bf16.xpose.msra.mxu0 0
    %1275 = vmatprep.subr.bf16.mxu0 0
    %1276 = vmatpush2.bf16.xpose.msra.mxu0 0
    %1277 = vmatprep.subr.bf16.mxu0 0
    %1278 = vmatpush2.bf16.xpose.msra.mxu0 0
    %1279 = vmatprep.subr.bf16.mxu0 0
    %1280 = vmatpush2.bf16.xpose.msra.mxu0 0
    %1281 = vmatprep.subr.bf16.mxu0 0
    %1282 = vmatpush2.bf16.xpose.msra.mxu0 0
    %1283 = vmatprep.subr.bf16.mxu0 0
    %1284 = vmatpush2.bf16.xpose.msra.mxu0 0
    %1285 = vmatprep.subr.bf16.mxu0 0
    %1286 = vmatpush2.bf16.xpose.msra.mxu0 0
    %1287 = vmatprep.mubr.bf16.mxu0 0
    %1288 = vmatmul.mubr.bf16.gmra.mxu0 %v1247
    %v1289 = vpop.f32.mrf.mxu0
    %v1290 = vadd.f32 %v177, %v1289
    %v1291 = vpop.f32.mrf.mxu0
    %v1292 = vpop.f32.mrf.mxu0
    %v1293 = vadd.f32 %v178, %v1292
    %v1294 = vpop.f32.mrf.mxu0
    %1295 = vdwg.mxu0
    %v1296 = vsel %vm182, %v1140, -inf
    %1297 = vmax.xlane.f32.xlu0 %v1296
    %v1298 = vpop.xlane.xlu0 %1297
    %v1299 = vsel %vm182, %v1143, -inf
    %1300 = vmax.xlane.f32.xlu0 %v1299
    %v1301 = vpop.xlane.xlu0 %1300
    %v1302 = vsel %vm182, %v1190, -inf
    %1303 = vmax.xlane.f32.xlu0 %v1302
    %v1304 = vpop.xlane.xlu0 %1303
    %v1305 = vsel %vm182, %v1193, -inf
    %1306 = vmax.xlane.f32.xlu0 %v1305
    %v1307 = vpop.xlane.xlu0 %1306
    %v1308 = vsel %vm182, %v1240, -inf
    %1309 = vmax.xlane.f32.xlu0 %v1308
    %v1310 = vpop.xlane.xlu0 %1309
    %v1311 = vsel %vm182, %v1243, -inf
    %1312 = vmax.xlane.f32.xlu0 %v1311
    %v1313 = vpop.xlane.xlu0 %1312
    %v1314 = vsel %vm182, %v1290, -inf
    %1315 = vmax.xlane.f32.xlu0 %v1314
    %v1316 = vpop.xlane.xlu0 %1315
    %v1317 = vsel %vm182, %v1293, -inf
    %1318 = vmax.xlane.f32.xlu0 %v1317
    %v1319 = vpop.xlane.xlu0 %1318
    %v1320 = vsub.f32 %v1140, %v1298
    %v1321 = vsub.f32 %v1143, %v1301
    %v1322 = vsub.f32 %v1190, %v1304
    %v1323 = vsub.f32 %v1193, %v1307
    %v1324 = vsub.f32 %v1240, %v1310
    %v1325 = vsub.f32 %v1243, %v1313
    %v1326 = vsub.f32 %v1290, %v1316
    %v1327 = vsub.f32 %v1293, %v1319
    %v1328 = vmul.f32 %v1320, 1.442695
    %v1329 = vpow.pop %v1328
    %v1330 = vmul.f32 %v1321, 1.442695
    %v1331 = vpow.pop %v1330
    %v1332 = vmul.f32 %v1322, 1.442695
    %v1333 = vpow.pop %v1332
    %v1334 = vmul.f32 %v1323, 1.442695
    %v1335 = vpow.pop %v1334
    %v1336 = vmul.f32 %v1324, 1.442695
    %v1337 = vpow.pop %v1336
    %v1338 = vmul.f32 %v1325, 1.442695
    %v1339 = vpow.pop %v1338
    %v1340 = vmul.f32 %v1326, 1.442695
    %v1341 = vpow.pop %v1340
    %v1342 = vmul.f32 %v1327, 1.442695
    %v1343 = vpow.pop %v1342
    %v1344 = vsel %vm182, %v1329, 0.0
    %1345 = vadd.xlane.f32.xlu0 %v1344
    %v1346 = vpop.xlane.xlu0 %1345
    %v1347 = vsel %vm182, %v1331, 0.0
    %1348 = vadd.xlane.f32.xlu0 %v1347
    %v1349 = vpop.xlane.xlu0 %1348
    %v1350 = vsel %vm182, %v1333, 0.0
    %1351 = vadd.xlane.f32.xlu0 %v1350
    %v1352 = vpop.xlane.xlu0 %1351
    %v1353 = vsel %vm182, %v1335, 0.0
    %1354 = vadd.xlane.f32.xlu0 %v1353
    %v1355 = vpop.xlane.xlu0 %1354
    %v1356 = vsel %vm182, %v1337, 0.0
    %1357 = vadd.xlane.f32.xlu0 %v1356
    %v1358 = vpop.xlane.xlu0 %1357
    %v1359 = vsel %vm182, %v1339, 0.0
    %1360 = vadd.xlane.f32.xlu0 %v1359
    %v1361 = vpop.xlane.xlu0 %1360
    %v1362 = vsel %vm182, %v1341, 0.0
    %1363 = vadd.xlane.f32.xlu0 %v1362
    %v1364 = vpop.xlane.xlu0 %1363
    %v1365 = vsel %vm182, %v1343, 0.0
    %1366 = vadd.xlane.f32.xlu0 %v1365
    %v1367 = vpop.xlane.xlu0 %1366
    %v1368 = vrcp.pop %v1346
    %v1369 = vrcp.pop %v1349
    %v1370 = vrcp.pop %v1352
    %v1371 = vrcp.pop %v1355
    %v1372 = vrcp.pop %v1358
    %v1373 = vrcp.pop %v1361
    %v1374 = vrcp.pop %v1364
    %v1375 = vrcp.pop %v1367
    %v1376 = vmul.f32 %v1329, %v1368
    %v1377 = vmul.f32 %v1331, %v1369
    %v1378 = vmul.f32 %v1333, %v1370
    %v1379 = vmul.f32 %v1335, %v1371
    %v1380 = vmul.f32 %v1337, %v1372
    %v1381 = vmul.f32 %v1339, %v1373
    %v1382 = vmul.f32 %v1341, %v1374
    %v1383 = vmul.f32 %v1343, %v1375
    %v1384 = vpack.c.bf16 %v1377, %v1376
    %v1385 = vpack.c.bf16 %v1379, %v1378
    %v1386 = vpack.c.bf16 %v1381, %v1380
    %v1387 = vpack.c.bf16 %v1383, %v1382
    %1390 = vrot.lane.b32.xlu0 %v1088, 96
    %v1391 = vpop.permute.xlu0 %1390
    %1392 = vrot.lane.b32.xlu0 %v1089, 96
    %v1393 = vpop.permute.xlu0 %1392
    %v1397 = vsel %vm182, %v1384, 0
    %1399 = vmatprep.subr.bf16.mxu0 0
    %1400 = vmatpush1.bf16.msra.mxu0 0
    %1401 = vmatprep.subr.bf16.mxu0 0
    %1402 = vmatpush1.bf16.msra.mxu0 0
    %1403 = vmatprep.subr.bf16.mxu0 0
    %1404 = vmatpush1.bf16.msra.mxu0 0
    %1405 = vmatprep.subr.bf16.mxu0 0
    %1406 = vmatpush1.bf16.msra.mxu0 0
    %1407 = vmatprep.subr.bf16.mxu0 0
    %1408 = vmatpush1.bf16.msra.mxu0 0
    %1409 = vmatprep.subr.bf16.mxu0 0
    %1410 = vmatpush1.bf16.msra.mxu0 0
    %1411 = vmatprep.subr.bf16.mxu0 0
    %1412 = vmatpush1.bf16.msra.mxu0 %v1393
    %1413 = vmatprep.subr.bf16.mxu0 0
    %1414 = vmatpush1.bf16.msra.mxu0 %v1391
    %1415 = vmatprep.subr.bf16.mxu0 0
    %1416 = vmatpush2.bf16.msra.mxu0 0
    %1417 = vmatprep.subr.bf16.mxu0 0
    %1418 = vmatpush2.bf16.msra.mxu0 0
    %1419 = vmatprep.subr.bf16.mxu0 0
    %1420 = vmatpush2.bf16.msra.mxu0 0
    %1421 = vmatprep.subr.bf16.mxu0 0
    %1422 = vmatpush2.bf16.msra.mxu0 0
    %1423 = vmatprep.subr.bf16.mxu0 0
    %1424 = vmatpush2.bf16.msra.mxu0 0
    %1425 = vmatprep.subr.bf16.mxu0 0
    %1426 = vmatpush2.bf16.msra.mxu0 0
    %1427 = vmatprep.subr.bf16.mxu0 0
    %1428 = vmatpush2.bf16.msra.mxu0 0
    %1429 = vmatprep.subr.bf16.mxu0 0
    %1430 = vmatpush2.bf16.msra.mxu0 0
    %1431 = vmatprep.mubr.bf16.mxu0 0
    %1432 = vmatmul.mubr.bf16.gmra.mxu0 %v1397
    %v1433 = vpop.f32.mrf.mxu0
    %v1434 = vadd.f32 0.0, %v1433
    %v1435 = vpop.f32.mrf.mxu0
    %v1436 = vpop.f32.mrf.mxu0
    %v1437 = vadd.f32 0.0, %v1436
    %v1438 = vpop.f32.mrf.mxu0
    %1439 = vdwg.mxu0
    %1442 = vrot.lane.b32.xlu0 %v1090, 96
    %v1443 = vpop.permute.xlu0 %1442
    %1444 = vrot.lane.b32.xlu0 %v1091, 96
    %v1445 = vpop.permute.xlu0 %1444
    %v1449 = vsel %vm182, %v1385, 0
    %1451 = vmatprep.subr.bf16.mxu0 0
    %1452 = vmatpush1.bf16.msra.mxu0 0
    %1453 = vmatprep.subr.bf16.mxu0 0
    %1454 = vmatpush1.bf16.msra.mxu0 0
    %1455 = vmatprep.subr.bf16.mxu0 0
    %1456 = vmatpush1.bf16.msra.mxu0 0
    %1457 = vmatprep.subr.bf16.mxu0 0
    %1458 = vmatpush1.bf16.msra.mxu0 0
    %1459 = vmatprep.subr.bf16.mxu0 0
    %1460 = vmatpush1.bf16.msra.mxu0 0
    %1461 = vmatprep.subr.bf16.mxu0 0
    %1462 = vmatpush1.bf16.msra.mxu0 0
    %1463 = vmatprep.subr.bf16.mxu0 0
    %1464 = vmatpush1.bf16.msra.mxu0 %v1445
    %1465 = vmatprep.subr.bf16.mxu0 0
    %1466 = vmatpush1.bf16.msra.mxu0 %v1443
    %1467 = vmatprep.subr.bf16.mxu0 0
    %1468 = vmatpush2.bf16.msra.mxu0 0
    %1469 = vmatprep.subr.bf16.mxu0 0
    %1470 = vmatpush2.bf16.msra.mxu0 0
    %1471 = vmatprep.subr.bf16.mxu0 0
    %1472 = vmatpush2.bf16.msra.mxu0 0
    %1473 = vmatprep.subr.bf16.mxu0 0
    %1474 = vmatpush2.bf16.msra.mxu0 0
    %1475 = vmatprep.subr.bf16.mxu0 0
    %1476 = vmatpush2.bf16.msra.mxu0 0
    %1477 = vmatprep.subr.bf16.mxu0 0
    %1478 = vmatpush2.bf16.msra.mxu0 0
    %1479 = vmatprep.subr.bf16.mxu0 0
    %1480 = vmatpush2.bf16.msra.mxu0 0
    %1481 = vmatprep.subr.bf16.mxu0 0
    %1482 = vmatpush2.bf16.msra.mxu0 0
    %1483 = vmatprep.mubr.bf16.mxu0 0
    %1484 = vmatmul.mubr.bf16.gmra.mxu0 %v1449
    %v1485 = vpop.f32.mrf.mxu0
    %v1486 = vadd.f32 0.0, %v1485
    %v1487 = vpop.f32.mrf.mxu0
    %v1488 = vpop.f32.mrf.mxu0
    %v1489 = vadd.f32 0.0, %v1488
    %v1490 = vpop.f32.mrf.mxu0
    %1491 = vdwg.mxu0
    %1494 = vrot.lane.b32.xlu0 %v1092, 96
    %v1495 = vpop.permute.xlu0 %1494
    %1496 = vrot.lane.b32.xlu0 %v1093, 96
    %v1497 = vpop.permute.xlu0 %1496
    %v1501 = vsel %vm182, %v1386, 0
    %1503 = vmatprep.subr.bf16.mxu0 0
    %1504 = vmatpush1.bf16.msra.mxu0 0
    %1505 = vmatprep.subr.bf16.mxu0 0
    %1506 = vmatpush1.bf16.msra.mxu0 0
    %1507 = vmatprep.subr.bf16.mxu0 0
    %1508 = vmatpush1.bf16.msra.mxu0 0
    %1509 = vmatprep.subr.bf16.mxu0 0
    %1510 = vmatpush1.bf16.msra.mxu0 0
    %1511 = vmatprep.subr.bf16.mxu0 0
    %1512 = vmatpush1.bf16.msra.mxu0 0
    %1513 = vmatprep.subr.bf16.mxu0 0
    %1514 = vmatpush1.bf16.msra.mxu0 0
    %1515 = vmatprep.subr.bf16.mxu0 0
    %1516 = vmatpush1.bf16.msra.mxu0 %v1497
    %1517 = vmatprep.subr.bf16.mxu0 0
    %1518 = vmatpush1.bf16.msra.mxu0 %v1495
    %1519 = vmatprep.subr.bf16.mxu0 0
    %1520 = vmatpush2.bf16.msra.mxu0 0
    %1521 = vmatprep.subr.bf16.mxu0 0
    %1522 = vmatpush2.bf16.msra.mxu0 0
    %1523 = vmatprep.subr.bf16.mxu0 0
    %1524 = vmatpush2.bf16.msra.mxu0 0
    %1525 = vmatprep.subr.bf16.mxu0 0
    %1526 = vmatpush2.bf16.msra.mxu0 0
    %1527 = vmatprep.subr.bf16.mxu0 0
    %1528 = vmatpush2.bf16.msra.mxu0 0
    %1529 = vmatprep.subr.bf16.mxu0 0
    %1530 = vmatpush2.bf16.msra.mxu0 0
    %1531 = vmatprep.subr.bf16.mxu0 0
    %1532 = vmatpush2.bf16.msra.mxu0 0
    %1533 = vmatprep.subr.bf16.mxu0 0
    %1534 = vmatpush2.bf16.msra.mxu0 0
    %1535 = vmatprep.mubr.bf16.mxu0 0
    %1536 = vmatmul.mubr.bf16.gmra.mxu0 %v1501
    %v1537 = vpop.f32.mrf.mxu0
    %v1538 = vadd.f32 0.0, %v1537
    %v1539 = vpop.f32.mrf.mxu0
    %v1540 = vpop.f32.mrf.mxu0
    %v1541 = vadd.f32 0.0, %v1540
    %v1542 = vpop.f32.mrf.mxu0
    %1543 = vdwg.mxu0
    %1546 = vrot.lane.b32.xlu0 %v1094, 96
    %v1547 = vpop.permute.xlu0 %1546
    %1548 = vrot.lane.b32.xlu0 %v1095, 96
    %v1549 = vpop.permute.xlu0 %1548
    %v1553 = vsel %vm182, %v1387, 0
    %1555 = vmatprep.subr.bf16.mxu0 0
    %1556 = vmatpush1.bf16.msra.mxu0 0
    %1557 = vmatprep.subr.bf16.mxu0 0
    %1558 = vmatpush1.bf16.msra.mxu0 0
    %1559 = vmatprep.subr.bf16.mxu0 0
    %1560 = vmatpush1.bf16.msra.mxu0 0
    %1561 = vmatprep.subr.bf16.mxu0 0
    %1562 = vmatpush1.bf16.msra.mxu0 0
    %1563 = vmatprep.subr.bf16.mxu0 0
    %1564 = vmatpush1.bf16.msra.mxu0 0
    %1565 = vmatprep.subr.bf16.mxu0 0
    %1566 = vmatpush1.bf16.msra.mxu0 0
    %1567 = vmatprep.subr.bf16.mxu0 0
    %1568 = vmatpush1.bf16.msra.mxu0 %v1549
    %1569 = vmatprep.subr.bf16.mxu0 0
    %1570 = vmatpush1.bf16.msra.mxu0 %v1547
    %1571 = vmatprep.subr.bf16.mxu0 0
    %1572 = vmatpush2.bf16.msra.mxu0 0
    %1573 = vmatprep.subr.bf16.mxu0 0
    %1574 = vmatpush2.bf16.msra.mxu0 0
    %1575 = vmatprep.subr.bf16.mxu0 0
    %1576 = vmatpush2.bf16.msra.mxu0 0
    %1577 = vmatprep.subr.bf16.mxu0 0
    %1578 = vmatpush2.bf16.msra.mxu0 0
    %1579 = vmatprep.subr.bf16.mxu0 0
    %1580 = vmatpush2.bf16.msra.mxu0 0
    %1581 = vmatprep.subr.bf16.mxu0 0
    %1582 = vmatpush2.bf16.msra.mxu0 0
    %1583 = vmatprep.subr.bf16.mxu0 0
    %1584 = vmatpush2.bf16.msra.mxu0 0
    %1585 = vmatprep.subr.bf16.mxu0 0
    %1586 = vmatpush2.bf16.msra.mxu0 0
    %1587 = vmatprep.mubr.bf16.mxu0 0
    %1588 = vmatmul.mubr.bf16.gmra.mxu0 %v1553
    %v1589 = vpop.f32.mrf.mxu0
    %v1590 = vadd.f32 0.0, %v1589
    %v1591 = vpop.f32.mrf.mxu0
    %v1592 = vpop.f32.mrf.mxu0
    %v1593 = vadd.f32 0.0, %v1592
    %v1594 = vpop.f32.mrf.mxu0
    %1595 = vdwg.mxu0
    %1598 = vrot.lane.b32.xlu0 %v1486, 8
    %v1599 = vpop.permute.xlu0 %1598
    %1600 = vrot.lane.b32.xlu0 %v1489, 8
    %v1601 = vpop.permute.xlu0 %1600
    %1606 = vrot.lane.b32.xlu0 %v1538, 16
    %v1607 = vpop.permute.xlu0 %1606
    %1608 = vrot.lane.b32.xlu0 %v1541, 16
    %v1609 = vpop.permute.xlu0 %1608
    %1614 = vrot.lane.b32.xlu0 %v1590, 24
    %v1615 = vpop.permute.xlu0 %1614
    %1616 = vrot.lane.b32.xlu0 %v1593, 24
    %v1617 = vpop.permute.xlu0 %1616
    %v1620 = vsel %vm294, %v1434, %v1599
    %v1621 = vsel %vm294, %v1437, %v1601
    %v1622 = vsel %vm492, %v1620, %v1607
    %v1623 = vsel %vm492, %v1621, %v1609
    %v1624 = vsel %vm801, %v1622, %v1615
    %v1625 = vsel %vm801, %v1623, %v1617
    %v1626 = vpack.c.bf16 %v1625, %v1624
    %v1627 = vld [vmem:[#allocation13] sm:$0xf]
    %v1628 = vld [vmem:[#allocation13 + $0x4] sm:$0xf]
    %v1629 = vld [vmem:[#allocation13 + $0x8] sm:$0xf]
    %v1630 = vld [vmem:[#allocation13 + $0xc] sm:$0xf]
    %v1635 = vunpack.c.l.b16 %v1627
    %v1636 = vunpack.c.l.b16 %v1628
    %v1637 = vunpack.c.l.b16 %v1629
    %v1638 = vunpack.c.l.b16 %v1630
    %v1639 = vpack.c.b16 %v1636, %v1635
    %v1640 = vpack.c.b16 %v1638, %v1637
    %v1644 = vsel %vm182, %v1626, 0
    %1646 = vmatprep.subr.bf16.mxu0 0
    %1647 = vmatpush1.bf16.msra.mxu0 0
    %1648 = vmatprep.subr.bf16.mxu0 0
    %1649 = vmatpush1.bf16.msra.mxu0 0
    %1650 = vmatprep.subr.bf16.mxu0 0
    %1651 = vmatpush1.bf16.msra.mxu0 0
    %1652 = vmatprep.subr.bf16.mxu0 0
    %1653 = vmatpush1.bf16.msra.mxu0 0
    %1654 = vmatprep.subr.bf16.mxu0 0
    %1655 = vmatpush1.bf16.msra.mxu0 0
    %1656 = vmatprep.subr.bf16.mxu0 0
    %1657 = vmatpush1.bf16.msra.mxu0 0
    %1658 = vmatprep.subr.bf16.mxu0 0
    %1659 = vmatpush1.bf16.msra.mxu0 %v1640
    %1660 = vmatprep.subr.bf16.mxu0 0
    %1661 = vmatpush1.bf16.msra.mxu0 %v1639
    %1662 = vmatprep.subr.bf16.mxu0 0
    %1663 = vmatpush2.bf16.msra.mxu0 0
    %1664 = vmatprep.subr.bf16.mxu0 0
    %1665 = vmatpush2.bf16.msra.mxu0 0
    %1666 = vmatprep.subr.bf16.mxu0 0
    %1667 = vmatpush2.bf16.msra.mxu0 0
    %1668 = vmatprep.subr.bf16.mxu0 0
    %1669 = vmatpush2.bf16.msra.mxu0 0
    %1670 = vmatprep.subr.bf16.mxu0 0
    %1671 = vmatpush2.bf16.msra.mxu0 0
    %1672 = vmatprep.subr.bf16.mxu0 0
    %1673 = vmatpush2.bf16.msra.mxu0 0
    %1674 = vmatprep.subr.bf16.mxu0 0
    %1675 = vmatpush2.bf16.msra.mxu0 0
    %1676 = vmatprep.subr.bf16.mxu0 0
    %1677 = vmatpush2.bf16.msra.mxu0 0
    %1678 = vmatprep.mubr.bf16.mxu0 0
    %1679 = vmatmul.mubr.bf16.gmra.mxu0 %v1644
    %v1680 = vpop.f32.mrf.mxu0
    %v1681 = vadd.f32 0.0, %v1680
    %v1682 = vpop.f32.mrf.mxu0
    %v1683 = vpop.f32.mrf.mxu0
    %v1684 = vadd.f32 0.0, %v1683
    %v1685 = vpop.f32.mrf.mxu0
    %1686 = vdwg.mxu0
    %v1687 = vadd.f32 %v865, %v1681
    %v1688 = vadd.f32 %v866, %v1684
    %v1689 = vld [vmem:[%s11] sm:$0x1]
    %v1690 = vmul.f32 %v1687, %v1687
    %v1691 = vmul.f32 %v1688, %v1688
    %v1692 = vsel %vm182, %v1690, 0.0
    %1693 = vadd.xlane.f32.xlu0 %v1692
    %v1694 = vpop.xlane.xlu0 %1693
    %v1695 = vsel %vm182, %v1691, 0.0
    %1696 = vadd.xlane.f32.xlu0 %v1695
    %v1697 = vpop.xlane.xlu0 %1696
    %v1698 = vmul.f32 %v1694, %v189
    %v1699 = vmul.f32 %v1697, %v189
    %v1700 = vadd.f32 %v1698, 1e-06
    %v1701 = vadd.f32 %v1699, 1e-06
    %v1702 = vrsqrt.pop %v1700
    %v1703 = vrsqrt.pop %v1701
    %v1704 = vmul.f32 %v1687, %v1702
    %v1705 = vmul.f32 %v1688, %v1703
    %v1707 = vlaneseq
    %v1708 = vshrl.u32 %v1707, 7
    %v1709 = vsub.s32 0, %v1708
    %v1710 = vrot.slane %v1689, %v1709
    %v1712 = vmul.f32 %v1704, %v1710
    %v1713 = vmul.f32 %v1705, %v1710
    %v1714 = vpack.c.bf16 %v1713, %v1712
    %v1715 = vld [vmem:[#allocation14] sm:$0xf]
    %v1716 = vld [vmem:[#allocation14 + $0x4] sm:$0xf]
    %v1717 = vld [vmem:[#allocation14 + $0x8] sm:$0xf]
    %v1718 = vld [vmem:[#allocation14 + $0xc] sm:$0xf]
    %v1723 = vunpack.c.l.b16 %v1715
    %v1724 = vunpack.c.l.b16 %v1716
    %v1725 = vunpack.c.l.b16 %v1717
    %v1726 = vunpack.c.l.b16 %v1718
    %v1727 = vpack.c.b16 %v1724, %v1723
    %v1728 = vpack.c.b16 %v1726, %v1725
    %v1732 = vsel %vm182, %v1714, 0
    %1734 = vmatprep.subr.bf16.mxu0 0
    %1735 = vmatpush1.bf16.msra.mxu0 0
    %1736 = vmatprep.subr.bf16.mxu0 0
    %1737 = vmatpush1.bf16.msra.mxu0 0
    %1738 = vmatprep.subr.bf16.mxu0 0
    %1739 = vmatpush1.bf16.msra.mxu0 0
    %1740 = vmatprep.subr.bf16.mxu0 0
    %1741 = vmatpush1.bf16.msra.mxu0 0
    %1742 = vmatprep.subr.bf16.mxu0 0
    %1743 = vmatpush1.bf16.msra.mxu0 0
    %1744 = vmatprep.subr.bf16.mxu0 0
    %1745 = vmatpush1.bf16.msra.mxu0 0
    %1746 = vmatprep.subr.bf16.mxu0 0
    %1747 = vmatpush1.bf16.msra.mxu0 %v1728
    %1748 = vmatprep.subr.bf16.mxu0 0
    %1749 = vmatpush1.bf16.msra.mxu0 %v1727
    %1750 = vmatprep.subr.bf16.mxu0 0
    %1751 = vmatpush2.bf16.msra.mxu0 0
    %1752 = vmatprep.subr.bf16.mxu0 0
    %1753 = vmatpush2.bf16.msra.mxu0 0
    %1754 = vmatprep.subr.bf16.mxu0 0
    %1755 = vmatpush2.bf16.msra.mxu0 0
    %1756 = vmatprep.subr.bf16.mxu0 0
    %1757 = vmatpush2.bf16.msra.mxu0 0
    %1758 = vmatprep.subr.bf16.mxu0 0
    %1759 = vmatpush2.bf16.msra.mxu0 0
    %1760 = vmatprep.subr.bf16.mxu0 0
    %1761 = vmatpush2.bf16.msra.mxu0 0
    %1762 = vmatprep.subr.bf16.mxu0 0
    %1763 = vmatpush2.bf16.msra.mxu0 0
    %1764 = vmatprep.subr.bf16.mxu0 0
    %1765 = vmatpush2.bf16.msra.mxu0 0
    %1766 = vmatprep.mubr.bf16.mxu0 0
    %1767 = vmatmul.mubr.bf16.gmra.mxu0 %v1732
    %v1768 = vpop.f32.mrf.mxu0
    %v1769 = vadd.f32 0.0, %v1768
    %v1770 = vpop.f32.mrf.mxu0
    %v1771 = vpop.f32.mrf.mxu0
    %v1772 = vadd.f32 0.0, %v1771
    %v1773 = vpop.f32.mrf.mxu0
    %1774 = vdwg.mxu0
    %v1775 = vmax.f32 %v1769, 0.0
    %v1776 = vmax.f32 %v1772, 0.0
    %v1777 = vpack.c.bf16 %v1776, %v1775
    %v1778 = vld [vmem:[%s13] sm:$0xf]
    %v1779 = vld [vmem:[%s13 + $0x4] sm:$0xf]
    %v1780 = vld [vmem:[%s13 + $0x8] sm:$0xf]
    %v1781 = vld [vmem:[%s13 + $0xc] sm:$0xf]
    %v1782 = vld [vmem:[%s13 + $0x10] sm:$0xf]
    %v1783 = vld [vmem:[%s13 + $0x14] sm:$0xf]
    %v1784 = vld [vmem:[%s13 + $0x18] sm:$0xf]
    %v1785 = vld [vmem:[%s13 + $0x1c] sm:$0xf]
    %v1794 = vunpack.c.l.b16 %v1778
    %v1795 = vunpack.c.l.b16 %v1779
    %v1796 = vunpack.c.l.b16 %v1780
    %v1797 = vunpack.c.l.b16 %v1781
    %v1798 = vunpack.c.l.b16 %v1782
    %v1799 = vunpack.c.l.b16 %v1783
    %v1800 = vunpack.c.l.b16 %v1784
    %v1801 = vunpack.c.l.b16 %v1785
    %v1802 = vpack.c.b16 %v1795, %v1794
    %v1803 = vpack.c.b16 %v1797, %v1796
    %v1804 = vpack.c.b16 %v1799, %v1798
    %v1805 = vpack.c.b16 %v1801, %v1800
    %vm1810 = vcmask 523264
    %v1812 = vsel %vm1810, %v1777, 0
    %1814 = vmatprep.subr.bf16.mxu0 0
    %1815 = vmatpush1.bf16.msra.mxu0 0
    %1816 = vmatprep.subr.bf16.mxu0 0
    %1817 = vmatpush1.bf16.msra.mxu0 0
    %1818 = vmatprep.subr.bf16.mxu0 0
    %1819 = vmatpush1.bf16.msra.mxu0 0
    %1820 = vmatprep.subr.bf16.mxu0 0
    %1821 = vmatpush1.bf16.msra.mxu0 0
    %1822 = vmatprep.subr.bf16.mxu0 0
    %1823 = vmatpush1.bf16.msra.mxu0 %v1805
    %1824 = vmatprep.subr.bf16.mxu0 0
    %1825 = vmatpush1.bf16.msra.mxu0 %v1804
    %1826 = vmatprep.subr.bf16.mxu0 0
    %1827 = vmatpush1.bf16.msra.mxu0 %v1803
    %1828 = vmatprep.subr.bf16.mxu0 0
    %1829 = vmatpush1.bf16.msra.mxu0 %v1802
    %1830 = vmatprep.subr.bf16.mxu0 0
    %1831 = vmatpush2.bf16.msra.mxu0 0
    %1832 = vmatprep.subr.bf16.mxu0 0
    %1833 = vmatpush2.bf16.msra.mxu0 0
    %1834 = vmatprep.subr.bf16.mxu0 0
    %1835 = vmatpush2.bf16.msra.mxu0 0
    %1836 = vmatprep.subr.bf16.mxu0 0
    %1837 = vmatpush2.bf16.msra.mxu0 0
    %1838 = vmatprep.subr.bf16.mxu0 0
    %1839 = vmatpush2.bf16.msra.mxu0 0
    %1840 = vmatprep.subr.bf16.mxu0 0
    %1841 = vmatpush2.bf16.msra.mxu0 0
    %1842 = vmatprep.subr.bf16.mxu0 0
    %1843 = vmatpush2.bf16.msra.mxu0 0
    %1844 = vmatprep.subr.bf16.mxu0 0
    %1845 = vmatpush2.bf16.msra.mxu0 0
    %1846 = vmatprep.mubr.bf16.mxu0 0
    %1847 = vmatmul.mubr.bf16.gmra.mxu0 %v1812
    %v1848 = vpop.f32.mrf.mxu0
    %v1849 = vadd.f32 0.0, %v1848
    %v1850 = vpop.f32.mrf.mxu0
    %v1851 = vpop.f32.mrf.mxu0
    %v1852 = vadd.f32 0.0, %v1851
    %v1853 = vpop.f32.mrf.mxu0
    %1854 = vdwg.mxu0
    %v1855 = vadd.f32 %v1687, %v1849
    %v1856 = vadd.f32 %v1688, %v1852
    %s1857 = scalar_lea.vmem %s4, 1
    %v1858 = vld [vmem:[%s1857] sm:$0x1]
    %v1859 = vmul.f32 %v1855, %v1855
    %v1860 = vmul.f32 %v1856, %v1856
    %v1861 = vsel %vm182, %v1859, 0.0
    %1862 = vadd.xlane.f32.xlu0 %v1861
    %v1863 = vpop.xlane.xlu0 %1862
    %v1864 = vsel %vm182, %v1860, 0.0
    %1865 = vadd.xlane.f32.xlu0 %v1864
    %v1866 = vpop.xlane.xlu0 %1865
    %v1867 = vmul.f32 %v1863, %v189
    %v1868 = vmul.f32 %v1866, %v189
    %v1869 = vadd.f32 %v1867, 1e-06
    %v1870 = vadd.f32 %v1868, 1e-06
    %v1871 = vrsqrt.pop %v1869
    %v1872 = vrsqrt.pop %v1870
    %v1873 = vmul.f32 %v1855, %v1871
    %v1874 = vmul.f32 %v1856, %v1872
    %v1876 = vlaneseq
    %v1877 = vshrl.u32 %v1876, 7
    %v1878 = vsub.s32 0, %v1877
    %v1879 = vrot.slane %v1858, %v1878
    %v1881 = vmul.f32 %v1873, %v1879
    %v1882 = vmul.f32 %v1874, %v1879
    %v1883 = vpack.c.bf16 %v1882, %v1881
    %s1884 = scalar_lea.vmem [#allocation7], 16
    %v1885 = vld [vmem:[%s1884] sm:$0xf]
    %v1886 = vld [vmem:[%s1884 + $0x4] sm:$0xf]
    %v1887 = vld [vmem:[%s1884 + $0x8] sm:$0xf]
    %v1888 = vld [vmem:[%s1884 + $0xc] sm:$0xf]
    %v1893 = vunpack.c.l.b16 %v1885
    %v1894 = vunpack.c.l.b16 %v1886
    %v1895 = vunpack.c.l.b16 %v1887
    %v1896 = vunpack.c.l.b16 %v1888
    %v1897 = vpack.c.b16 %v1894, %v1893
    %v1898 = vpack.c.b16 %v1896, %v1895
    %v1902 = vsel %vm182, %v1883, 0
    %1904 = vmatprep.subr.bf16.mxu0 0
    %1905 = vmatpush1.bf16.msra.mxu0 0
    %1906 = vmatprep.subr.bf16.mxu0 0
    %1907 = vmatpush1.bf16.msra.mxu0 0
    %1908 = vmatprep.subr.bf16.mxu0 0
    %1909 = vmatpush1.bf16.msra.mxu0 0
    %1910 = vmatprep.subr.bf16.mxu0 0
    %1911 = vmatpush1.bf16.msra.mxu0 0
    %1912 = vmatprep.subr.bf16.mxu0 0
    %1913 = vmatpush1.bf16.msra.mxu0 0
    %1914 = vmatprep.subr.bf16.mxu0 0
    %1915 = vmatpush1.bf16.msra.mxu0 0
    %1916 = vmatprep.subr.bf16.mxu0 0
    %1917 = vmatpush1.bf16.msra.mxu0 %v1898
    %1918 = vmatprep.subr.bf16.mxu0 0
    %1919 = vmatpush1.bf16.msra.mxu0 %v1897
    %1920 = vmatprep.subr.bf16.mxu0 0
    %1921 = vmatpush2.bf16.msra.mxu0 0
    %1922 = vmatprep.subr.bf16.mxu0 0
    %1923 = vmatpush2.bf16.msra.mxu0 0
    %1924 = vmatprep.subr.bf16.mxu0 0
    %1925 = vmatpush2.bf16.msra.mxu0 0
    %1926 = vmatprep.subr.bf16.mxu0 0
    %1927 = vmatpush2.bf16.msra.mxu0 0
    %1928 = vmatprep.subr.bf16.mxu0 0
    %1929 = vmatpush2.bf16.msra.mxu0 0
    %1930 = vmatprep.subr.bf16.mxu0 0
    %1931 = vmatpush2.bf16.msra.mxu0 0
    %1932 = vmatprep.subr.bf16.mxu0 0
    %1933 = vmatpush2.bf16.msra.mxu0 0
    %1934 = vmatprep.subr.bf16.mxu0 0
    %1935 = vmatpush2.bf16.msra.mxu0 0
    %1936 = vmatprep.mubr.bf16.mxu0 0
    %1937 = vmatmul.mubr.bf16.gmra.mxu0 %v1902
    %v1938 = vpop.f32.mrf.mxu0
    %v1939 = vadd.f32 0.0, %v1938
    %v1940 = vpop.f32.mrf.mxu0
    %v1941 = vpop.f32.mrf.mxu0
    %v1942 = vadd.f32 0.0, %v1941
    %v1943 = vpop.f32.mrf.mxu0
    %1944 = vdwg.mxu0
    %1947 = vrot.lane.b32.xlu0 %v1939, 120
    %v1948 = vpop.permute.xlu0 %1947
    %1949 = vrot.lane.b32.xlu0 %v1942, 120
    %v1950 = vpop.permute.xlu0 %1949
    %1953 = vrot.lane.b32.xlu0 %v1939, 112
    %v1954 = vpop.permute.xlu0 %1953
    %1955 = vrot.lane.b32.xlu0 %v1942, 112
    %v1956 = vpop.permute.xlu0 %1955
    %1959 = vrot.lane.b32.xlu0 %v1939, 104
    %v1960 = vpop.permute.xlu0 %1959
    %1961 = vrot.lane.b32.xlu0 %v1942, 104
    %v1962 = vpop.permute.xlu0 %1961
    %v1965 = vpack.c.bf16 %v1942, %v1939
    %v1966 = vpack.c.bf16 %v1950, %v1948
    %v1967 = vpack.c.bf16 %v1956, %v1954
    %v1968 = vpack.c.bf16 %v1962, %v1960
    %1970 = vrot.lane.b32.xlu0 %v1965, 96
    %v1971 = vpop.permute.xlu0 %1970
    %v1973 = vsel %vm294, %v1965, 0
    %v1976 = vsel %vm294, %v1971, 0
    %1978 = vmatprep.subr.bf16.mxu0 0
    %1979 = vmatpush1.bf16.xpose.msra.mxu0 0
    %1980 = vmatprep.subr.bf16.mxu0 0
    %1981 = vmatpush1.bf16.xpose.msra.mxu0 0
    %1982 = vmatprep.subr.bf16.mxu0 0
    %1983 = vmatpush1.bf16.xpose.msra.mxu0 0
    %1984 = vmatprep.subr.bf16.mxu0 0
    %1985 = vmatpush1.bf16.xpose.msra.mxu0 0
    %1986 = vmatprep.subr.bf16.mxu0 0
    %1987 = vmatpush1.bf16.xpose.msra.mxu0 0
    %1988 = vmatprep.subr.bf16.mxu0 0
    %1989 = vmatpush1.bf16.xpose.msra.mxu0 0
    %1990 = vmatprep.subr.bf16.mxu0 0
    %1991 = vmatpush1.bf16.xpose.msra.mxu0 0
    %1992 = vmatprep.subr.bf16.mxu0 0
    %1993 = vmatpush1.bf16.xpose.msra.mxu0 %v1976
    %1994 = vmatprep.subr.bf16.mxu0 0
    %1995 = vmatpush2.bf16.xpose.msra.mxu0 0
    %1996 = vmatprep.subr.bf16.mxu0 0
    %1997 = vmatpush2.bf16.xpose.msra.mxu0 0
    %1998 = vmatprep.subr.bf16.mxu0 0
    %1999 = vmatpush2.bf16.xpose.msra.mxu0 0
    %2000 = vmatprep.subr.bf16.mxu0 0
    %2001 = vmatpush2.bf16.xpose.msra.mxu0 0
    %2002 = vmatprep.subr.bf16.mxu0 0
    %2003 = vmatpush2.bf16.xpose.msra.mxu0 0
    %2004 = vmatprep.subr.bf16.mxu0 0
    %2005 = vmatpush2.bf16.xpose.msra.mxu0 0
    %2006 = vmatprep.subr.bf16.mxu0 0
    %2007 = vmatpush2.bf16.xpose.msra.mxu0 0
    %2008 = vmatprep.subr.bf16.mxu0 0
    %2009 = vmatpush2.bf16.xpose.msra.mxu0 0
    %2010 = vmatprep.mubr.bf16.mxu0 0
    %2011 = vmatmul.mubr.bf16.gmra.mxu0 %v1973
    %v2012 = vpop.f32.mrf.mxu0
    %v2013 = vadd.f32 %v169, %v2012
    %v2014 = vpop.f32.mrf.mxu0
    %v2015 = vpop.f32.mrf.mxu0
    %v2016 = vadd.f32 %v170, %v2015
    %v2017 = vpop.f32.mrf.mxu0
    %2018 = vdwg.mxu0
    %2020 = vrot.lane.b32.xlu0 %v1966, 96
    %v2021 = vpop.permute.xlu0 %2020
    %v2023 = vsel %vm294, %v1966, 0
    %v2026 = vsel %vm294, %v2021, 0
    %2028 = vmatprep.subr.bf16.mxu0 0
    %2029 = vmatpush1.bf16.xpose.msra.mxu0 0
    %2030 = vmatprep.subr.bf16.mxu0 0
    %2031 = vmatpush1.bf16.xpose.msra.mxu0 0
    %2032 = vmatprep.subr.bf16.mxu0 0
    %2033 = vmatpush1.bf16.xpose.msra.mxu0 0
    %2034 = vmatprep.subr.bf16.mxu0 0
    %2035 = vmatpush1.bf16.xpose.msra.mxu0 0
    %2036 = vmatprep.subr.bf16.mxu0 0
    %2037 = vmatpush1.bf16.xpose.msra.mxu0 0
    %2038 = vmatprep.subr.bf16.mxu0 0
    %2039 = vmatpush1.bf16.xpose.msra.mxu0 0
    %2040 = vmatprep.subr.bf16.mxu0 0
    %2041 = vmatpush1.bf16.xpose.msra.mxu0 0
    %2042 = vmatprep.subr.bf16.mxu0 0
    %2043 = vmatpush1.bf16.xpose.msra.mxu0 %v2026
    %2044 = vmatprep.subr.bf16.mxu0 0
    %2045 = vmatpush2.bf16.xpose.msra.mxu0 0
    %2046 = vmatprep.subr.bf16.mxu0 0
    %2047 = vmatpush2.bf16.xpose.msra.mxu0 0
    %2048 = vmatprep.subr.bf16.mxu0 0
    %2049 = vmatpush2.bf16.xpose.msra.mxu0 0
    %2050 = vmatprep.subr.bf16.mxu0 0
    %2051 = vmatpush2.bf16.xpose.msra.mxu0 0
    %2052 = vmatprep.subr.bf16.mxu0 0
    %2053 = vmatpush2.bf16.xpose.msra.mxu0 0
    %2054 = vmatprep.subr.bf16.mxu0 0
    %2055 = vmatpush2.bf16.xpose.msra.mxu0 0
    %2056 = vmatprep.subr.bf16.mxu0 0
    %2057 = vmatpush2.bf16.xpose.msra.mxu0 0
    %2058 = vmatprep.subr.bf16.mxu0 0
    %2059 = vmatpush2.bf16.xpose.msra.mxu0 0
    %2060 = vmatprep.mubr.bf16.mxu0 0
    %2061 = vmatmul.mubr.bf16.gmra.mxu0 %v2023
    %v2062 = vpop.f32.mrf.mxu0
    %v2063 = vadd.f32 %v171, %v2062
    %v2064 = vpop.f32.mrf.mxu0
    %v2065 = vpop.f32.mrf.mxu0
    %v2066 = vadd.f32 %v172, %v2065
    %v2067 = vpop.f32.mrf.mxu0
    %2068 = vdwg.mxu0
    %2070 = vrot.lane.b32.xlu0 %v1967, 96
    %v2071 = vpop.permute.xlu0 %2070
    %v2073 = vsel %vm294, %v1967, 0
    %v2076 = vsel %vm294, %v2071, 0
    %2078 = vmatprep.subr.bf16.mxu0 0
    %2079 = vmatpush1.bf16.xpose.msra.mxu0 0
    %2080 = vmatprep.subr.bf16.mxu0 0
    %2081 = vmatpush1.bf16.xpose.msra.mxu0 0
    %2082 = vmatprep.subr.bf16.mxu0 0
    %2083 = vmatpush1.bf16.xpose.msra.mxu0 0
    %2084 = vmatprep.subr.bf16.mxu0 0
    %2085 = vmatpush1.bf16.xpose.msra.mxu0 0
    %2086 = vmatprep.subr.bf16.mxu0 0
    %2087 = vmatpush1.bf16.xpose.msra.mxu0 0
    %2088 = vmatprep.subr.bf16.mxu0 0
    %2089 = vmatpush1.bf16.xpose.msra.mxu0 0
    %2090 = vmatprep.subr.bf16.mxu0 0
    %2091 = vmatpush1.bf16.xpose.msra.mxu0 0
    %2092 = vmatprep.subr.bf16.mxu0 0
    %2093 = vmatpush1.bf16.xpose.msra.mxu0 %v2076
    %2094 = vmatprep.subr.bf16.mxu0 0
    %2095 = vmatpush2.bf16.xpose.msra.mxu0 0
    %2096 = vmatprep.subr.bf16.mxu0 0
    %2097 = vmatpush2.bf16.xpose.msra.mxu0 0
    %2098 = vmatprep.subr.bf16.mxu0 0
    %2099 = vmatpush2.bf16.xpose.msra.mxu0 0
    %2100 = vmatprep.subr.bf16.mxu0 0
    %2101 = vmatpush2.bf16.xpose.msra.mxu0 0
    %2102 = vmatprep.subr.bf16.mxu0 0
    %2103 = vmatpush2.bf16.xpose.msra.mxu0 0
    %2104 = vmatprep.subr.bf16.mxu0 0
    %2105 = vmatpush2.bf16.xpose.msra.mxu0 0
    %2106 = vmatprep.subr.bf16.mxu0 0
    %2107 = vmatpush2.bf16.xpose.msra.mxu0 0
    %2108 = vmatprep.subr.bf16.mxu0 0
    %2109 = vmatpush2.bf16.xpose.msra.mxu0 0
    %2110 = vmatprep.mubr.bf16.mxu0 0
    %2111 = vmatmul.mubr.bf16.gmra.mxu0 %v2073
    %v2112 = vpop.f32.mrf.mxu0
    %v2113 = vadd.f32 %v173, %v2112
    %v2114 = vpop.f32.mrf.mxu0
    %v2115 = vpop.f32.mrf.mxu0
    %v2116 = vadd.f32 %v174, %v2115
    %v2117 = vpop.f32.mrf.mxu0
    %2118 = vdwg.mxu0
    %2120 = vrot.lane.b32.xlu0 %v1968, 96
    %v2121 = vpop.permute.xlu0 %2120
    %v2123 = vsel %vm294, %v1968, 0
    %v2126 = vsel %vm294, %v2121, 0
    %2128 = vmatprep.subr.bf16.mxu0 0
    %2129 = vmatpush1.bf16.xpose.msra.mxu0 0
    %2130 = vmatprep.subr.bf16.mxu0 0
    %2131 = vmatpush1.bf16.xpose.msra.mxu0 0
    %2132 = vmatprep.subr.bf16.mxu0 0
    %2133 = vmatpush1.bf16.xpose.msra.mxu0 0
    %2134 = vmatprep.subr.bf16.mxu0 0
    %2135 = vmatpush1.bf16.xpose.msra.mxu0 0
    %2136 = vmatprep.subr.bf16.mxu0 0
    %2137 = vmatpush1.bf16.xpose.msra.mxu0 0
    %2138 = vmatprep.subr.bf16.mxu0 0
    %2139 = vmatpush1.bf16.xpose.msra.mxu0 0
    %2140 = vmatprep.subr.bf16.mxu0 0
    %2141 = vmatpush1.bf16.xpose.msra.mxu0 0
    %2142 = vmatprep.subr.bf16.mxu0 0
    %2143 = vmatpush1.bf16.xpose.msra.mxu0 %v2126
    %2144 = vmatprep.subr.bf16.mxu0 0
    %2145 = vmatpush2.bf16.xpose.msra.mxu0 0
    %2146 = vmatprep.subr.bf16.mxu0 0
    %2147 = vmatpush2.bf16.xpose.msra.mxu0 0
    %2148 = vmatprep.subr.bf16.mxu0 0
    %2149 = vmatpush2.bf16.xpose.msra.mxu0 0
    %2150 = vmatprep.subr.bf16.mxu0 0
    %2151 = vmatpush2.bf16.xpose.msra.mxu0 0
    %2152 = vmatprep.subr.bf16.mxu0 0
    %2153 = vmatpush2.bf16.xpose.msra.mxu0 0
    %2154 = vmatprep.subr.bf16.mxu0 0
    %2155 = vmatpush2.bf16.xpose.msra.mxu0 0
    %2156 = vmatprep.subr.bf16.mxu0 0
    %2157 = vmatpush2.bf16.xpose.msra.mxu0 0
    %2158 = vmatprep.subr.bf16.mxu0 0
    %2159 = vmatpush2.bf16.xpose.msra.mxu0 0
    %2160 = vmatprep.mubr.bf16.mxu0 0
    %2161 = vmatmul.mubr.bf16.gmra.mxu0 %v2123
    %v2162 = vpop.f32.mrf.mxu0
    %v2163 = vadd.f32 %v175, %v2162
    %v2164 = vpop.f32.mrf.mxu0
    %v2165 = vpop.f32.mrf.mxu0
    %v2166 = vadd.f32 %v176, %v2165
    %v2167 = vpop.f32.mrf.mxu0
    %2168 = vdwg.mxu0
    %v2169 = vsel %vm492, %v2013, -inf
    %2170 = vmax.xlane.f32.xlu0 %v2169
    %v2171 = vpop.xlane.xlu0 %2170
    %v2172 = vsel %vm492, %v2016, -inf
    %2173 = vmax.xlane.f32.xlu0 %v2172
    %v2174 = vpop.xlane.xlu0 %2173
    %v2175 = vsel %vm492, %v2063, -inf
    %2176 = vmax.xlane.f32.xlu0 %v2175
    %v2177 = vpop.xlane.xlu0 %2176
    %v2178 = vsel %vm492, %v2066, -inf
    %2179 = vmax.xlane.f32.xlu0 %v2178
    %v2180 = vpop.xlane.xlu0 %2179
    %v2181 = vsel %vm492, %v2113, -inf
    %2182 = vmax.xlane.f32.xlu0 %v2181
    %v2183 = vpop.xlane.xlu0 %2182
    %v2184 = vsel %vm492, %v2116, -inf
    %2185 = vmax.xlane.f32.xlu0 %v2184
    %v2186 = vpop.xlane.xlu0 %2185
    %v2187 = vsel %vm492, %v2163, -inf
    %2188 = vmax.xlane.f32.xlu0 %v2187
    %v2189 = vpop.xlane.xlu0 %2188
    %v2190 = vsel %vm492, %v2166, -inf
    %2191 = vmax.xlane.f32.xlu0 %v2190
    %v2192 = vpop.xlane.xlu0 %2191
    %v2193 = vsub.f32 %v2013, %v2171
    %v2194 = vsub.f32 %v2016, %v2174
    %v2195 = vsub.f32 %v2063, %v2177
    %v2196 = vsub.f32 %v2066, %v2180
    %v2197 = vsub.f32 %v2113, %v2183
    %v2198 = vsub.f32 %v2116, %v2186
    %v2199 = vsub.f32 %v2163, %v2189
    %v2200 = vsub.f32 %v2166, %v2192
    %v2201 = vmul.f32 %v2193, 1.442695
    %v2202 = vpow.pop %v2201
    %v2203 = vmul.f32 %v2194, 1.442695
    %v2204 = vpow.pop %v2203
    %v2205 = vmul.f32 %v2195, 1.442695
    %v2206 = vpow.pop %v2205
    %v2207 = vmul.f32 %v2196, 1.442695
    %v2208 = vpow.pop %v2207
    %v2209 = vmul.f32 %v2197, 1.442695
    %v2210 = vpow.pop %v2209
    %v2211 = vmul.f32 %v2198, 1.442695
    %v2212 = vpow.pop %v2211
    %v2213 = vmul.f32 %v2199, 1.442695
    %v2214 = vpow.pop %v2213
    %v2215 = vmul.f32 %v2200, 1.442695
    %v2216 = vpow.pop %v2215
    %v2217 = vsel %vm492, %v2202, 0.0
    %2218 = vadd.xlane.f32.xlu0 %v2217
    %v2219 = vpop.xlane.xlu0 %2218
    %v2220 = vsel %vm492, %v2204, 0.0
    %2221 = vadd.xlane.f32.xlu0 %v2220
    %v2222 = vpop.xlane.xlu0 %2221
    %v2223 = vsel %vm492, %v2206, 0.0
    %2224 = vadd.xlane.f32.xlu0 %v2223
    %v2225 = vpop.xlane.xlu0 %2224
    %v2226 = vsel %vm492, %v2208, 0.0
    %2227 = vadd.xlane.f32.xlu0 %v2226
    %v2228 = vpop.xlane.xlu0 %2227
    %v2229 = vsel %vm492, %v2210, 0.0
    %2230 = vadd.xlane.f32.xlu0 %v2229
    %v2231 = vpop.xlane.xlu0 %2230
    %v2232 = vsel %vm492, %v2212, 0.0
    %2233 = vadd.xlane.f32.xlu0 %v2232
    %v2234 = vpop.xlane.xlu0 %2233
    %v2235 = vsel %vm492, %v2214, 0.0
    %2236 = vadd.xlane.f32.xlu0 %v2235
    %v2237 = vpop.xlane.xlu0 %2236
    %v2238 = vsel %vm492, %v2216, 0.0
    %2239 = vadd.xlane.f32.xlu0 %v2238
    %v2240 = vpop.xlane.xlu0 %2239
    %v2241 = vrcp.pop %v2219
    %v2242 = vrcp.pop %v2222
    %v2243 = vrcp.pop %v2225
    %v2244 = vrcp.pop %v2228
    %v2245 = vrcp.pop %v2231
    %v2246 = vrcp.pop %v2234
    %v2247 = vrcp.pop %v2237
    %v2248 = vrcp.pop %v2240
    %v2249 = vmul.f32 %v2202, %v2241
    %v2250 = vmul.f32 %v2204, %v2242
    %v2251 = vmul.f32 %v2206, %v2243
    %v2252 = vmul.f32 %v2208, %v2244
    %v2253 = vmul.f32 %v2210, %v2245
    %v2254 = vmul.f32 %v2212, %v2246
    %v2255 = vmul.f32 %v2214, %v2247
    %v2256 = vmul.f32 %v2216, %v2248
    %v2257 = vpack.c.bf16 %v2250, %v2249
    %v2258 = vpack.c.bf16 %v2252, %v2251
    %v2259 = vpack.c.bf16 %v2254, %v2253
    %v2260 = vpack.c.bf16 %v2256, %v2255
    %2261 = vrot.lane.b32.xlu0 %v1965, 64
    %v2262 = vpop.permute.xlu0 %2261
    %v2265 = vsel %vm492, %v2257, 0
    %2267 = vmatprep.subr.bf16.mxu0 0
    %2268 = vmatpush1.bf16.msra.mxu0 0
    %2269 = vmatprep.subr.bf16.mxu0 0
    %2270 = vmatpush1.bf16.msra.mxu0 0
    %2271 = vmatprep.subr.bf16.mxu0 0
    %2272 = vmatpush1.bf16.msra.mxu0 0
    %2273 = vmatprep.subr.bf16.mxu0 0
    %2274 = vmatpush1.bf16.msra.mxu0 0
    %2275 = vmatprep.subr.bf16.mxu0 0
    %2276 = vmatpush1.bf16.msra.mxu0 0
    %2277 = vmatprep.subr.bf16.mxu0 0
    %2278 = vmatpush1.bf16.msra.mxu0 0
    %2279 = vmatprep.subr.bf16.mxu0 0
    %2280 = vmatpush1.bf16.msra.mxu0 0
    %2281 = vmatprep.subr.bf16.mxu0 0
    %2282 = vmatpush1.bf16.msra.mxu0 %v2262
    %2283 = vmatprep.subr.bf16.mxu0 0
    %2284 = vmatpush2.bf16.msra.mxu0 0
    %2285 = vmatprep.subr.bf16.mxu0 0
    %2286 = vmatpush2.bf16.msra.mxu0 0
    %2287 = vmatprep.subr.bf16.mxu0 0
    %2288 = vmatpush2.bf16.msra.mxu0 0
    %2289 = vmatprep.subr.bf16.mxu0 0
    %2290 = vmatpush2.bf16.msra.mxu0 0
    %2291 = vmatprep.subr.bf16.mxu0 0
    %2292 = vmatpush2.bf16.msra.mxu0 0
    %2293 = vmatprep.subr.bf16.mxu0 0
    %2294 = vmatpush2.bf16.msra.mxu0 0
    %2295 = vmatprep.subr.bf16.mxu0 0
    %2296 = vmatpush2.bf16.msra.mxu0 0
    %2297 = vmatprep.subr.bf16.mxu0 0
    %2298 = vmatpush2.bf16.msra.mxu0 0
    %2299 = vmatprep.mubr.bf16.mxu0 0
    %2300 = vmatmul.mubr.bf16.gmra.mxu0 %v2265
    %v2301 = vpop.f32.mrf.mxu0
    %v2302 = vadd.f32 0.0, %v2301
    %v2303 = vpop.f32.mrf.mxu0
    %v2304 = vpop.f32.mrf.mxu0
    %v2305 = vadd.f32 0.0, %v2304
    %v2306 = vpop.f32.mrf.mxu0
    %2307 = vdwg.mxu0
    %2308 = vrot.lane.b32.xlu0 %v1966, 64
    %v2309 = vpop.permute.xlu0 %2308
    %v2312 = vsel %vm492, %v2258, 0
    %2314 = vmatprep.subr.bf16.mxu0 0
    %2315 = vmatpush1.bf16.msra.mxu0 0
    %2316 = vmatprep.subr.bf16.mxu0 0
    %2317 = vmatpush1.bf16.msra.mxu0 0
    %2318 = vmatprep.subr.bf16.mxu0 0
    %2319 = vmatpush1.bf16.msra.mxu0 0
    %2320 = vmatprep.subr.bf16.mxu0 0
    %2321 = vmatpush1.bf16.msra.mxu0 0
    %2322 = vmatprep.subr.bf16.mxu0 0
    %2323 = vmatpush1.bf16.msra.mxu0 0
    %2324 = vmatprep.subr.bf16.mxu0 0
    %2325 = vmatpush1.bf16.msra.mxu0 0
    %2326 = vmatprep.subr.bf16.mxu0 0
    %2327 = vmatpush1.bf16.msra.mxu0 0
    %2328 = vmatprep.subr.bf16.mxu0 0
    %2329 = vmatpush1.bf16.msra.mxu0 %v2309
    %2330 = vmatprep.subr.bf16.mxu0 0
    %2331 = vmatpush2.bf16.msra.mxu0 0
    %2332 = vmatprep.subr.bf16.mxu0 0
    %2333 = vmatpush2.bf16.msra.mxu0 0
    %2334 = vmatprep.subr.bf16.mxu0 0
    %2335 = vmatpush2.bf16.msra.mxu0 0
    %2336 = vmatprep.subr.bf16.mxu0 0
    %2337 = vmatpush2.bf16.msra.mxu0 0
    %2338 = vmatprep.subr.bf16.mxu0 0
    %2339 = vmatpush2.bf16.msra.mxu0 0
    %2340 = vmatprep.subr.bf16.mxu0 0
    %2341 = vmatpush2.bf16.msra.mxu0 0
    %2342 = vmatprep.subr.bf16.mxu0 0
    %2343 = vmatpush2.bf16.msra.mxu0 0
    %2344 = vmatprep.subr.bf16.mxu0 0
    %2345 = vmatpush2.bf16.msra.mxu0 0
    %2346 = vmatprep.mubr.bf16.mxu0 0
    %2347 = vmatmul.mubr.bf16.gmra.mxu0 %v2312
    %v2348 = vpop.f32.mrf.mxu0
    %v2349 = vadd.f32 0.0, %v2348
    %v2350 = vpop.f32.mrf.mxu0
    %v2351 = vpop.f32.mrf.mxu0
    %v2352 = vadd.f32 0.0, %v2351
    %v2353 = vpop.f32.mrf.mxu0
    %2354 = vdwg.mxu0
    %2355 = vrot.lane.b32.xlu0 %v1967, 64
    %v2356 = vpop.permute.xlu0 %2355
    %v2359 = vsel %vm492, %v2259, 0
    %2361 = vmatprep.subr.bf16.mxu0 0
    %2362 = vmatpush1.bf16.msra.mxu0 0
    %2363 = vmatprep.subr.bf16.mxu0 0
    %2364 = vmatpush1.bf16.msra.mxu0 0
    %2365 = vmatprep.subr.bf16.mxu0 0
    %2366 = vmatpush1.bf16.msra.mxu0 0
    %2367 = vmatprep.subr.bf16.mxu0 0
    %2368 = vmatpush1.bf16.msra.mxu0 0
    %2369 = vmatprep.subr.bf16.mxu0 0
    %2370 = vmatpush1.bf16.msra.mxu0 0
    %2371 = vmatprep.subr.bf16.mxu0 0
    %2372 = vmatpush1.bf16.msra.mxu0 0
    %2373 = vmatprep.subr.bf16.mxu0 0
    %2374 = vmatpush1.bf16.msra.mxu0 0
    %2375 = vmatprep.subr.bf16.mxu0 0
    %2376 = vmatpush1.bf16.msra.mxu0 %v2356
    %2377 = vmatprep.subr.bf16.mxu0 0
    %2378 = vmatpush2.bf16.msra.mxu0 0
    %2379 = vmatprep.subr.bf16.mxu0 0
    %2380 = vmatpush2.bf16.msra.mxu0 0
    %2381 = vmatprep.subr.bf16.mxu0 0
    %2382 = vmatpush2.bf16.msra.mxu0 0
    %2383 = vmatprep.subr.bf16.mxu0 0
    %2384 = vmatpush2.bf16.msra.mxu0 0
    %2385 = vmatprep.subr.bf16.mxu0 0
    %2386 = vmatpush2.bf16.msra.mxu0 0
    %2387 = vmatprep.subr.bf16.mxu0 0
    %2388 = vmatpush2.bf16.msra.mxu0 0
    %2389 = vmatprep.subr.bf16.mxu0 0
    %2390 = vmatpush2.bf16.msra.mxu0 0
    %2391 = vmatprep.subr.bf16.mxu0 0
    %2392 = vmatpush2.bf16.msra.mxu0 0
    %2393 = vmatprep.mubr.bf16.mxu0 0
    %2394 = vmatmul.mubr.bf16.gmra.mxu0 %v2359
    %v2395 = vpop.f32.mrf.mxu0
    %v2396 = vadd.f32 0.0, %v2395
    %v2397 = vpop.f32.mrf.mxu0
    %v2398 = vpop.f32.mrf.mxu0
    %v2399 = vadd.f32 0.0, %v2398
    %v2400 = vpop.f32.mrf.mxu0
    %2401 = vdwg.mxu0
    %2402 = vrot.lane.b32.xlu0 %v1968, 64
    %v2403 = vpop.permute.xlu0 %2402
    %v2406 = vsel %vm492, %v2260, 0
    %2408 = vmatprep.subr.bf16.mxu0 0
    %2409 = vmatpush1.bf16.msra.mxu0 0
    %2410 = vmatprep.subr.bf16.mxu0 0
    %2411 = vmatpush1.bf16.msra.mxu0 0
    %2412 = vmatprep.subr.bf16.mxu0 0
    %2413 = vmatpush1.bf16.msra.mxu0 0
    %2414 = vmatprep.subr.bf16.mxu0 0
    %2415 = vmatpush1.bf16.msra.mxu0 0
    %2416 = vmatprep.subr.bf16.mxu0 0
    %2417 = vmatpush1.bf16.msra.mxu0 0
    %2418 = vmatprep.subr.bf16.mxu0 0
    %2419 = vmatpush1.bf16.msra.mxu0 0
    %2420 = vmatprep.subr.bf16.mxu0 0
    %2421 = vmatpush1.bf16.msra.mxu0 0
    %2422 = vmatprep.subr.bf16.mxu0 0
    %2423 = vmatpush1.bf16.msra.mxu0 %v2403
    %2424 = vmatprep.subr.bf16.mxu0 0
    %2425 = vmatpush2.bf16.msra.mxu0 0
    %2426 = vmatprep.subr.bf16.mxu0 0
    %2427 = vmatpush2.bf16.msra.mxu0 0
    %2428 = vmatprep.subr.bf16.mxu0 0
    %2429 = vmatpush2.bf16.msra.mxu0 0
    %2430 = vmatprep.subr.bf16.mxu0 0
    %2431 = vmatpush2.bf16.msra.mxu0 0
    %2432 = vmatprep.subr.bf16.mxu0 0
    %2433 = vmatpush2.bf16.msra.mxu0 0
    %2434 = vmatprep.subr.bf16.mxu0 0
    %2435 = vmatpush2.bf16.msra.mxu0 0
    %2436 = vmatprep.subr.bf16.mxu0 0
    %2437 = vmatpush2.bf16.msra.mxu0 0
    %2438 = vmatprep.subr.bf16.mxu0 0
    %2439 = vmatpush2.bf16.msra.mxu0 0
    %2440 = vmatprep.mubr.bf16.mxu0 0
    %2441 = vmatmul.mubr.bf16.gmra.mxu0 %v2406
    %v2442 = vpop.f32.mrf.mxu0
    %v2443 = vadd.f32 0.0, %v2442
    %v2444 = vpop.f32.mrf.mxu0
    %v2445 = vpop.f32.mrf.mxu0
    %v2446 = vadd.f32 0.0, %v2445
    %v2447 = vpop.f32.mrf.mxu0
    %2448 = vdwg.mxu0
    %2451 = vrot.lane.b32.xlu0 %v2349, 8
    %v2452 = vpop.permute.xlu0 %2451
    %2453 = vrot.lane.b32.xlu0 %v2352, 8
    %v2454 = vpop.permute.xlu0 %2453
    %2459 = vrot.lane.b32.xlu0 %v2396, 16
    %v2460 = vpop.permute.xlu0 %2459
    %2461 = vrot.lane.b32.xlu0 %v2399, 16
    %v2462 = vpop.permute.xlu0 %2461
    %2467 = vrot.lane.b32.xlu0 %v2443, 24
    %v2468 = vpop.permute.xlu0 %2467
    %2469 = vrot.lane.b32.xlu0 %v2446, 24
    %v2470 = vpop.permute.xlu0 %2469
    %v2473 = vsel %vm294, %v2302, %v2452
    %v2474 = vsel %vm294, %v2305, %v2454
    %v2475 = vsel %vm492, %v2473, %v2460
    %v2476 = vsel %vm492, %v2474, %v2462
    %v2477 = vsel %vm801, %v2475, %v2468
    %v2478 = vsel %vm801, %v2476, %v2470
    %v2479 = vpack.c.bf16 %v2478, %v2477
    %s2480 = scalar_lea.vmem [#allocation8], 16
    %v2481 = vld [vmem:[%s2480] sm:$0xf]
    %v2482 = vld [vmem:[%s2480 + $0x4] sm:$0xf]
    %v2483 = vld [vmem:[%s2480 + $0x8] sm:$0xf]
    %v2484 = vld [vmem:[%s2480 + $0xc] sm:$0xf]
    %v2489 = vunpack.c.l.b16 %v2481
    %v2490 = vunpack.c.l.b16 %v2482
    %v2491 = vunpack.c.l.b16 %v2483
    %v2492 = vunpack.c.l.b16 %v2484
    %v2493 = vpack.c.b16 %v2490, %v2489
    %v2494 = vpack.c.b16 %v2492, %v2491
    %v2498 = vsel %vm182, %v2479, 0
    %2500 = vmatprep.subr.bf16.mxu0 0
    %2501 = vmatpush1.bf16.msra.mxu0 0
    %2502 = vmatprep.subr.bf16.mxu0 0
    %2503 = vmatpush1.bf16.msra.mxu0 0
    %2504 = vmatprep.subr.bf16.mxu0 0
    %2505 = vmatpush1.bf16.msra.mxu0 0
    %2506 = vmatprep.subr.bf16.mxu0 0
    %2507 = vmatpush1.bf16.msra.mxu0 0
    %2508 = vmatprep.subr.bf16.mxu0 0
    %2509 = vmatpush1.bf16.msra.mxu0 0
    %2510 = vmatprep.subr.bf16.mxu0 0
    %2511 = vmatpush1.bf16.msra.mxu0 0
    %2512 = vmatprep.subr.bf16.mxu0 0
    %2513 = vmatpush1.bf16.msra.mxu0 %v2494
    %2514 = vmatprep.subr.bf16.mxu0 0
    %2515 = vmatpush1.bf16.msra.mxu0 %v2493
    %2516 = vmatprep.subr.bf16.mxu0 0
    %2517 = vmatpush2.bf16.msra.mxu0 0
    %2518 = vmatprep.subr.bf16.mxu0 0
    %2519 = vmatpush2.bf16.msra.mxu0 0
    %2520 = vmatprep.subr.bf16.mxu0 0
    %2521 = vmatpush2.bf16.msra.mxu0 0
    %2522 = vmatprep.subr.bf16.mxu0 0
    %2523 = vmatpush2.bf16.msra.mxu0 0
    %2524 = vmatprep.subr.bf16.mxu0 0
    %2525 = vmatpush2.bf16.msra.mxu0 0
    %2526 = vmatprep.subr.bf16.mxu0 0
    %2527 = vmatpush2.bf16.msra.mxu0 0
    %2528 = vmatprep.subr.bf16.mxu0 0
    %2529 = vmatpush2.bf16.msra.mxu0 0
    %2530 = vmatprep.subr.bf16.mxu0 0
    %2531 = vmatpush2.bf16.msra.mxu0 0
    %2532 = vmatprep.mubr.bf16.mxu0 0
    %2533 = vmatmul.mubr.bf16.gmra.mxu0 %v2498
    %v2534 = vpop.f32.mrf.mxu0
    %v2535 = vadd.f32 0.0, %v2534
    %v2536 = vpop.f32.mrf.mxu0
    %v2537 = vpop.f32.mrf.mxu0
    %v2538 = vadd.f32 0.0, %v2537
    %v2539 = vpop.f32.mrf.mxu0
    %2540 = vdwg.mxu0
    %v2541 = vadd.f32 %v1855, %v2535
    %v2542 = vadd.f32 %v1856, %v2538
    %s2543 = scalar_lea.vmem %s7, 1
    %v2544 = vld [vmem:[%s2543] sm:$0x1]
    %v2545 = vmul.f32 %v2541, %v2541
    %v2546 = vmul.f32 %v2542, %v2542
    %v2547 = vsel %vm182, %v2545, 0.0
    %2548 = vadd.xlane.f32.xlu0 %v2547
    %v2549 = vpop.xlane.xlu0 %2548
    %v2550 = vsel %vm182, %v2546, 0.0
    %2551 = vadd.xlane.f32.xlu0 %v2550
    %v2552 = vpop.xlane.xlu0 %2551
    %v2553 = vmul.f32 %v2549, %v189
    %v2554 = vmul.f32 %v2552, %v189
    %v2555 = vadd.f32 %v2553, 1e-06
    %v2556 = vadd.f32 %v2554, 1e-06
    %v2557 = vrsqrt.pop %v2555
    %v2558 = vrsqrt.pop %v2556
    %v2559 = vmul.f32 %v2541, %v2557
    %v2560 = vmul.f32 %v2542, %v2558
    %v2562 = vlaneseq
    %v2563 = vshrl.u32 %v2562, 7
    %v2564 = vsub.s32 0, %v2563
    %v2565 = vrot.slane %v2544, %v2564
    %v2567 = vmul.f32 %v2559, %v2565
    %v2568 = vmul.f32 %v2560, %v2565
    %v2569 = vpack.c.bf16 %v2568, %v2567
    %s2570 = scalar_lea.vmem [#allocation10], 16
    %v2571 = vld [vmem:[%s2570] sm:$0xf]
    %v2572 = vld [vmem:[%s2570 + $0x4] sm:$0xf]
    %v2573 = vld [vmem:[%s2570 + $0x8] sm:$0xf]
    %v2574 = vld [vmem:[%s2570 + $0xc] sm:$0xf]
    %v2579 = vunpack.c.l.b16 %v2571
    %v2580 = vunpack.c.l.b16 %v2572
    %v2581 = vunpack.c.l.b16 %v2573
    %v2582 = vunpack.c.l.b16 %v2574
    %v2583 = vpack.c.b16 %v2580, %v2579
    %v2584 = vpack.c.b16 %v2582, %v2581
    %v2588 = vsel %vm182, %v2569, 0
    %2590 = vmatprep.subr.bf16.mxu0 0
    %2591 = vmatpush1.bf16.msra.mxu0 0
    %2592 = vmatprep.subr.bf16.mxu0 0
    %2593 = vmatpush1.bf16.msra.mxu0 0
    %2594 = vmatprep.subr.bf16.mxu0 0
    %2595 = vmatpush1.bf16.msra.mxu0 0
    %2596 = vmatprep.subr.bf16.mxu0 0
    %2597 = vmatpush1.bf16.msra.mxu0 0
    %2598 = vmatprep.subr.bf16.mxu0 0
    %2599 = vmatpush1.bf16.msra.mxu0 0
    %2600 = vmatprep.subr.bf16.mxu0 0
    %2601 = vmatpush1.bf16.msra.mxu0 0
    %2602 = vmatprep.subr.bf16.mxu0 0
    %2603 = vmatpush1.bf16.msra.mxu0 %v2584
    %2604 = vmatprep.subr.bf16.mxu0 0
    %2605 = vmatpush1.bf16.msra.mxu0 %v2583
    %2606 = vmatprep.subr.bf16.mxu0 0
    %2607 = vmatpush2.bf16.msra.mxu0 0
    %2608 = vmatprep.subr.bf16.mxu0 0
    %2609 = vmatpush2.bf16.msra.mxu0 0
    %2610 = vmatprep.subr.bf16.mxu0 0
    %2611 = vmatpush2.bf16.msra.mxu0 0
    %2612 = vmatprep.subr.bf16.mxu0 0
    %2613 = vmatpush2.bf16.msra.mxu0 0
    %2614 = vmatprep.subr.bf16.mxu0 0
    %2615 = vmatpush2.bf16.msra.mxu0 0
    %2616 = vmatprep.subr.bf16.mxu0 0
    %2617 = vmatpush2.bf16.msra.mxu0 0
    %2618 = vmatprep.subr.bf16.mxu0 0
    %2619 = vmatpush2.bf16.msra.mxu0 0
    %2620 = vmatprep.subr.bf16.mxu0 0
    %2621 = vmatpush2.bf16.msra.mxu0 0
    %2622 = vmatprep.mubr.bf16.mxu0 0
    %2623 = vmatmul.mubr.bf16.gmra.mxu0 %v2588
    %v2624 = vpop.f32.mrf.mxu0
    %v2625 = vadd.f32 0.0, %v2624
    %v2626 = vpop.f32.mrf.mxu0
    %v2627 = vpop.f32.mrf.mxu0
    %v2628 = vadd.f32 0.0, %v2627
    %v2629 = vpop.f32.mrf.mxu0
    %2630 = vdwg.mxu0
    %s2631 = scalar_lea.vmem [#allocation11], 16
    %v2632 = vld [vmem:[%s2631] sm:$0xf]
    %v2633 = vld [vmem:[%s2631 + $0x4] sm:$0xf]
    %v2634 = vld [vmem:[%s2631 + $0x8] sm:$0xf]
    %v2635 = vld [vmem:[%s2631 + $0xc] sm:$0xf]
    %v2640 = vunpack.c.l.b16 %v2632
    %v2641 = vunpack.c.l.b16 %v2633
    %v2642 = vunpack.c.l.b16 %v2634
    %v2643 = vunpack.c.l.b16 %v2635
    %v2644 = vpack.c.b16 %v2641, %v2640
    %v2645 = vpack.c.b16 %v2643, %v2642
    %2648 = vmatprep.subr.bf16.mxu0 0
    %2649 = vmatpush1.bf16.msra.mxu0 0
    %2650 = vmatprep.subr.bf16.mxu0 0
    %2651 = vmatpush1.bf16.msra.mxu0 0
    %2652 = vmatprep.subr.bf16.mxu0 0
    %2653 = vmatpush1.bf16.msra.mxu0 0
    %2654 = vmatprep.subr.bf16.mxu0 0
    %2655 = vmatpush1.bf16.msra.mxu0 0
    %2656 = vmatprep.subr.bf16.mxu0 0
    %2657 = vmatpush1.bf16.msra.mxu0 0
    %2658 = vmatprep.subr.bf16.mxu0 0
    %2659 = vmatpush1.bf16.msra.mxu0 0
    %2660 = vmatprep.subr.bf16.mxu0 0
    %2661 = vmatpush1.bf16.msra.mxu0 %v2645
    %2662 = vmatprep.subr.bf16.mxu0 0
    %2663 = vmatpush1.bf16.msra.mxu0 %v2644
    %2664 = vmatprep.subr.bf16.mxu0 0
    %2665 = vmatpush2.bf16.msra.mxu0 0
    %2666 = vmatprep.subr.bf16.mxu0 0
    %2667 = vmatpush2.bf16.msra.mxu0 0
    %2668 = vmatprep.subr.bf16.mxu0 0
    %2669 = vmatpush2.bf16.msra.mxu0 0
    %2670 = vmatprep.subr.bf16.mxu0 0
    %2671 = vmatpush2.bf16.msra.mxu0 0
    %2672 = vmatprep.subr.bf16.mxu0 0
    %2673 = vmatpush2.bf16.msra.mxu0 0
    %2674 = vmatprep.subr.bf16.mxu0 0
    %2675 = vmatpush2.bf16.msra.mxu0 0
    %2676 = vmatprep.subr.bf16.mxu0 0
    %2677 = vmatpush2.bf16.msra.mxu0 0
    %2678 = vmatprep.subr.bf16.mxu0 0
    %2679 = vmatpush2.bf16.msra.mxu0 0
    %2680 = vmatprep.mubr.bf16.mxu0 0
    %2681 = vmatmul.mubr.bf16.gmra.mxu0 %v970
    %v2682 = vpop.f32.mrf.mxu0
    %v2683 = vadd.f32 0.0, %v2682
    %v2684 = vpop.f32.mrf.mxu0
    %v2685 = vpop.f32.mrf.mxu0
    %v2686 = vadd.f32 0.0, %v2685
    %v2687 = vpop.f32.mrf.mxu0
    %2688 = vmatprep.mubr.bf16.mxu0 0
    %2689 = vmatmul.mubr.bf16.gmra.mxu0 %v973
    %v2690 = vpop.f32.mrf.mxu0
    %v2691 = vadd.f32 0.0, %v2690
    %v2692 = vpop.f32.mrf.mxu0
    %v2693 = vpop.f32.mrf.mxu0
    %v2694 = vadd.f32 0.0, %v2693
    %v2695 = vpop.f32.mrf.mxu0
    %2696 = vdwg.mxu0
    %2699 = vrot.lane.b32.xlu0 %v2625, 120
    %v2700 = vpop.permute.xlu0 %2699
    %2701 = vrot.lane.b32.xlu0 %v2628, 120
    %v2702 = vpop.permute.xlu0 %2701
    %2705 = vrot.lane.b32.xlu0 %v2625, 112
    %v2706 = vpop.permute.xlu0 %2705
    %2707 = vrot.lane.b32.xlu0 %v2628, 112
    %v2708 = vpop.permute.xlu0 %2707
    %2711 = vrot.lane.b32.xlu0 %v2625, 104
    %v2712 = vpop.permute.xlu0 %2711
    %2713 = vrot.lane.b32.xlu0 %v2628, 104
    %v2714 = vpop.permute.xlu0 %2713
    %2721 = vrot.lane.b32.xlu0 %v2683, 120
    %v2722 = vpop.permute.xlu0 %2721
    %2723 = vrot.lane.b32.xlu0 %v2686, 120
    %v2724 = vpop.permute.xlu0 %2723
    %2725 = vrot.lane.b32.xlu0 %v2691, 120
    %v2726 = vpop.permute.xlu0 %2725
    %2727 = vrot.lane.b32.xlu0 %v2694, 120
    %v2728 = vpop.permute.xlu0 %2727
    %2733 = vrot.lane.b32.xlu0 %v2683, 112
    %v2734 = vpop.permute.xlu0 %2733
    %2735 = vrot.lane.b32.xlu0 %v2686, 112
    %v2736 = vpop.permute.xlu0 %2735
    %2737 = vrot.lane.b32.xlu0 %v2691, 112
    %v2738 = vpop.permute.xlu0 %2737
    %2739 = vrot.lane.b32.xlu0 %v2694, 112
    %v2740 = vpop.permute.xlu0 %2739
    %2745 = vrot.lane.b32.xlu0 %v2683, 104
    %v2746 = vpop.permute.xlu0 %2745
    %2747 = vrot.lane.b32.xlu0 %v2686, 104
    %v2748 = vpop.permute.xlu0 %2747
    %2749 = vrot.lane.b32.xlu0 %v2691, 104
    %v2750 = vpop.permute.xlu0 %2749
    %2751 = vrot.lane.b32.xlu0 %v2694, 104
    %v2752 = vpop.permute.xlu0 %2751
    %v2757 = vpack.c.bf16 %v2628, %v2625
    %v2758 = vpack.c.bf16 %v2702, %v2700
    %v2759 = vpack.c.bf16 %v2708, %v2706
    %v2760 = vpack.c.bf16 %v2714, %v2712
    %v2761 = vpack.c.bf16 %v2686, %v2683
    %v2762 = vpack.c.bf16 %v2694, %v2691
    %v2763 = vpack.c.bf16 %v2724, %v2722
    %v2764 = vpack.c.bf16 %v2728, %v2726
    %v2765 = vpack.c.bf16 %v2736, %v2734
    %v2766 = vpack.c.bf16 %v2740, %v2738
    %v2767 = vpack.c.bf16 %v2748, %v2746
    %v2768 = vpack.c.bf16 %v2752, %v2750
    %v2770 = vsel %vm294, %v2757, 0
    %v2773 = vsel %vm294, %v2761, 0
    %v2776 = vsel %vm294, %v2762, 0
    %2778 = vmatprep.subr.bf16.mxu0 0
    %2779 = vmatpush1.bf16.xpose.msra.mxu0 0
    %2780 = vmatprep.subr.bf16.mxu0 0
    %2781 = vmatpush1.bf16.xpose.msra.mxu0 0
    %2782 = vmatprep.subr.bf16.mxu0 0
    %2783 = vmatpush1.bf16.xpose.msra.mxu0 0
    %2784 = vmatprep.subr.bf16.mxu0 0
    %2785 = vmatpush1.bf16.xpose.msra.mxu0 0
    %2786 = vmatprep.subr.bf16.mxu0 0
    %2787 = vmatpush1.bf16.xpose.msra.mxu0 0
    %2788 = vmatprep.subr.bf16.mxu0 0
    %2789 = vmatpush1.bf16.xpose.msra.mxu0 0
    %2790 = vmatprep.subr.bf16.mxu0 0
    %2791 = vmatpush1.bf16.xpose.msra.mxu0 %v2776
    %2792 = vmatprep.subr.bf16.mxu0 0
    %2793 = vmatpush1.bf16.xpose.msra.mxu0 %v2773
    %2794 = vmatprep.subr.bf16.mxu0 0
    %2795 = vmatpush2.bf16.xpose.msra.mxu0 0
    %2796 = vmatprep.subr.bf16.mxu0 0
    %2797 = vmatpush2.bf16.xpose.msra.mxu0 0
    %2798 = vmatprep.subr.bf16.mxu0 0
    %2799 = vmatpush2.bf16.xpose.msra.mxu0 0
    %2800 = vmatprep.subr.bf16.mxu0 0
    %2801 = vmatpush2.bf16.xpose.msra.mxu0 0
    %2802 = vmatprep.subr.bf16.mxu0 0
    %2803 = vmatpush2.bf16.xpose.msra.mxu0 0
    %2804 = vmatprep.subr.bf16.mxu0 0
    %2805 = vmatpush2.bf16.xpose.msra.mxu0 0
    %2806 = vmatprep.subr.bf16.mxu0 0
    %2807 = vmatpush2.bf16.xpose.msra.mxu0 0
    %2808 = vmatprep.subr.bf16.mxu0 0
    %2809 = vmatpush2.bf16.xpose.msra.mxu0 0
    %2810 = vmatprep.mubr.bf16.mxu0 0
    %2811 = vmatmul.mubr.bf16.gmra.mxu0 %v2770
    %v2812 = vpop.f32.mrf.mxu0
    %v2813 = vadd.f32 %v177, %v2812
    %v2814 = vpop.f32.mrf.mxu0
    %v2815 = vpop.f32.mrf.mxu0
    %v2816 = vadd.f32 %v178, %v2815
    %v2817 = vpop.f32.mrf.mxu0
    %2818 = vdwg.mxu0
    %v2820 = vsel %vm294, %v2758, 0
    %v2823 = vsel %vm294, %v2763, 0
    %v2826 = vsel %vm294, %v2764, 0
    %2828 = vmatprep.subr.bf16.mxu0 0
    %2829 = vmatpush1.bf16.xpose.msra.mxu0 0
    %2830 = vmatprep.subr.bf16.mxu0 0
    %2831 = vmatpush1.bf16.xpose.msra.mxu0 0
    %2832 = vmatprep.subr.bf16.mxu0 0
    %2833 = vmatpush1.bf16.xpose.msra.mxu0 0
    %2834 = vmatprep.subr.bf16.mxu0 0
    %2835 = vmatpush1.bf16.xpose.msra.mxu0 0
    %2836 = vmatprep.subr.bf16.mxu0 0
    %2837 = vmatpush1.bf16.xpose.msra.mxu0 0
    %2838 = vmatprep.subr.bf16.mxu0 0
    %2839 = vmatpush1.bf16.xpose.msra.mxu0 0
    %2840 = vmatprep.subr.bf16.mxu0 0
    %2841 = vmatpush1.bf16.xpose.msra.mxu0 %v2826
    %2842 = vmatprep.subr.bf16.mxu0 0
    %2843 = vmatpush1.bf16.xpose.msra.mxu0 %v2823
    %2844 = vmatprep.subr.bf16.mxu0 0
    %2845 = vmatpush2.bf16.xpose.msra.mxu0 0
    %2846 = vmatprep.subr.bf16.mxu0 0
    %2847 = vmatpush2.bf16.xpose.msra.mxu0 0
    %2848 = vmatprep.subr.bf16.mxu0 0
    %2849 = vmatpush2.bf16.xpose.msra.mxu0 0
    %2850 = vmatprep.subr.bf16.mxu0 0
    %2851 = vmatpush2.bf16.xpose.msra.mxu0 0
    %2852 = vmatprep.subr.bf16.mxu0 0
    %2853 = vmatpush2.bf16.xpose.msra.mxu0 0
    %2854 = vmatprep.subr.bf16.mxu0 0
    %2855 = vmatpush2.bf16.xpose.msra.mxu0 0
    %2856 = vmatprep.subr.bf16.mxu0 0
    %2857 = vmatpush2.bf16.xpose.msra.mxu0 0
    %2858 = vmatprep.subr.bf16.mxu0 0
    %2859 = vmatpush2.bf16.xpose.msra.mxu0 0
    %2860 = vmatprep.mubr.bf16.mxu0 0
    %2861 = vmatmul.mubr.bf16.gmra.mxu0 %v2820
    %v2862 = vpop.f32.mrf.mxu0
    %v2863 = vadd.f32 %v177, %v2862
    %v2864 = vpop.f32.mrf.mxu0
    %v2865 = vpop.f32.mrf.mxu0
    %v2866 = vadd.f32 %v178, %v2865
    %v2867 = vpop.f32.mrf.mxu0
    %2868 = vdwg.mxu0
    %v2870 = vsel %vm294, %v2759, 0
    %v2873 = vsel %vm294, %v2765, 0
    %v2876 = vsel %vm294, %v2766, 0
    %2878 = vmatprep.subr.bf16.mxu0 0
    %2879 = vmatpush1.bf16.xpose.msra.mxu0 0
    %2880 = vmatprep.subr.bf16.mxu0 0
    %2881 = vmatpush1.bf16.xpose.msra.mxu0 0
    %2882 = vmatprep.subr.bf16.mxu0 0
    %2883 = vmatpush1.bf16.xpose.msra.mxu0 0
    %2884 = vmatprep.subr.bf16.mxu0 0
    %2885 = vmatpush1.bf16.xpose.msra.mxu0 0
    %2886 = vmatprep.subr.bf16.mxu0 0
    %2887 = vmatpush1.bf16.xpose.msra.mxu0 0
    %2888 = vmatprep.subr.bf16.mxu0 0
    %2889 = vmatpush1.bf16.xpose.msra.mxu0 0
    %2890 = vmatprep.subr.bf16.mxu0 0
    %2891 = vmatpush1.bf16.xpose.msra.mxu0 %v2876
    %2892 = vmatprep.subr.bf16.mxu0 0
    %2893 = vmatpush1.bf16.xpose.msra.mxu0 %v2873
    %2894 = vmatprep.subr.bf16.mxu0 0
    %2895 = vmatpush2.bf16.xpose.msra.mxu0 0
    %2896 = vmatprep.subr.bf16.mxu0 0
    %2897 = vmatpush2.bf16.xpose.msra.mxu0 0
    %2898 = vmatprep.subr.bf16.mxu0 0
    %2899 = vmatpush2.bf16.xpose.msra.mxu0 0
    %2900 = vmatprep.subr.bf16.mxu0 0
    %2901 = vmatpush2.bf16.xpose.msra.mxu0 0
    %2902 = vmatprep.subr.bf16.mxu0 0
    %2903 = vmatpush2.bf16.xpose.msra.mxu0 0
    %2904 = vmatprep.subr.bf16.mxu0 0
    %2905 = vmatpush2.bf16.xpose.msra.mxu0 0
    %2906 = vmatprep.subr.bf16.mxu0 0
    %2907 = vmatpush2.bf16.xpose.msra.mxu0 0
    %2908 = vmatprep.subr.bf16.mxu0 0
    %2909 = vmatpush2.bf16.xpose.msra.mxu0 0
    %2910 = vmatprep.mubr.bf16.mxu0 0
    %2911 = vmatmul.mubr.bf16.gmra.mxu0 %v2870
    %v2912 = vpop.f32.mrf.mxu0
    %v2913 = vadd.f32 %v177, %v2912
    %v2914 = vpop.f32.mrf.mxu0
    %v2915 = vpop.f32.mrf.mxu0
    %v2916 = vadd.f32 %v178, %v2915
    %v2917 = vpop.f32.mrf.mxu0
    %2918 = vdwg.mxu0
    %v2920 = vsel %vm294, %v2760, 0
    %v2923 = vsel %vm294, %v2767, 0
    %v2926 = vsel %vm294, %v2768, 0
    %2928 = vmatprep.subr.bf16.mxu0 0
    %2929 = vmatpush1.bf16.xpose.msra.mxu0 0
    %2930 = vmatprep.subr.bf16.mxu0 0
    %2931 = vmatpush1.bf16.xpose.msra.mxu0 0
    %2932 = vmatprep.subr.bf16.mxu0 0
    %2933 = vmatpush1.bf16.xpose.msra.mxu0 0
    %2934 = vmatprep.subr.bf16.mxu0 0
    %2935 = vmatpush1.bf16.xpose.msra.mxu0 0
    %2936 = vmatprep.subr.bf16.mxu0 0
    %2937 = vmatpush1.bf16.xpose.msra.mxu0 0
    %2938 = vmatprep.subr.bf16.mxu0 0
    %2939 = vmatpush1.bf16.xpose.msra.mxu0 0
    %2940 = vmatprep.subr.bf16.mxu0 0
    %2941 = vmatpush1.bf16.xpose.msra.mxu0 %v2926
    %2942 = vmatprep.subr.bf16.mxu0 0
    %2943 = vmatpush1.bf16.xpose.msra.mxu0 %v2923
    %2944 = vmatprep.subr.bf16.mxu0 0
    %2945 = vmatpush2.bf16.xpose.msra.mxu0 0
    %2946 = vmatprep.subr.bf16.mxu0 0
    %2947 = vmatpush2.bf16.xpose.msra.mxu0 0
    %2948 = vmatprep.subr.bf16.mxu0 0
    %2949 = vmatpush2.bf16.xpose.msra.mxu0 0
    %2950 = vmatprep.subr.bf16.mxu0 0
    %2951 = vmatpush2.bf16.xpose.msra.mxu0 0
    %2952 = vmatprep.subr.bf16.mxu0 0
    %2953 = vmatpush2.bf16.xpose.msra.mxu0 0
    %2954 = vmatprep.subr.bf16.mxu0 0
    %2955 = vmatpush2.bf16.xpose.msra.mxu0 0
    %2956 = vmatprep.subr.bf16.mxu0 0
    %2957 = vmatpush2.bf16.xpose.msra.mxu0 0
    %2958 = vmatprep.subr.bf16.mxu0 0
    %2959 = vmatpush2.bf16.xpose.msra.mxu0 0
    %2960 = vmatprep.mubr.bf16.mxu0 0
    %2961 = vmatmul.mubr.bf16.gmra.mxu0 %v2920
    %v2962 = vpop.f32.mrf.mxu0
    %v2963 = vadd.f32 %v177, %v2962
    %v2964 = vpop.f32.mrf.mxu0
    %v2965 = vpop.f32.mrf.mxu0
    %v2966 = vadd.f32 %v178, %v2965
    %v2967 = vpop.f32.mrf.mxu0
    %2968 = vdwg.mxu0
    %v2969 = vsel %vm182, %v2813, -inf
    %2970 = vmax.xlane.f32.xlu0 %v2969
    %v2971 = vpop.xlane.xlu0 %2970
    %v2972 = vsel %vm182, %v2816, -inf
    %2973 = vmax.xlane.f32.xlu0 %v2972
    %v2974 = vpop.xlane.xlu0 %2973
    %v2975 = vsel %vm182, %v2863, -inf
    %2976 = vmax.xlane.f32.xlu0 %v2975
    %v2977 = vpop.xlane.xlu0 %2976
    %v2978 = vsel %vm182, %v2866, -inf
    %2979 = vmax.xlane.f32.xlu0 %v2978
    %v2980 = vpop.xlane.xlu0 %2979
    %v2981 = vsel %vm182, %v2913, -inf
    %2982 = vmax.xlane.f32.xlu0 %v2981
    %v2983 = vpop.xlane.xlu0 %2982
    %v2984 = vsel %vm182, %v2916, -inf
    %2985 = vmax.xlane.f32.xlu0 %v2984
    %v2986 = vpop.xlane.xlu0 %2985
    %v2987 = vsel %vm182, %v2963, -inf
    %2988 = vmax.xlane.f32.xlu0 %v2987
    %v2989 = vpop.xlane.xlu0 %2988
    %v2990 = vsel %vm182, %v2966, -inf
    %2991 = vmax.xlane.f32.xlu0 %v2990
    %v2992 = vpop.xlane.xlu0 %2991
    %v2993 = vsub.f32 %v2813, %v2971
    %v2994 = vsub.f32 %v2816, %v2974
    %v2995 = vsub.f32 %v2863, %v2977
    %v2996 = vsub.f32 %v2866, %v2980
    %v2997 = vsub.f32 %v2913, %v2983
    %v2998 = vsub.f32 %v2916, %v2986
    %v2999 = vsub.f32 %v2963, %v2989
    %v3000 = vsub.f32 %v2966, %v2992
    %v3001 = vmul.f32 %v2993, 1.442695
    %v3002 = vpow.pop %v3001
    %v3003 = vmul.f32 %v2994, 1.442695
    %v3004 = vpow.pop %v3003
    %v3005 = vmul.f32 %v2995, 1.442695
    %v3006 = vpow.pop %v3005
    %v3007 = vmul.f32 %v2996, 1.442695
    %v3008 = vpow.pop %v3007
    %v3009 = vmul.f32 %v2997, 1.442695
    %v3010 = vpow.pop %v3009
    %v3011 = vmul.f32 %v2998, 1.442695
    %v3012 = vpow.pop %v3011
    %v3013 = vmul.f32 %v2999, 1.442695
    %v3014 = vpow.pop %v3013
    %v3015 = vmul.f32 %v3000, 1.442695
    %v3016 = vpow.pop %v3015
    %v3017 = vsel %vm182, %v3002, 0.0
    %3018 = vadd.xlane.f32.xlu0 %v3017
    %v3019 = vpop.xlane.xlu0 %3018
    %v3020 = vsel %vm182, %v3004, 0.0
    %3021 = vadd.xlane.f32.xlu0 %v3020
    %v3022 = vpop.xlane.xlu0 %3021
    %v3023 = vsel %vm182, %v3006, 0.0
    %3024 = vadd.xlane.f32.xlu0 %v3023
    %v3025 = vpop.xlane.xlu0 %3024
    %v3026 = vsel %vm182, %v3008, 0.0
    %3027 = vadd.xlane.f32.xlu0 %v3026
    %v3028 = vpop.xlane.xlu0 %3027
    %v3029 = vsel %vm182, %v3010, 0.0
    %3030 = vadd.xlane.f32.xlu0 %v3029
    %v3031 = vpop.xlane.xlu0 %3030
    %v3032 = vsel %vm182, %v3012, 0.0
    %3033 = vadd.xlane.f32.xlu0 %v3032
    %v3034 = vpop.xlane.xlu0 %3033
    %v3035 = vsel %vm182, %v3014, 0.0
    %3036 = vadd.xlane.f32.xlu0 %v3035
    %v3037 = vpop.xlane.xlu0 %3036
    %v3038 = vsel %vm182, %v3016, 0.0
    %3039 = vadd.xlane.f32.xlu0 %v3038
    %v3040 = vpop.xlane.xlu0 %3039
    %v3041 = vrcp.pop %v3019
    %v3042 = vrcp.pop %v3022
    %v3043 = vrcp.pop %v3025
    %v3044 = vrcp.pop %v3028
    %v3045 = vrcp.pop %v3031
    %v3046 = vrcp.pop %v3034
    %v3047 = vrcp.pop %v3037
    %v3048 = vrcp.pop %v3040
    %v3049 = vmul.f32 %v3002, %v3041
    %v3050 = vmul.f32 %v3004, %v3042
    %v3051 = vmul.f32 %v3006, %v3043
    %v3052 = vmul.f32 %v3008, %v3044
    %v3053 = vmul.f32 %v3010, %v3045
    %v3054 = vmul.f32 %v3012, %v3046
    %v3055 = vmul.f32 %v3014, %v3047
    %v3056 = vmul.f32 %v3016, %v3048
    %v3057 = vpack.c.bf16 %v3050, %v3049
    %v3058 = vpack.c.bf16 %v3052, %v3051
    %v3059 = vpack.c.bf16 %v3054, %v3053
    %v3060 = vpack.c.bf16 %v3056, %v3055
    %3063 = vrot.lane.b32.xlu0 %v2761, 96
    %v3064 = vpop.permute.xlu0 %3063
    %3065 = vrot.lane.b32.xlu0 %v2762, 96
    %v3066 = vpop.permute.xlu0 %3065
    %v3070 = vsel %vm182, %v3057, 0
    %3072 = vmatprep.subr.bf16.mxu0 0
    %3073 = vmatpush1.bf16.msra.mxu0 0
    %3074 = vmatprep.subr.bf16.mxu0 0
    %3075 = vmatpush1.bf16.msra.mxu0 0
    %3076 = vmatprep.subr.bf16.mxu0 0
    %3077 = vmatpush1.bf16.msra.mxu0 0
    %3078 = vmatprep.subr.bf16.mxu0 0
    %3079 = vmatpush1.bf16.msra.mxu0 0
    %3080 = vmatprep.subr.bf16.mxu0 0
    %3081 = vmatpush1.bf16.msra.mxu0 0
    %3082 = vmatprep.subr.bf16.mxu0 0
    %3083 = vmatpush1.bf16.msra.mxu0 0
    %3084 = vmatprep.subr.bf16.mxu0 0
    %3085 = vmatpush1.bf16.msra.mxu0 %v3066
    %3086 = vmatprep.subr.bf16.mxu0 0
    %3087 = vmatpush1.bf16.msra.mxu0 %v3064
    %3088 = vmatprep.subr.bf16.mxu0 0
    %3089 = vmatpush2.bf16.msra.mxu0 0
    %3090 = vmatprep.subr.bf16.mxu0 0
    %3091 = vmatpush2.bf16.msra.mxu0 0
    %3092 = vmatprep.subr.bf16.mxu0 0
    %3093 = vmatpush2.bf16.msra.mxu0 0
    %3094 = vmatprep.subr.bf16.mxu0 0
    %3095 = vmatpush2.bf16.msra.mxu0 0
    %3096 = vmatprep.subr.bf16.mxu0 0
    %3097 = vmatpush2.bf16.msra.mxu0 0
    %3098 = vmatprep.subr.bf16.mxu0 0
    %3099 = vmatpush2.bf16.msra.mxu0 0
    %3100 = vmatprep.subr.bf16.mxu0 0
    %3101 = vmatpush2.bf16.msra.mxu0 0
    %3102 = vmatprep.subr.bf16.mxu0 0
    %3103 = vmatpush2.bf16.msra.mxu0 0
    %3104 = vmatprep.mubr.bf16.mxu0 0
    %3105 = vmatmul.mubr.bf16.gmra.mxu0 %v3070
    %v3106 = vpop.f32.mrf.mxu0
    %v3107 = vadd.f32 0.0, %v3106
    %v3108 = vpop.f32.mrf.mxu0
    %v3109 = vpop.f32.mrf.mxu0
    %v3110 = vadd.f32 0.0, %v3109
    %v3111 = vpop.f32.mrf.mxu0
    %3112 = vdwg.mxu0
    %3115 = vrot.lane.b32.xlu0 %v2763, 96
    %v3116 = vpop.permute.xlu0 %3115
    %3117 = vrot.lane.b32.xlu0 %v2764, 96
    %v3118 = vpop.permute.xlu0 %3117
    %v3122 = vsel %vm182, %v3058, 0
    %3124 = vmatprep.subr.bf16.mxu0 0
    %3125 = vmatpush1.bf16.msra.mxu0 0
    %3126 = vmatprep.subr.bf16.mxu0 0
    %3127 = vmatpush1.bf16.msra.mxu0 0
    %3128 = vmatprep.subr.bf16.mxu0 0
    %3129 = vmatpush1.bf16.msra.mxu0 0
    %3130 = vmatprep.subr.bf16.mxu0 0
    %3131 = vmatpush1.bf16.msra.mxu0 0
    %3132 = vmatprep.subr.bf16.mxu0 0
    %3133 = vmatpush1.bf16.msra.mxu0 0
    %3134 = vmatprep.subr.bf16.mxu0 0
    %3135 = vmatpush1.bf16.msra.mxu0 0
    %3136 = vmatprep.subr.bf16.mxu0 0
    %3137 = vmatpush1.bf16.msra.mxu0 %v3118
    %3138 = vmatprep.subr.bf16.mxu0 0
    %3139 = vmatpush1.bf16.msra.mxu0 %v3116
    %3140 = vmatprep.subr.bf16.mxu0 0
    %3141 = vmatpush2.bf16.msra.mxu0 0
    %3142 = vmatprep.subr.bf16.mxu0 0
    %3143 = vmatpush2.bf16.msra.mxu0 0
    %3144 = vmatprep.subr.bf16.mxu0 0
    %3145 = vmatpush2.bf16.msra.mxu0 0
    %3146 = vmatprep.subr.bf16.mxu0 0
    %3147 = vmatpush2.bf16.msra.mxu0 0
    %3148 = vmatprep.subr.bf16.mxu0 0
    %3149 = vmatpush2.bf16.msra.mxu0 0
    %3150 = vmatprep.subr.bf16.mxu0 0
    %3151 = vmatpush2.bf16.msra.mxu0 0
    %3152 = vmatprep.subr.bf16.mxu0 0
    %3153 = vmatpush2.bf16.msra.mxu0 0
    %3154 = vmatprep.subr.bf16.mxu0 0
    %3155 = vmatpush2.bf16.msra.mxu0 0
    %3156 = vmatprep.mubr.bf16.mxu0 0
    %3157 = vmatmul.mubr.bf16.gmra.mxu0 %v3122
    %v3158 = vpop.f32.mrf.mxu0
    %v3159 = vadd.f32 0.0, %v3158
    %v3160 = vpop.f32.mrf.mxu0
    %v3161 = vpop.f32.mrf.mxu0
    %v3162 = vadd.f32 0.0, %v3161
    %v3163 = vpop.f32.mrf.mxu0
    %3164 = vdwg.mxu0
    %3167 = vrot.lane.b32.xlu0 %v2765, 96
    %v3168 = vpop.permute.xlu0 %3167
    %3169 = vrot.lane.b32.xlu0 %v2766, 96
    %v3170 = vpop.permute.xlu0 %3169
    %v3174 = vsel %vm182, %v3059, 0
    %3176 = vmatprep.subr.bf16.mxu0 0
    %3177 = vmatpush1.bf16.msra.mxu0 0
    %3178 = vmatprep.subr.bf16.mxu0 0
    %3179 = vmatpush1.bf16.msra.mxu0 0
    %3180 = vmatprep.subr.bf16.mxu0 0
    %3181 = vmatpush1.bf16.msra.mxu0 0
    %3182 = vmatprep.subr.bf16.mxu0 0
    %3183 = vmatpush1.bf16.msra.mxu0 0
    %3184 = vmatprep.subr.bf16.mxu0 0
    %3185 = vmatpush1.bf16.msra.mxu0 0
    %3186 = vmatprep.subr.bf16.mxu0 0
    %3187 = vmatpush1.bf16.msra.mxu0 0
    %3188 = vmatprep.subr.bf16.mxu0 0
    %3189 = vmatpush1.bf16.msra.mxu0 %v3170
    %3190 = vmatprep.subr.bf16.mxu0 0
    %3191 = vmatpush1.bf16.msra.mxu0 %v3168
    %3192 = vmatprep.subr.bf16.mxu0 0
    %3193 = vmatpush2.bf16.msra.mxu0 0
    %3194 = vmatprep.subr.bf16.mxu0 0
    %3195 = vmatpush2.bf16.msra.mxu0 0
    %3196 = vmatprep.subr.bf16.mxu0 0
    %3197 = vmatpush2.bf16.msra.mxu0 0
    %3198 = vmatprep.subr.bf16.mxu0 0
    %3199 = vmatpush2.bf16.msra.mxu0 0
    %3200 = vmatprep.subr.bf16.mxu0 0
    %3201 = vmatpush2.bf16.msra.mxu0 0
    %3202 = vmatprep.subr.bf16.mxu0 0
    %3203 = vmatpush2.bf16.msra.mxu0 0
    %3204 = vmatprep.subr.bf16.mxu0 0
    %3205 = vmatpush2.bf16.msra.mxu0 0
    %3206 = vmatprep.subr.bf16.mxu0 0
    %3207 = vmatpush2.bf16.msra.mxu0 0
    %3208 = vmatprep.mubr.bf16.mxu0 0
    %3209 = vmatmul.mubr.bf16.gmra.mxu0 %v3174
    %v3210 = vpop.f32.mrf.mxu0
    %v3211 = vadd.f32 0.0, %v3210
    %v3212 = vpop.f32.mrf.mxu0
    %v3213 = vpop.f32.mrf.mxu0
    %v3214 = vadd.f32 0.0, %v3213
    %v3215 = vpop.f32.mrf.mxu0
    %3216 = vdwg.mxu0
    %3219 = vrot.lane.b32.xlu0 %v2767, 96
    %v3220 = vpop.permute.xlu0 %3219
    %3221 = vrot.lane.b32.xlu0 %v2768, 96
    %v3222 = vpop.permute.xlu0 %3221
    %v3226 = vsel %vm182, %v3060, 0
    %3228 = vmatprep.subr.bf16.mxu0 0
    %3229 = vmatpush1.bf16.msra.mxu0 0
    %3230 = vmatprep.subr.bf16.mxu0 0
    %3231 = vmatpush1.bf16.msra.mxu0 0
    %3232 = vmatprep.subr.bf16.mxu0 0
    %3233 = vmatpush1.bf16.msra.mxu0 0
    %3234 = vmatprep.subr.bf16.mxu0 0
    %3235 = vmatpush1.bf16.msra.mxu0 0
    %3236 = vmatprep.subr.bf16.mxu0 0
    %3237 = vmatpush1.bf16.msra.mxu0 0
    %3238 = vmatprep.subr.bf16.mxu0 0
    %3239 = vmatpush1.bf16.msra.mxu0 0
    %3240 = vmatprep.subr.bf16.mxu0 0
    %3241 = vmatpush1.bf16.msra.mxu0 %v3222
    %3242 = vmatprep.subr.bf16.mxu0 0
    %3243 = vmatpush1.bf16.msra.mxu0 %v3220
    %3244 = vmatprep.subr.bf16.mxu0 0
    %3245 = vmatpush2.bf16.msra.mxu0 0
    %3246 = vmatprep.subr.bf16.mxu0 0
    %3247 = vmatpush2.bf16.msra.mxu0 0
    %3248 = vmatprep.subr.bf16.mxu0 0
    %3249 = vmatpush2.bf16.msra.mxu0 0
    %3250 = vmatprep.subr.bf16.mxu0 0
    %3251 = vmatpush2.bf16.msra.mxu0 0
    %3252 = vmatprep.subr.bf16.mxu0 0
    %3253 = vmatpush2.bf16.msra.mxu0 0
    %3254 = vmatprep.subr.bf16.mxu0 0
    %3255 = vmatpush2.bf16.msra.mxu0 0
    %3256 = vmatprep.subr.bf16.mxu0 0
    %3257 = vmatpush2.bf16.msra.mxu0 0
    %3258 = vmatprep.subr.bf16.mxu0 0
    %3259 = vmatpush2.bf16.msra.mxu0 0
    %3260 = vmatprep.mubr.bf16.mxu0 0
    %3261 = vmatmul.mubr.bf16.gmra.mxu0 %v3226
    %v3262 = vpop.f32.mrf.mxu0
    %v3263 = vadd.f32 0.0, %v3262
    %v3264 = vpop.f32.mrf.mxu0
    %v3265 = vpop.f32.mrf.mxu0
    %v3266 = vadd.f32 0.0, %v3265
    %v3267 = vpop.f32.mrf.mxu0
    %3268 = vdwg.mxu0
    %3271 = vrot.lane.b32.xlu0 %v3159, 8
    %v3272 = vpop.permute.xlu0 %3271
    %3273 = vrot.lane.b32.xlu0 %v3162, 8
    %v3274 = vpop.permute.xlu0 %3273
    %3279 = vrot.lane.b32.xlu0 %v3211, 16
    %v3280 = vpop.permute.xlu0 %3279
    %3281 = vrot.lane.b32.xlu0 %v3214, 16
    %v3282 = vpop.permute.xlu0 %3281
    %3287 = vrot.lane.b32.xlu0 %v3263, 24
    %v3288 = vpop.permute.xlu0 %3287
    %3289 = vrot.lane.b32.xlu0 %v3266, 24
    %v3290 = vpop.permute.xlu0 %3289
    %v3293 = vsel %vm294, %v3107, %v3272
    %v3294 = vsel %vm294, %v3110, %v3274
    %v3295 = vsel %vm492, %v3293, %v3280
    %v3296 = vsel %vm492, %v3294, %v3282
    %v3297 = vsel %vm801, %v3295, %v3288
    %v3298 = vsel %vm801, %v3296, %v3290
    %v3299 = vpack.c.bf16 %v3298, %v3297
    %s3300 = scalar_lea.vmem [#allocation13], 16
    %v3301 = vld [vmem:[%s3300] sm:$0xf]
    %v3302 = vld [vmem:[%s3300 + $0x4] sm:$0xf]
    %v3303 = vld [vmem:[%s3300 + $0x8] sm:$0xf]
    %v3304 = vld [vmem:[%s3300 + $0xc] sm:$0xf]
    %v3309 = vunpack.c.l.b16 %v3301
    %v3310 = vunpack.c.l.b16 %v3302
    %v3311 = vunpack.c.l.b16 %v3303
    %v3312 = vunpack.c.l.b16 %v3304
    %v3313 = vpack.c.b16 %v3310, %v3309
    %v3314 = vpack.c.b16 %v3312, %v3311
    %v3318 = vsel %vm182, %v3299, 0
    %3320 = vmatprep.subr.bf16.mxu0 0
    %3321 = vmatpush1.bf16.msra.mxu0 0
    %3322 = vmatprep.subr.bf16.mxu0 0
    %3323 = vmatpush1.bf16.msra.mxu0 0
    %3324 = vmatprep.subr.bf16.mxu0 0
    %3325 = vmatpush1.bf16.msra.mxu0 0
    %3326 = vmatprep.subr.bf16.mxu0 0
    %3327 = vmatpush1.bf16.msra.mxu0 0
    %3328 = vmatprep.subr.bf16.mxu0 0
    %3329 = vmatpush1.bf16.msra.mxu0 0
    %3330 = vmatprep.subr.bf16.mxu0 0
    %3331 = vmatpush1.bf16.msra.mxu0 0
    %3332 = vmatprep.subr.bf16.mxu0 0
    %3333 = vmatpush1.bf16.msra.mxu0 %v3314
    %3334 = vmatprep.subr.bf16.mxu0 0
    %3335 = vmatpush1.bf16.msra.mxu0 %v3313
    %3336 = vmatprep.subr.bf16.mxu0 0
    %3337 = vmatpush2.bf16.msra.mxu0 0
    %3338 = vmatprep.subr.bf16.mxu0 0
    %3339 = vmatpush2.bf16.msra.mxu0 0
    %3340 = vmatprep.subr.bf16.mxu0 0
    %3341 = vmatpush2.bf16.msra.mxu0 0
    %3342 = vmatprep.subr.bf16.mxu0 0
    %3343 = vmatpush2.bf16.msra.mxu0 0
    %3344 = vmatprep.subr.bf16.mxu0 0
    %3345 = vmatpush2.bf16.msra.mxu0 0
    %3346 = vmatprep.subr.bf16.mxu0 0
    %3347 = vmatpush2.bf16.msra.mxu0 0
    %3348 = vmatprep.subr.bf16.mxu0 0
    %3349 = vmatpush2.bf16.msra.mxu0 0
    %3350 = vmatprep.subr.bf16.mxu0 0
    %3351 = vmatpush2.bf16.msra.mxu0 0
    %3352 = vmatprep.mubr.bf16.mxu0 0
    %3353 = vmatmul.mubr.bf16.gmra.mxu0 %v3318
    %v3354 = vpop.f32.mrf.mxu0
    %v3355 = vadd.f32 0.0, %v3354
    %v3356 = vpop.f32.mrf.mxu0
    %v3357 = vpop.f32.mrf.mxu0
    %v3358 = vadd.f32 0.0, %v3357
    %v3359 = vpop.f32.mrf.mxu0
    %3360 = vdwg.mxu0
    %v3361 = vadd.f32 %v2541, %v3355
    %v3362 = vadd.f32 %v2542, %v3358
    %s3363 = scalar_lea.vmem %s11, 1
    %v3364 = vld [vmem:[%s3363] sm:$0x1]
    %v3365 = vmul.f32 %v3361, %v3361
    %v3366 = vmul.f32 %v3362, %v3362
    %v3367 = vsel %vm182, %v3365, 0.0
    %3368 = vadd.xlane.f32.xlu0 %v3367
    %v3369 = vpop.xlane.xlu0 %3368
    %v3370 = vsel %vm182, %v3366, 0.0
    %3371 = vadd.xlane.f32.xlu0 %v3370
    %v3372 = vpop.xlane.xlu0 %3371
    %v3373 = vmul.f32 %v3369, %v189
    %v3374 = vmul.f32 %v3372, %v189
    %v3375 = vadd.f32 %v3373, 1e-06
    %v3376 = vadd.f32 %v3374, 1e-06
    %v3377 = vrsqrt.pop %v3375
    %v3378 = vrsqrt.pop %v3376
    %v3379 = vmul.f32 %v3361, %v3377
    %v3380 = vmul.f32 %v3362, %v3378
    %v3382 = vlaneseq
    %v3383 = vshrl.u32 %v3382, 7
    %v3384 = vsub.s32 0, %v3383
    %v3385 = vrot.slane %v3364, %v3384
    %v3387 = vmul.f32 %v3379, %v3385
    %v3388 = vmul.f32 %v3380, %v3385
    %v3389 = vpack.c.bf16 %v3388, %v3387
    %s3390 = scalar_lea.vmem [#allocation14], 16
    %v3391 = vld [vmem:[%s3390] sm:$0xf]
    %v3392 = vld [vmem:[%s3390 + $0x4] sm:$0xf]
    %v3393 = vld [vmem:[%s3390 + $0x8] sm:$0xf]
    %v3394 = vld [vmem:[%s3390 + $0xc] sm:$0xf]
    %v3399 = vunpack.c.l.b16 %v3391
    %v3400 = vunpack.c.l.b16 %v3392
    %v3401 = vunpack.c.l.b16 %v3393
    %v3402 = vunpack.c.l.b16 %v3394
    %v3403 = vpack.c.b16 %v3400, %v3399
    %v3404 = vpack.c.b16 %v3402, %v3401
    %v3408 = vsel %vm182, %v3389, 0
    %3410 = vmatprep.subr.bf16.mxu0 0
    %3411 = vmatpush1.bf16.msra.mxu0 0
    %3412 = vmatprep.subr.bf16.mxu0 0
    %3413 = vmatpush1.bf16.msra.mxu0 0
    %3414 = vmatprep.subr.bf16.mxu0 0
    %3415 = vmatpush1.bf16.msra.mxu0 0
    %3416 = vmatprep.subr.bf16.mxu0 0
    %3417 = vmatpush1.bf16.msra.mxu0 0
    %3418 = vmatprep.subr.bf16.mxu0 0
    %3419 = vmatpush1.bf16.msra.mxu0 0
    %3420 = vmatprep.subr.bf16.mxu0 0
    %3421 = vmatpush1.bf16.msra.mxu0 0
    %3422 = vmatprep.subr.bf16.mxu0 0
    %3423 = vmatpush1.bf16.msra.mxu0 %v3404
    %3424 = vmatprep.subr.bf16.mxu0 0
    %3425 = vmatpush1.bf16.msra.mxu0 %v3403
    %3426 = vmatprep.subr.bf16.mxu0 0
    %3427 = vmatpush2.bf16.msra.mxu0 0
    %3428 = vmatprep.subr.bf16.mxu0 0
    %3429 = vmatpush2.bf16.msra.mxu0 0
    %3430 = vmatprep.subr.bf16.mxu0 0
    %3431 = vmatpush2.bf16.msra.mxu0 0
    %3432 = vmatprep.subr.bf16.mxu0 0
    %3433 = vmatpush2.bf16.msra.mxu0 0
    %3434 = vmatprep.subr.bf16.mxu0 0
    %3435 = vmatpush2.bf16.msra.mxu0 0
    %3436 = vmatprep.subr.bf16.mxu0 0
    %3437 = vmatpush2.bf16.msra.mxu0 0
    %3438 = vmatprep.subr.bf16.mxu0 0
    %3439 = vmatpush2.bf16.msra.mxu0 0
    %3440 = vmatprep.subr.bf16.mxu0 0
    %3441 = vmatpush2.bf16.msra.mxu0 0
    %3442 = vmatprep.mubr.bf16.mxu0 0
    %3443 = vmatmul.mubr.bf16.gmra.mxu0 %v3408
    %v3444 = vpop.f32.mrf.mxu0
    %v3445 = vadd.f32 0.0, %v3444
    %v3446 = vpop.f32.mrf.mxu0
    %v3447 = vpop.f32.mrf.mxu0
    %v3448 = vadd.f32 0.0, %v3447
    %v3449 = vpop.f32.mrf.mxu0
    %3450 = vdwg.mxu0
    %v3451 = vmax.f32 %v3445, 0.0
    %v3452 = vmax.f32 %v3448, 0.0
    %v3453 = vpack.c.bf16 %v3452, %v3451
    %s3454 = scalar_lea.vmem %s13, 32
    %v3455 = vld [vmem:[%s3454] sm:$0xf]
    %v3456 = vld [vmem:[%s3454 + $0x4] sm:$0xf]
    %v3457 = vld [vmem:[%s3454 + $0x8] sm:$0xf]
    %v3458 = vld [vmem:[%s3454 + $0xc] sm:$0xf]
    %v3459 = vld [vmem:[%s3454 + $0x10] sm:$0xf]
    %v3460 = vld [vmem:[%s3454 + $0x14] sm:$0xf]
    %v3461 = vld [vmem:[%s3454 + $0x18] sm:$0xf]
    %v3462 = vld [vmem:[%s3454 + $0x1c] sm:$0xf]
    %v3471 = vunpack.c.l.b16 %v3455
    %v3472 = vunpack.c.l.b16 %v3456
    %v3473 = vunpack.c.l.b16 %v3457
    %v3474 = vunpack.c.l.b16 %v3458
    %v3475 = vunpack.c.l.b16 %v3459
    %v3476 = vunpack.c.l.b16 %v3460
    %v3477 = vunpack.c.l.b16 %v3461
    %v3478 = vunpack.c.l.b16 %v3462
    %v3479 = vpack.c.b16 %v3472, %v3471
    %v3480 = vpack.c.b16 %v3474, %v3473
    %v3481 = vpack.c.b16 %v3476, %v3475
    %v3482 = vpack.c.b16 %v3478, %v3477
    %v3488 = vsel %vm1810, %v3453, 0
    %3490 = vmatprep.subr.bf16.mxu0 0
    %3491 = vmatpush1.bf16.msra.mxu0 0
    %3492 = vmatprep.subr.bf16.mxu0 0
    %3493 = vmatpush1.bf16.msra.mxu0 0
    %3494 = vmatprep.subr.bf16.mxu0 0
    %3495 = vmatpush1.bf16.msra.mxu0 0
    %3496 = vmatprep.subr.bf16.mxu0 0
    %3497 = vmatpush1.bf16.msra.mxu0 0
    %3498 = vmatprep.subr.bf16.mxu0 0
    %3499 = vmatpush1.bf16.msra.mxu0 %v3482
    %3500 = vmatprep.subr.bf16.mxu0 0
    %3501 = vmatpush1.bf16.msra.mxu0 %v3481
    %3502 = vmatprep.subr.bf16.mxu0 0
    %3503 = vmatpush1.bf16.msra.mxu0 %v3480
    %3504 = vmatprep.subr.bf16.mxu0 0
    %3505 = vmatpush1.bf16.msra.mxu0 %v3479
    %3506 = vmatprep.subr.bf16.mxu0 0
    %3507 = vmatpush2.bf16.msra.mxu0 0
    %3508 = vmatprep.subr.bf16.mxu0 0
    %3509 = vmatpush2.bf16.msra.mxu0 0
    %3510 = vmatprep.subr.bf16.mxu0 0
    %3511 = vmatpush2.bf16.msra.mxu0 0
    %3512 = vmatprep.subr.bf16.mxu0 0
    %3513 = vmatpush2.bf16.msra.mxu0 0
    %3514 = vmatprep.subr.bf16.mxu0 0
    %3515 = vmatpush2.bf16.msra.mxu0 0
    %3516 = vmatprep.subr.bf16.mxu0 0
    %3517 = vmatpush2.bf16.msra.mxu0 0
    %3518 = vmatprep.subr.bf16.mxu0 0
    %3519 = vmatpush2.bf16.msra.mxu0 0
    %3520 = vmatprep.subr.bf16.mxu0 0
    %3521 = vmatpush2.bf16.msra.mxu0 0
    %3522 = vmatprep.mubr.bf16.mxu0 0
    %3523 = vmatmul.mubr.bf16.gmra.mxu0 %v3488
    %v3524 = vpop.f32.mrf.mxu0
    %v3525 = vadd.f32 0.0, %v3524
    %v3526 = vpop.f32.mrf.mxu0
    %v3527 = vpop.f32.mrf.mxu0
    %v3528 = vadd.f32 0.0, %v3527
    %v3529 = vpop.f32.mrf.mxu0
    %3530 = vdwg.mxu0
    %v3531 = vadd.f32 %v3361, %v3525
    %v3532 = vadd.f32 %v3362, %v3528
    %v3533 = vld [vmem:[%s14] sm:$0x1]
    %v3534 = vmul.f32 %v3531, %v3531
    %v3535 = vmul.f32 %v3532, %v3532
    %v3536 = vsel %vm182, %v3534, 0.0
    %3537 = vadd.xlane.f32.xlu0 %v3536
    %v3538 = vpop.xlane.xlu0 %3537
    %v3539 = vsel %vm182, %v3535, 0.0
    %3540 = vadd.xlane.f32.xlu0 %v3539
    %v3541 = vpop.xlane.xlu0 %3540
    %v3542 = vmul.f32 %v3538, %v189
    %v3543 = vmul.f32 %v3541, %v189
    %v3544 = vadd.f32 %v3542, 1e-06
    %v3545 = vadd.f32 %v3543, 1e-06
    %v3546 = vrsqrt.pop %v3544
    %v3547 = vrsqrt.pop %v3545
    %v3548 = vmul.f32 %v3531, %v3546
    %v3549 = vmul.f32 %v3532, %v3547
    %v3551 = vlaneseq
    %v3552 = vshrl.u32 %v3551, 7
    %v3553 = vsub.s32 0, %v3552
    %v3554 = vrot.slane %v3533, %v3553
    %v3556 = vmul.f32 %v3548, %v3554
    %v3557 = vmul.f32 %v3549, %v3554
    %3558 = vst.msk [vmem:[#allocation16] sm:$0xff] %vm182, %v3556
    %3559 = vst.msk [vmem:[#allocation16 + $0x8] sm:$0xff] %vm182, %v3557
    // Predicated region
    $region94: #{tpu_custom_call.1} parent=1 // pred_check
      _
    $region95: #{tpu_custom_call.1} parent=1 // pred_check_branch
      %3561 = sbr.rel (0) target = $region97
    $region96: #{tpu_custom_call.1} parent=1 // pred_region
      %s3563 = ssub.s32 256, 256
      %3564 = vsyncadd [#allocation4], %s3563
      %s3565 = sshll.u32 [#allocation16], 4
      %s3566 = int_to_ptr.vmem [resolvable:$true] %s3565
      %3571 = dma.vmem_to_hbm [thread:$0]  %s3566, 256, %s15, [#allocation4], 128, 128, 8
    $region97: #{tpu_custom_call.1} parent=1 // pred_fallthru
      _
    // Predicated region
    $region98: #{tpu_custom_call.1} parent=1 // pred_check
      _
    $region99: #{tpu_custom_call.1} parent=1 // pred_check_branch
      %3573 = sbr.rel (0) target = $region101
    $region100: #{tpu_custom_call.1} parent=1 // pred_region
      %3574 = dma.done [#allocation4], 256
    $region101: #{tpu_custom_call.1} parent=1 // pred_fallthru
      _
    %3575 = vsyncpa [#allocation3], 1
    %3576 = vsyncpa [#allocation6], 1
    %3577 = vsyncpa [#allocation9], 1
    %3578 = vsyncpa [#allocation12], 1
    %3579 = vsyncpa [#allocation15], 1
    %3580 = vsyncpa [#allocation4], 1

</llo_original>
